<compile_context>
chip_gen: v5e
topology: v5e:2x2
jax: 0.10.0
libtpu: 0.0.40
codegen_flags: <defaults>
</compile_context>

<pallas_src>
import functools
import inspect

import jax
import jax.numpy as jnp
from jax.experimental import pallas as pl
from jax.experimental.pallas import tpu as pltpu


def _round_up(x, m):
    return (x + m - 1) // m * m


try:
    _FORI_HAS_UNROLL = "unroll" in inspect.signature(jax.lax.fori_loop).parameters
except (TypeError, ValueError):  # pragma: no cover
    _FORI_HAS_UNROLL = False


def _fori(lo, hi, body, init, unroll):
    if _FORI_HAS_UNROLL and unroll > 1:
        return jax.lax.fori_loop(lo, hi, body, init, unroll=unroll)
    return jax.lax.fori_loop(lo, hi, body, init)


def _vmem_capacity_bytes():
    try:
        return int(pltpu.get_tpu_info().vmem_capacity_bytes)
    except Exception:
        return 64 * 1024 * 1024        # conservative default (v7x per-TC VMEM)


def _lstm_block_kernel(x_ref, m_ref, wih_ref, whh_ref, b_ref, wp_ref, bp_ref,
                       out_ref, h_sc, c_sc, gx_sc, hb_sc):
    """One (batch-chunk, time-block) step of the packed LSTM + projection.

    x_ref : (T_BLK*B, D)   time-major rows for this batch chunk / time block
    m_ref : (T_BLK*B, H)   lane-dense validity mask (1.0 valid, 0.0 padding)
    out_ref: (T_BLK*B, D)  projected output (lane-dense, D = D_pad)
    h_sc/c_sc: (B, H)      LSTM state, persists across the time grid axis
    gx_sc : (T_BLK*B, 4H)  hoisted x @ W_ih + b for the whole block (f32)
    hb_sc : (T_BLK*B, H)   masked hidden states, projected in one matmul (f32)
    """
    B, H = h_sc.shape
    rows = x_ref.shape[0]
    t_blk = rows // B
    cdt = whh_ref.dtype                      # MXU operand dtype (bf16 or f32)

    @pl.when(pl.program_id(1) == 0)          # first time block of this chunk
    def _():
        h_sc[...] = jnp.zeros_like(h_sc)
        c_sc[...] = jnp.zeros_like(c_sc)

    # (1) Hoisted, batched input transform: one MXU matmul for the whole block.
    gx_sc[...] = (jnp.dot(x_ref[...], wih_ref[...],
                          preferred_element_type=jnp.float32) + b_ref[...])

    def _sigmoid(v):
        # sigmoid(x) == 0.5*(1 + tanh(x/2)): one EUP push instead of exp+recip.
        return 0.5 * (jnp.tanh(0.5 * v) + 1.0)

    # (2) Serial recurrence: only h @ W_hh + gate math per step.  Partially
    #     unrolled fori_loop keeps LLO visibility while bounding live ranges.
    def step(t, carry):
        r = pl.ds(pl.multiple_of(t * B, 8), B)
        # TODO(synk): hold W_hh resident in MXU weight registers across the loop
        # (pltpu.matmul_push_rhs / matmul_acc_lhs) if the bundle dump shows the
        # per-step RHS re-streaming dominating the serial critical path.
        gates = gx_sc[r, :] + jnp.dot(h_sc[...].astype(cdt), whh_ref[...],
                                      preferred_element_type=jnp.float32)
        i = _sigmoid(gates[:, 0 * H:1 * H])
        f = _sigmoid(gates[:, 1 * H:2 * H])
        g = jnp.tanh(gates[:, 2 * H:3 * H])
        o = _sigmoid(gates[:, 3 * H:4 * H])
        c_new = f * c_sc[...] + i * g
        h_new = o * jnp.tanh(c_new)

        # packed-sequence semantics: state only advances on valid timesteps and
        # the (pre-projection) LSTM output at padded positions is exactly 0.
        keep = m_ref[r, :] > 0.5             # (B, H) lane-dense -> plain vsel
        c_sc[...] = jnp.where(keep, c_new, c_sc[...])
        h_sc[...] = jnp.where(keep, h_new, h_sc[...])
        hb_sc[r, :] = jnp.where(keep, h_new, 0.0)
        return carry

    _fori(0, t_blk, step, 0, unroll=min(8, t_blk))

    # (3) Hoisted, batched output projection: one MXU matmul, lane-dense store.
    out_ref[...] = (jnp.dot(hb_sc[...].astype(cdt), wp_ref[...],
                            preferred_element_type=jnp.float32)
                    + bp_ref[...]).astype(out_ref.dtype)


def _pad_gate_mat(w, h_pad, in_pad):
    """(4*d_rnn, d_in) -> (in_pad, 4*h_pad): per-gate zero-pad + transpose."""
    four_h, d_in = w.shape
    d_rnn = four_h // 4
    w = w.astype(jnp.float32).reshape(4, d_rnn, d_in)
    w = jnp.pad(w, ((0, 0), (0, h_pad - d_rnn), (0, in_pad - d_in)))
    return jnp.transpose(w, (2, 0, 1)).reshape(in_pad, 4 * h_pad)


def _pad_gate_vec(b, h_pad):
    """(4*d_rnn,) -> (1, 4*h_pad), per-gate zero-padded."""
    d_rnn = b.shape[0] // 4
    b = b.astype(jnp.float32).reshape(4, d_rnn)
    b = jnp.pad(b, ((0, 0), (0, h_pad - d_rnn)))
    return b.reshape(1, 4 * h_pad)


def _pick_time_block(max_len, b_chunk, d_pad, h_pad, itemsize, budget):
    """Largest time block whose VMEM footprint fits the per-core budget."""
    cap = _round_up(max(max_len, 1), 8)
    fixed = (2 * itemsize * (d_pad * 4 * h_pad + h_pad * 4 * h_pad + h_pad * d_pad)
             + 2 * 4 * (4 * h_pad + d_pad)           # biases (f32, double-buffered)
             + 2 * 4 * b_chunk * h_pad)              # h/c state (f32)
    t_blk = 8
    for cand in (16, 32, 64, 128):
        if cand > cap:
            break
        r = cand * b_chunk
        per_block = (2 * r * d_pad * itemsize        # x block (double-buffered)
                     + 2 * r * h_pad * 4             # mask block (f32)
                     + 2 * r * d_pad * 4             # out block (f32)
                     + r * 4 * h_pad * 4             # gx scratch (f32)
                     + r * h_pad * 4)                # hb scratch (f32)
        if fixed + per_block <= budget:
            t_blk = cand
        else:
            break
    return min(t_blk, cap)


@functools.partial(
    jax.jit,
    static_argnames=("t_blk", "t_pad", "b_chunk", "matmul_dtype", "vmem_limit"))
def _forward_full(data, non_pad_mask, params, *, t_blk, t_pad, b_chunk,
                  matmul_dtype, vmem_limit):
    """(B, t_pad, d_model) output; caller slices to max(lengths)."""
    B, T, d_model = data.shape
    d_rnn = params["w_hh"].shape[1]
    cdt = matmul_dtype

    B_pad = _round_up(B, 8)
    D_pad = _round_up(d_model, 128)
    H_pad = _round_up(d_rnn, 128)
    nb = B_pad // b_chunk
    n_tblk = t_pad // t_blk
    rows = t_blk * b_chunk

    # Time-truncated (grid only covers ceil(max_len/t_blk) blocks), time-major,
    # padded inputs.  Mask is pre-broadcast to H_pad lanes (lane-dense selects).
    Tc = min(T, t_pad)
    x_tm = jnp.transpose(data[:, :Tc].astype(cdt), (1, 0, 2))              # (Tc,B,D)
    m_tm = jnp.transpose(non_pad_mask[:, :Tc].astype(jnp.float32), (1, 0, 2))
    x_tm = jnp.pad(x_tm, ((0, t_pad - Tc), (0, B_pad - B), (0, D_pad - d_model)))
    m_tm = jnp.pad(m_tm, ((0, t_pad - Tc), (0, B_pad - B), (0, 0)))
    m_tm = jnp.broadcast_to(m_tm, (t_pad, B_pad, H_pad))

    def to_chunks(a):          # (t_pad, B_pad, F) -> (nb, t_pad*b_chunk, F)
        f = a.shape[-1]
        a = a.reshape(t_pad, nb, b_chunk, f)
        return jnp.transpose(a, (1, 0, 2, 3)).reshape(nb, t_pad * b_chunk, f)

    x3 = to_chunks(x_tm)
    m3 = to_chunks(m_tm)

    # Padded weights (PyTorch gate order i, f, g, o).  MXU operands optionally
    # bf16; gates/state/accumulation stay f32.  Zero padding is exact.
    w_ih_p = _pad_gate_mat(params["w_ih"], H_pad, D_pad).astype(cdt)   # (D_pad,4H)
    w_hh_p = _pad_gate_mat(params["w_hh"], H_pad, H_pad).astype(cdt)   # (H_pad,4H)
    b_p = _pad_gate_vec(params["b_ih"] + params["b_hh"], H_pad)        # f32
    w_pr_p = jnp.pad(params["w_proj"].astype(jnp.float32).T,
                     ((0, H_pad - d_rnn), (0, D_pad - d_model))).astype(cdt)
    b_pr_p = jnp.pad(params["b_proj"].astype(jnp.float32)[None, :],
                     ((0, 0), (0, D_pad - d_model)))                   # (1, D_pad)

    # TODO(synk): mark the five constant-index weight/bias specs with
    # pipeline_mode=pl.Buffered(1) (single-buffered) once confirmed supported by
    # the installed toolchain -- halves their VMEM footprint at production sizes.
    out3 = pl.pallas_call(
        _lstm_block_kernel,
        out_shape=jax.ShapeDtypeStruct((nb, t_pad * b_chunk, D_pad), jnp.float32),
        grid=(nb, n_tblk),
        in_specs=[
            pl.BlockSpec((None, rows, D_pad), lambda bb, tb: (bb, tb, 0)),   # x
            pl.BlockSpec((None, rows, H_pad), lambda bb, tb: (bb, tb, 0)),   # mask
            pl.BlockSpec((D_pad, 4 * H_pad), lambda bb, tb: (0, 0)),         # W_ih^T
            pl.BlockSpec((H_pad, 4 * H_pad), lambda bb, tb: (0, 0)),         # W_hh^T
            pl.BlockSpec((1, 4 * H_pad), lambda bb, tb: (0, 0)),             # b_ih+b_hh
            pl.BlockSpec((H_pad, D_pad), lambda bb, tb: (0, 0)),             # W_proj^T
            pl.BlockSpec((1, D_pad), lambda bb, tb: (0, 0)),                 # b_proj
        ],
        out_specs=pl.BlockSpec((None, rows, D_pad), lambda bb, tb: (bb, tb, 0)),
        scratch_shapes=[
            pltpu.VMEM((b_chunk, H_pad), jnp.float32),      # h state
            pltpu.VMEM((b_chunk, H_pad), jnp.float32),      # c state
            pltpu.VMEM((rows, 4 * H_pad), jnp.float32),     # hoisted x@W_ih + b
            pltpu.VMEM((rows, H_pad), jnp.float32),         # masked hidden states
        ],
        compiler_params=pltpu.CompilerParams(
            dimension_semantics=("parallel", "arbitrary"),  # batch-chunks || time
            vmem_limit_bytes=int(vmem_limit)),
    )(x3, m3, w_ih_p, w_hh_p, b_p, w_pr_p, b_pr_p)

    out = out3.reshape(nb, t_pad, b_chunk, D_pad)
    out = jnp.transpose(out, (1, 0, 2, 3)).reshape(t_pad, B_pad, D_pad)
    out = out[:, :B, :d_model]                           # strip padding
    return jnp.transpose(out, (1, 0, 2)).astype(data.dtype)   # (B, t_pad, d_model)


def rnn_layers_forward(data, non_pad_mask, params, matmul_dtype=jnp.bfloat16):
    """data: (B, T, d_model) f32, non_pad_mask: (B, T, 1) in {0,1}.
    Returns (B, max(lengths), d_model), matching the PyTorch module."""
    B, T, d_model = data.shape
    d_rnn = params["w_hh"].shape[1]

    # pad_packed_sequence truncates the time axis to max(lengths); a concrete
    # value is needed for static shapes -> one host sync.  Doing it BEFORE the
    # kernel also truncates the grid so no block runs past the longest sequence.
    lengths = jnp.sum(non_pad_mask[:, :, 0], axis=1).astype(jnp.int32)
    max_len = int(jax.device_get(jnp.max(lengths)))
    max_len = max(1, min(max_len, T))

    B_pad = _round_up(B, 8)
    D_pad = _round_up(d_model, 128)
    H_pad = _round_up(d_rnn, 128)

    # TODO(synk): gate the 2-way batch split on the actual TensorCore count
    # (v7x megacore); on single-TC chips it only adds a little grid overhead.
    if B_pad >= 32 and (B_pad // 2) % 8 == 0:
        b_chunk = B_pad // 2
    else:
        b_chunk = B_pad

    budget = _vmem_capacity_bytes() * 3 // 4          # per-core VMEM budget
    itemsize = jnp.dtype(matmul_dtype).itemsize
    t_blk = _pick_time_block(max_len, b_chunk, D_pad, H_pad, itemsize, budget)
    t_pad = _round_up(max_len, t_blk)

    out = _forward_full(data, non_pad_mask, params,
                        t_blk=t_blk, t_pad=t_pad, b_chunk=b_chunk,
                        matmul_dtype=matmul_dtype, vmem_limit=int(budget))
    return out[:, :max_len, :]


def init_params(key, d_model, d_rnn):
    """Deterministic synthetic params (PyTorch default uniform(-1/sqrt(h), 1/sqrt(h)))."""
    ks = jax.random.split(key, 6)
    k = float(d_rnn) ** -0.5
    u = lambda kk, shape: jax.random.uniform(kk, shape, jnp.float32, -k, k)
    return {
        "w_ih": u(ks[0], (4 * d_rnn, d_model)),   # gate order i, f, g, o
        "w_hh": u(ks[1], (4 * d_rnn, d_rnn)),
        "b_ih": u(ks[2], (4 * d_rnn,)),
        "b_hh": u(ks[3], (4 * d_rnn,)),
        "w_proj": u(ks[4], (d_model, d_rnn)),
        "b_proj": u(ks[5], (d_model,)),
    }


def reference_forward(data, non_pad_mask, params):
    """Pure-JAX reference (lax.scan) with the same packed-LSTM semantics."""
    B, T, d_model = data.shape
    d_rnn = params["w_hh"].shape[1]
    w_ih_t = params["w_ih"].T.astype(jnp.float32)
    w_hh_t = params["w_hh"].T.astype(jnp.float32)
    b = (params["b_ih"] + params["b_hh"]).astype(jnp.float32)[None, :]
    w_p_t = params["w_proj"].T.astype(jnp.float32)
    b_p = params["b_proj"].astype(jnp.float32)[None, :]

    x_tm = jnp.transpose(data, (1, 0, 2)).astype(jnp.float32)
    m_tm = jnp.transpose(non_pad_mask, (1, 0, 2)).astype(jnp.float32)

    def step(carry, inp):
        h, c = carry
        x_t, m_t = inp
        gates = x_t @ w_ih_t + h @ w_hh_t + b
        i, f, g, o = jnp.split(gates, 4, axis=-1)
        i, f, o = jax.nn.sigmoid(i), jax.nn.sigmoid(f), jax.nn.sigmoid(o)
        g = jnp.tanh(g)
        c_new = f * c + i * g
        h_new = o * jnp.tanh(c_new)
        keep = m_t > 0.5
        c = jnp.where(keep, c_new, c)
        h = jnp.where(keep, h_new, h)
        y = jnp.where(keep, h_new, 0.0) @ w_p_t + b_p
        return (h, c), y

    init = (jnp.zeros((B, d_rnn), jnp.float32), jnp.zeros((B, d_rnn), jnp.float32))
    _, out_tm = jax.lax.scan(step, init, (x_tm, m_tm))
    out = jnp.transpose(out_tm, (1, 0, 2))
    lengths = jnp.sum(non_pad_mask[:, :, 0], axis=1).astype(jnp.int32)
    max_len = int(jax.device_get(jnp.max(lengths)))
    return out[:, :max_len, :]


if __name__ == "__main__":
    B, T, d_model, d_rnn = 2, 8, 32, 32
    key = jax.random.PRNGKey(0)
    kp, kd = jax.random.split(key)

    params = init_params(kp, d_model, d_rnn)
    data = jax.random.normal(kd, (B, T, d_model), jnp.float32)

    # non_pad_mask: 1 on valid tokens (trailing padding), shape (B, T, 1)
    lengths = jnp.array([T, 5], dtype=jnp.int32)
    non_pad_mask = (jnp.arange(T)[None, :] < lengths[:, None]
                    ).astype(jnp.float32)[:, :, None]

    ref = reference_forward(data, non_pad_mask, params)

    # Exact-semantics check with f32 MXU operands.  Loose absolute bound keeps
    # the check robust to MXU f32 pass-count differences; any semantic bug
    # (mask/gate-order/bias) is O(0.1) and would still be caught.
    out_f32 = jax.block_until_ready(
        rnn_layers_forward(data, non_pad_mask, params, matmul_dtype=jnp.float32))
    assert out_f32.shape == ref.shape, (out_f32.shape, ref.shape)
    err32 = float(jnp.max(jnp.abs(out_f32 - ref)))
    assert err32 < 1e-2, err32

    # Default fast path: bf16 MXU operands, f32 accumulation / gate math.
    out_bf16 = jax.block_until_ready(rnn_layers_forward(data, non_pad_mask, params))
    assert out_bf16.shape == ref.shape, (out_bf16.shape, ref.shape)
    err16 = float(jnp.max(jnp.abs(out_bf16 - ref)))
    assert err16 < 5e-2, err16

    print("KERNEL_OK")
</pallas_src>

<mosaic_0001>
module attributes {stable_mosaic.version = 11 : i64} {
  func.func @_lstm_block_kernel(%arg0: i32, %arg1: i32, %arg2: memref<1x64x128xf32, #tpu.memory_space<vmem>>, %arg3: memref<1x64x128xf32, #tpu.memory_space<vmem>>, %arg4: memref<128x512xf32, #tpu.memory_space<vmem>>, %arg5: memref<128x512xf32, #tpu.memory_space<vmem>>, %arg6: memref<1x512xf32, #tpu.memory_space<vmem>>, %arg7: memref<128x128xf32, #tpu.memory_space<vmem>>, %arg8: memref<1x128xf32, #tpu.memory_space<vmem>>, %arg9: memref<1x64x128xf32, #tpu.memory_space<vmem>>, %arg10: memref<8x128xf32, #tpu.memory_space<vmem>>, %arg11: memref<8x128xf32, #tpu.memory_space<vmem>>, %arg12: memref<64x512xf32, #tpu.memory_space<vmem>>, %arg13: memref<64x128xf32, #tpu.memory_space<vmem>>) attributes {dimension_semantics = [#tpu.dimension_semantics<parallel>, #tpu.dimension_semantics<arbitrary>], iteration_bounds = array<i64: 1, 1>, scalar_prefetch = 0 : i64, scratch_operands = 4 : i64, tpu.core_type = #tpu.core_type<tc>, window_params = [{transform_indices = @transform_0, window_bounds = array<i64: 1, 64, 128>}, {transform_indices = @transform_1, window_bounds = array<i64: 1, 64, 128>}, {pipeline_mode = #tpu.pipeline_mode<synchronous>, transform_indices = @transform_2, window_bounds = array<i64: 128, 512>}, {pipeline_mode = #tpu.pipeline_mode<synchronous>, transform_indices = @transform_3, window_bounds = array<i64: 128, 512>}, {pipeline_mode = #tpu.pipeline_mode<synchronous>, transform_indices = @transform_4, window_bounds = array<i64: 1, 512>}, {pipeline_mode = #tpu.pipeline_mode<synchronous>, transform_indices = @transform_5, window_bounds = array<i64: 128, 128>}, {pipeline_mode = #tpu.pipeline_mode<synchronous>, transform_indices = @transform_6, window_bounds = array<i64: 1, 128>}, {transform_indices = @transform_7, window_bounds = array<i64: 1, 64, 128>}]} {
    %c0_i32 = arith.constant 0 : i32
    %0 = arith.cmpi eq, %arg1, %c0_i32 : i32
    %1 = arith.extui %0 : i1 to i32
    %c0_i32_0 = arith.constant 0 : i32
    %2 = arith.cmpi ne, %1, %c0_i32_0 : i32
    scf.if %2 {
      %cst_268 = arith.constant 0.000000e+00 : f32
      %460 = vector.broadcast %cst_268 : f32 to vector<8x128xf32>
      %c0_269 = arith.constant 0 : index
      %c0_270 = arith.constant 0 : index
      %461 = vector.load %arg10[%c0_269, %c0_270] : memref<8x128xf32, #tpu.memory_space<vmem>>, vector<8x128xf32>
      tpu.vector_store %arg10[%c0_269, %c0_270], %460 {strides = array<i32>} : memref<8x128xf32, #tpu.memory_space<vmem>>, vector<8x128xf32>,
      %cst_271 = arith.constant 0.000000e+00 : f32
      %462 = vector.broadcast %cst_271 : f32 to vector<8x128xf32>
      %c0_272 = arith.constant 0 : index
      %c0_273 = arith.constant 0 : index
      %463 = vector.load %arg11[%c0_272, %c0_273] : memref<8x128xf32, #tpu.memory_space<vmem>>, vector<8x128xf32>
      tpu.vector_store %arg11[%c0_272, %c0_273], %462 {strides = array<i32>} : memref<8x128xf32, #tpu.memory_space<vmem>>, vector<8x128xf32>,
    } else {
    }
    %c0 = arith.constant 0 : index
    %c0_1 = arith.constant 0 : index
    %c0_2 = arith.constant 0 : index
    %3 = vector.load %arg2[%c0, %c0_1, %c0_2] : memref<1x64x128xf32, #tpu.memory_space<vmem>>, vector<1x64x128xf32>
    %4 = vector.shape_cast %3 : vector<1x64x128xf32> to vector<64x128xf32>
    %c0_3 = arith.constant 0 : index
    %c0_4 = arith.constant 0 : index
    %5 = vector.load %arg4[%c0_3, %c0_4] : memref<128x512xf32, #tpu.memory_space<vmem>>, vector<128x512xf32>
    %cst = arith.constant dense<0.000000e+00> : vector<64x512xf32>
    %6 = tpu.matmul %4, %5, %cst {dimension_numbers = #tpu.dot_dimension_numbers<[1], [0], [0], [1], [0, 0, 1, 1], [], []>} : vector<64x128xf32>, vector<128x512xf32>, vector<64x512xf32> -> vector<64x512xf32>
    %c0_5 = arith.constant 0 : index
    %c0_6 = arith.constant 0 : index
    %7 = vector.load %arg6[%c0_5, %c0_6] : memref<1x512xf32, #tpu.memory_space<vmem>>, vector<1x512xf32>
    %8 = vector.broadcast %7 : vector<1x512xf32> to vector<64x512xf32>
    %9 = arith.addf %6, %8 : vector<64x512xf32>
    %c0_7 = arith.constant 0 : index
    %c0_8 = arith.constant 0 : index
    %10 = vector.load %arg12[%c0_7, %c0_8] : memref<64x512xf32, #tpu.memory_space<vmem>>, vector<64x512xf32>
    tpu.vector_store %arg12[%c0_7, %c0_8], %9 {strides = array<i32>} : memref<64x512xf32, #tpu.memory_space<vmem>>, vector<64x512xf32>,
    %c0_i32_9 = arith.constant 0 : i32
    %c8_i32 = arith.constant 8 : i32
    %11 = arith.muli %c0_i32_9, %c8_i32 : i32
    %12 = tpu.assume_multiple %11, 8 : i32
    %13 = arith.index_cast %12 : i32 to index
    %c0_10 = arith.constant 0 : index
    %14 = vector.load %arg12[%13, %c0_10] : memref<64x512xf32, #tpu.memory_space<vmem>>, vector<8x512xf32>
    %c0_11 = arith.constant 0 : index
    %c0_12 = arith.constant 0 : index
    %15 = vector.load %arg10[%c0_11, %c0_12] : memref<8x128xf32, #tpu.memory_space<vmem>>, vector<8x128xf32>
    %c0_13 = arith.constant 0 : index
    %c0_14 = arith.constant 0 : index
    %16 = vector.load %arg5[%c0_13, %c0_14] : memref<128x512xf32, #tpu.memory_space<vmem>>, vector<128x512xf32>
    %cst_15 = arith.constant dense<0.000000e+00> : vector<8x512xf32>
    %17 = tpu.matmul %15, %16, %cst_15 {dimension_numbers = #tpu.dot_dimension_numbers<[1], [0], [0], [1], [0, 0, 1, 1], [], []>} : vector<8x128xf32>, vector<128x512xf32>, vector<8x512xf32> -> vector<8x512xf32>
    %18 = arith.addf %14, %17 : vector<8x512xf32>
    %19 = vector.extract_strided_slice %18 {offsets = [0, 0], sizes = [8, 128], strides = [1, 1]} : vector<8x512xf32> to vector<8x128xf32>
    %cst_16 = arith.constant 5.000000e-01 : f32
    %20 = vector.broadcast %cst_16 : f32 to vector<8x128xf32>
    %21 = arith.mulf %20, %19 : vector<8x128xf32>
    %22 = math.tanh %21 : vector<8x128xf32>
    %cst_17 = arith.constant 1.000000e+00 : f32
    %23 = vector.broadcast %cst_17 : f32 to vector<8x128xf32>
    %24 = arith.addf %22, %23 : vector<8x128xf32>
    %cst_18 = arith.constant 5.000000e-01 : f32
    %25 = vector.broadcast %cst_18 : f32 to vector<8x128xf32>
    %26 = arith.mulf %25, %24 : vector<8x128xf32>
    %27 = vector.extract_strided_slice %18 {offsets = [0, 128], sizes = [8, 128], strides = [1, 1]} : vector<8x512xf32> to vector<8x128xf32>
    %cst_19 = arith.constant 5.000000e-01 : f32
    %28 = vector.broadcast %cst_19 : f32 to vector<8x128xf32>
    %29 = arith.mulf %28, %27 : vector<8x128xf32>
    %30 = math.tanh %29 : vector<8x128xf32>
    %cst_20 = arith.constant 1.000000e+00 : f32
    %31 = vector.broadcast %cst_20 : f32 to vector<8x128xf32>
    %32 = arith.addf %30, %31 : vector<8x128xf32>
    %cst_21 = arith.constant 5.000000e-01 : f32
    %33 = vector.broadcast %cst_21 : f32 to vector<8x128xf32>
    %34 = arith.mulf %33, %32 : vector<8x128xf32>
    %35 = vector.extract_strided_slice %18 {offsets = [0, 256], sizes = [8, 128], strides = [1, 1]} : vector<8x512xf32> to vector<8x128xf32>
    %36 = math.tanh %35 : vector<8x128xf32>
    %37 = vector.extract_strided_slice %18 {offsets = [0, 384], sizes = [8, 128], strides = [1, 1]} : vector<8x512xf32> to vector<8x128xf32>
    %cst_22 = arith.constant 5.000000e-01 : f32
    %38 = vector.broadcast %cst_22 : f32 to vector<8x128xf32>
    %39 = arith.mulf %38, %37 : vector<8x128xf32>
    %40 = math.tanh %39 : vector<8x128xf32>
    %cst_23 = arith.constant 1.000000e+00 : f32
    %41 = vector.broadcast %cst_23 : f32 to vector<8x128xf32>
    %42 = arith.addf %40, %41 : vector<8x128xf32>
    %cst_24 = arith.constant 5.000000e-01 : f32
    %43 = vector.broadcast %cst_24 : f32 to vector<8x128xf32>
    %44 = arith.mulf %43, %42 : vector<8x128xf32>
    %c0_25 = arith.constant 0 : index
    %c0_26 = arith.constant 0 : index
    %45 = vector.load %arg11[%c0_25, %c0_26] : memref<8x128xf32, #tpu.memory_space<vmem>>, vector<8x128xf32>
    %46 = arith.mulf %34, %45 : vector<8x128xf32>
    %47 = arith.mulf %26, %36 : vector<8x128xf32>
    %48 = arith.addf %46, %47 : vector<8x128xf32>
    %49 = math.tanh %48 : vector<8x128xf32>
    %50 = arith.mulf %44, %49 : vector<8x128xf32>
    %c0_27 = arith.constant 0 : index
    %51 = arith.index_cast %12 : i32 to index
    %c0_28 = arith.constant 0 : index
    %52 = vector.load %arg3[%c0_27, %51, %c0_28] : memref<1x64x128xf32, #tpu.memory_space<vmem>>, vector<1x8x128xf32>
    %53 = vector.shape_cast %52 : vector<1x8x128xf32> to vector<8x128xf32>
    %cst_29 = arith.constant 5.000000e-01 : f32
    %54 = vector.broadcast %cst_29 : f32 to vector<8x128xf32>
    %55 = arith.cmpf ogt, %53, %54 : vector<8x128xf32>
    %c0_30 = arith.constant 0 : index
    %c0_31 = arith.constant 0 : index
    %56 = vector.load %arg11[%c0_30, %c0_31] : memref<8x128xf32, #tpu.memory_space<vmem>>, vector<8x128xf32>
    %57 = arith.select %55, %48, %56 : vector<8x128xi1>, vector<8x128xf32>
    %c0_32 = arith.constant 0 : index
    %c0_33 = arith.constant 0 : index
    %58 = vector.load %arg11[%c0_32, %c0_33] : memref<8x128xf32, #tpu.memory_space<vmem>>, vector<8x128xf32>
    tpu.vector_store %arg11[%c0_32, %c0_33], %57 {strides = array<i32>} : memref<8x128xf32, #tpu.memory_space<vmem>>, vector<8x128xf32>,
    %c0_34 = arith.constant 0 : index
    %c0_35 = arith.constant 0 : index
    %59 = vector.load %arg10[%c0_34, %c0_35] : memref<8x128xf32, #tpu.memory_space<vmem>>, vector<8x128xf32>
    %60 = arith.select %55, %50, %59 : vector<8x128xi1>, vector<8x128xf32>
    %c0_36 = arith.constant 0 : index
    %c0_37 = arith.constant 0 : index
    %61 = vector.load %arg10[%c0_36, %c0_37] : memref<8x128xf32, #tpu.memory_space<vmem>>, vector<8x128xf32>
    tpu.vector_store %arg10[%c0_36, %c0_37], %60 {strides = array<i32>} : memref<8x128xf32, #tpu.memory_space<vmem>>, vector<8x128xf32>,
    %cst_38 = arith.constant 0.000000e+00 : f32
    %62 = vector.broadcast %cst_38 : f32 to vector<8x128xf32>
    %63 = arith.select %55, %50, %62 : vector<8x128xi1>, vector<8x128xf32>
    %64 = arith.index_cast %12 : i32 to index
    %c0_39 = arith.constant 0 : index
    %65 = vector.load %arg13[%64, %c0_39] : memref<64x128xf32, #tpu.memory_space<vmem>>, vector<8x128xf32>
    tpu.vector_store %arg13[%64, %c0_39], %63 {strides = array<i32>} : memref<64x128xf32, #tpu.memory_space<vmem>>, vector<8x128xf32>,
    %c1_i32 = arith.constant 1 : i32
    %c8_i32_40 = arith.constant 8 : i32
    %66 = arith.muli %c1_i32, %c8_i32_40 : i32
    %67 = tpu.assume_multiple %66, 8 : i32
    %68 = arith.index_cast %67 : i32 to index
    %c0_41 = arith.constant 0 : index
    %69 = vector.load %arg12[%68, %c0_41] : memref<64x512xf32, #tpu.memory_space<vmem>>, vector<8x512xf32>
    %c0_42 = arith.constant 0 : index
    %c0_43 = arith.constant 0 : index
    %70 = vector.load %arg10[%c0_42, %c0_43] : memref<8x128xf32, #tpu.memory_space<vmem>>, vector<8x128xf32>
    %c0_44 = arith.constant 0 : index
    %c0_45 = arith.constant 0 : index
    %71 = vector.load %arg5[%c0_44, %c0_45] : memref<128x512xf32, #tpu.memory_space<vmem>>, vector<128x512xf32>
    %cst_46 = arith.constant dense<0.000000e+00> : vector<8x512xf32>
    %72 = tpu.matmul %70, %71, %cst_46 {dimension_numbers = #tpu.dot_dimension_numbers<[1], [0], [0], [1], [0, 0, 1, 1], [], []>} : vector<8x128xf32>, vector<128x512xf32>, vector<8x512xf32> -> vector<8x512xf32>
    %73 = arith.addf %69, %72 : vector<8x512xf32>
    %74 = vector.extract_strided_slice %73 {offsets = [0, 0], sizes = [8, 128], strides = [1, 1]} : vector<8x512xf32> to vector<8x128xf32>
    %cst_47 = arith.constant 5.000000e-01 : f32
    %75 = vector.broadcast %cst_47 : f32 to vector<8x128xf32>
    %76 = arith.mulf %75, %74 : vector<8x128xf32>
    %77 = math.tanh %76 : vector<8x128xf32>
    %cst_48 = arith.constant 1.000000e+00 : f32
    %78 = vector.broadcast %cst_48 : f32 to vector<8x128xf32>
    %79 = arith.addf %77, %78 : vector<8x128xf32>
    %cst_49 = arith.constant 5.000000e-01 : f32
    %80 = vector.broadcast %cst_49 : f32 to vector<8x128xf32>
    %81 = arith.mulf %80, %79 : vector<8x128xf32>
    %82 = vector.extract_strided_slice %73 {offsets = [0, 128], sizes = [8, 128], strides = [1, 1]} : vector<8x512xf32> to vector<8x128xf32>
    %cst_50 = arith.constant 5.000000e-01 : f32
    %83 = vector.broadcast %cst_50 : f32 to vector<8x128xf32>
    %84 = arith.mulf %83, %82 : vector<8x128xf32>
    %85 = math.tanh %84 : vector<8x128xf32>
    %cst_51 = arith.constant 1.000000e+00 : f32
    %86 = vector.broadcast %cst_51 : f32 to vector<8x128xf32>
    %87 = arith.addf %85, %86 : vector<8x128xf32>
    %cst_52 = arith.constant 5.000000e-01 : f32
    %88 = vector.broadcast %cst_52 : f32 to vector<8x128xf32>
    %89 = arith.mulf %88, %87 : vector<8x128xf32>
    %90 = vector.extract_strided_slice %73 {offsets = [0, 256], sizes = [8, 128], strides = [1, 1]} : vector<8x512xf32> to vector<8x128xf32>
    %91 = math.tanh %90 : vector<8x128xf32>
    %92 = vector.extract_strided_slice %73 {offsets = [0, 384], sizes = [8, 128], strides = [1, 1]} : vector<8x512xf32> to vector<8x128xf32>
    %cst_53 = arith.constant 5.000000e-01 : f32
    %93 = vector.broadcast %cst_53 : f32 to vector<8x128xf32>
    %94 = arith.mulf %93, %92 : vector<8x128xf32>
    %95 = math.tanh %94 : vector<8x128xf32>
    %cst_54 = arith.constant 1.000000e+00 : f32
    %96 = vector.broadcast %cst_54 : f32 to vector<8x128xf32>
    %97 = arith.addf %95, %96 : vector<8x128xf32>
    %cst_55 = arith.constant 5.000000e-01 : f32
    %98 = vector.broadcast %cst_55 : f32 to vector<8x128xf32>
    %99 = arith.mulf %98, %97 : vector<8x128xf32>
    %c0_56 = arith.constant 0 : index
    %c0_57 = arith.constant 0 : index
    %100 = vector.load %arg11[%c0_56, %c0_57] : memref<8x128xf32, #tpu.memory_space<vmem>>, vector<8x128xf32>
    %101 = arith.mulf %89, %100 : vector<8x128xf32>
    %102 = arith.mulf %81, %91 : vector<8x128xf32>
    %103 = arith.addf %101, %102 : vector<8x128xf32>
    %104 = math.tanh %103 : vector<8x128xf32>
    %105 = arith.mulf %99, %104 : vector<8x128xf32>
    %c0_58 = arith.constant 0 : index
    %106 = arith.index_cast %67 : i32 to index
    %c0_59 = arith.constant 0 : index
    %107 = vector.load %arg3[%c0_58, %106, %c0_59] : memref<1x64x128xf32, #tpu.memory_space<vmem>>, vector<1x8x128xf32>
    %108 = vector.shape_cast %107 : vector<1x8x128xf32> to vector<8x128xf32>
    %cst_60 = arith.constant 5.000000e-01 : f32
    %109 = vector.broadcast %cst_60 : f32 to vector<8x128xf32>
    %110 = arith.cmpf ogt, %108, %109 : vector<8x128xf32>
    %c0_61 = arith.constant 0 : index
    %c0_62 = arith.constant 0 : index
    %111 = vector.load %arg11[%c0_61, %c0_62] : memref<8x128xf32, #tpu.memory_space<vmem>>, vector<8x128xf32>
    %112 = arith.select %110, %103, %111 : vector<8x128xi1>, vector<8x128xf32>
    %c0_63 = arith.constant 0 : index
    %c0_64 = arith.constant 0 : index
    %113 = vector.load %arg11[%c0_63, %c0_64] : memref<8x128xf32, #tpu.memory_space<vmem>>, vector<8x128xf32>
    tpu.vector_store %arg11[%c0_63, %c0_64], %112 {strides = array<i32>} : memref<8x128xf32, #tpu.memory_space<vmem>>, vector<8x128xf32>,
    %c0_65 = arith.constant 0 : index
    %c0_66 = arith.constant 0 : index
    %114 = vector.load %arg10[%c0_65, %c0_66] : memref<8x128xf32, #tpu.memory_space<vmem>>, vector<8x128xf32>
    %115 = arith.select %110, %105, %114 : vector<8x128xi1>, vector<8x128xf32>
    %c0_67 = arith.constant 0 : index
    %c0_68 = arith.constant 0 : index
    %116 = vector.load %arg10[%c0_67, %c0_68] : memref<8x128xf32, #tpu.memory_space<vmem>>, vector<8x128xf32>
    tpu.vector_store %arg10[%c0_67, %c0_68], %115 {strides = array<i32>} : memref<8x128xf32, #tpu.memory_space<vmem>>, vector<8x128xf32>,
    %cst_69 = arith.constant 0.000000e+00 : f32
    %117 = vector.broadcast %cst_69 : f32 to vector<8x128xf32>
    %118 = arith.select %110, %105, %117 : vector<8x128xi1>, vector<8x128xf32>
    %119 = arith.index_cast %67 : i32 to index
    %c0_70 = arith.constant 0 : index
    %120 = vector.load %arg13[%119, %c0_70] : memref<64x128xf32, #tpu.memory_space<vmem>>, vector<8x128xf32>
    tpu.vector_store %arg13[%119, %c0_70], %118 {strides = array<i32>} : memref<64x128xf32, #tpu.memory_space<vmem>>, vector<8x128xf32>,
    %c2_i32 = arith.constant 2 : i32
    %c8_i32_71 = arith.constant 8 : i32
    %121 = arith.muli %c2_i32, %c8_i32_71 : i32
    %122 = tpu.assume_multiple %121, 8 : i32
    %123 = arith.index_cast %122 : i32 to index
    %c0_72 = arith.constant 0 : index
    %124 = vector.load %arg12[%123, %c0_72] : memref<64x512xf32, #tpu.memory_space<vmem>>, vector<8x512xf32>
    %c0_73 = arith.constant 0 : index
    %c0_74 = arith.constant 0 : index
    %125 = vector.load %arg10[%c0_73, %c0_74] : memref<8x128xf32, #tpu.memory_space<vmem>>, vector<8x128xf32>
    %c0_75 = arith.constant 0 : index
    %c0_76 = arith.constant 0 : index
    %126 = vector.load %arg5[%c0_75, %c0_76] : memref<128x512xf32, #tpu.memory_space<vmem>>, vector<128x512xf32>
    %cst_77 = arith.constant dense<0.000000e+00> : vector<8x512xf32>
    %127 = tpu.matmul %125, %126, %cst_77 {dimension_numbers = #tpu.dot_dimension_numbers<[1], [0], [0], [1], [0, 0, 1, 1], [], []>} : vector<8x128xf32>, vector<128x512xf32>, vector<8x512xf32> -> vector<8x512xf32>
    %128 = arith.addf %124, %127 : vector<8x512xf32>
    %129 = vector.extract_strided_slice %128 {offsets = [0, 0], sizes = [8, 128], strides = [1, 1]} : vector<8x512xf32> to vector<8x128xf32>
    %cst_78 = arith.constant 5.000000e-01 : f32
    %130 = vector.broadcast %cst_78 : f32 to vector<8x128xf32>
    %131 = arith.mulf %130, %129 : vector<8x128xf32>
    %132 = math.tanh %131 : vector<8x128xf32>
    %cst_79 = arith.constant 1.000000e+00 : f32
    %133 = vector.broadcast %cst_79 : f32 to vector<8x128xf32>
    %134 = arith.addf %132, %133 : vector<8x128xf32>
    %cst_80 = arith.constant 5.000000e-01 : f32
    %135 = vector.broadcast %cst_80 : f32 to vector<8x128xf32>
    %136 = arith.mulf %135, %134 : vector<8x128xf32>
    %137 = vector.extract_strided_slice %128 {offsets = [0, 128], sizes = [8, 128], strides = [1, 1]} : vector<8x512xf32> to vector<8x128xf32>
    %cst_81 = arith.constant 5.000000e-01 : f32
    %138 = vector.broadcast %cst_81 : f32 to vector<8x128xf32>
    %139 = arith.mulf %138, %137 : vector<8x128xf32>
    %140 = math.tanh %139 : vector<8x128xf32>
    %cst_82 = arith.constant 1.000000e+00 : f32
    %141 = vector.broadcast %cst_82 : f32 to vector<8x128xf32>
    %142 = arith.addf %140, %141 : vector<8x128xf32>
    %cst_83 = arith.constant 5.000000e-01 : f32
    %143 = vector.broadcast %cst_83 : f32 to vector<8x128xf32>
    %144 = arith.mulf %143, %142 : vector<8x128xf32>
    %145 = vector.extract_strided_slice %128 {offsets = [0, 256], sizes = [8, 128], strides = [1, 1]} : vector<8x512xf32> to vector<8x128xf32>
    %146 = math.tanh %145 : vector<8x128xf32>
    %147 = vector.extract_strided_slice %128 {offsets = [0, 384], sizes = [8, 128], strides = [1, 1]} : vector<8x512xf32> to vector<8x128xf32>
    %cst_84 = arith.constant 5.000000e-01 : f32
    %148 = vector.broadcast %cst_84 : f32 to vector<8x128xf32>
    %149 = arith.mulf %148, %147 : vector<8x128xf32>
    %150 = math.tanh %149 : vector<8x128xf32>
    %cst_85 = arith.constant 1.000000e+00 : f32
    %151 = vector.broadcast %cst_85 : f32 to vector<8x128xf32>
    %152 = arith.addf %150, %151 : vector<8x128xf32>
    %cst_86 = arith.constant 5.000000e-01 : f32
    %153 = vector.broadcast %cst_86 : f32 to vector<8x128xf32>
    %154 = arith.mulf %153, %152 : vector<8x128xf32>
    %c0_87 = arith.constant 0 : index
    %c0_88 = arith.constant 0 : index
    %155 = vector.load %arg11[%c0_87, %c0_88] : memref<8x128xf32, #tpu.memory_space<vmem>>, vector<8x128xf32>
    %156 = arith.mulf %144, %155 : vector<8x128xf32>
    %157 = arith.mulf %136, %146 : vector<8x128xf32>
    %158 = arith.addf %156, %157 : vector<8x128xf32>
    %159 = math.tanh %158 : vector<8x128xf32>
    %160 = arith.mulf %154, %159 : vector<8x128xf32>
    %c0_89 = arith.constant 0 : index
    %161 = arith.index_cast %122 : i32 to index
    %c0_90 = arith.constant 0 : index
    %162 = vector.load %arg3[%c0_89, %161, %c0_90] : memref<1x64x128xf32, #tpu.memory_space<vmem>>, vector<1x8x128xf32>
    %163 = vector.shape_cast %162 : vector<1x8x128xf32> to vector<8x128xf32>
    %cst_91 = arith.constant 5.000000e-01 : f32
    %164 = vector.broadcast %cst_91 : f32 to vector<8x128xf32>
    %165 = arith.cmpf ogt, %163, %164 : vector<8x128xf32>
    %c0_92 = arith.constant 0 : index
    %c0_93 = arith.constant 0 : index
    %166 = vector.load %arg11[%c0_92, %c0_93] : memref<8x128xf32, #tpu.memory_space<vmem>>, vector<8x128xf32>
    %167 = arith.select %165, %158, %166 : vector<8x128xi1>, vector<8x128xf32>
    %c0_94 = arith.constant 0 : index
    %c0_95 = arith.constant 0 : index
    %168 = vector.load %arg11[%c0_94, %c0_95] : memref<8x128xf32, #tpu.memory_space<vmem>>, vector<8x128xf32>
    tpu.vector_store %arg11[%c0_94, %c0_95], %167 {strides = array<i32>} : memref<8x128xf32, #tpu.memory_space<vmem>>, vector<8x128xf32>,
    %c0_96 = arith.constant 0 : index
    %c0_97 = arith.constant 0 : index
    %169 = vector.load %arg10[%c0_96, %c0_97] : memref<8x128xf32, #tpu.memory_space<vmem>>, vector<8x128xf32>
    %170 = arith.select %165, %160, %169 : vector<8x128xi1>, vector<8x128xf32>
    %c0_98 = arith.constant 0 : index
    %c0_99 = arith.constant 0 : index
    %171 = vector.load %arg10[%c0_98, %c0_99] : memref<8x128xf32, #tpu.memory_space<vmem>>, vector<8x128xf32>
    tpu.vector_store %arg10[%c0_98, %c0_99], %170 {strides = array<i32>} : memref<8x128xf32, #tpu.memory_space<vmem>>, vector<8x128xf32>,
    %cst_100 = arith.constant 0.000000e+00 : f32
    %172 = vector.broadcast %cst_100 : f32 to vector<8x128xf32>
    %173 = arith.select %165, %160, %172 : vector<8x128xi1>, vector<8x128xf32>
    %174 = arith.index_cast %122 : i32 to index
    %c0_101 = arith.constant 0 : index
    %175 = vector.load %arg13[%174, %c0_101] : memref<64x128xf32, #tpu.memory_space<vmem>>, vector<8x128xf32>
    tpu.vector_store %arg13[%174, %c0_101], %173 {strides = array<i32>} : memref<64x128xf32, #tpu.memory_space<vmem>>, vector<8x128xf32>,
    %c3_i32 = arith.constant 3 : i32
    %c8_i32_102 = arith.constant 8 : i32
    %176 = arith.muli %c3_i32, %c8_i32_102 : i32
    %177 = tpu.assume_multiple %176, 8 : i32
    %178 = arith.index_cast %177 : i32 to index
    %c0_103 = arith.constant 0 : index
    %179 = vector.load %arg12[%178, %c0_103] : memref<64x512xf32, #tpu.memory_space<vmem>>, vector<8x512xf32>
    %c0_104 = arith.constant 0 : index
    %c0_105 = arith.constant 0 : index
    %180 = vector.load %arg10[%c0_104, %c0_105] : memref<8x128xf32, #tpu.memory_space<vmem>>, vector<8x128xf32>
    %c0_106 = arith.constant 0 : index
    %c0_107 = arith.constant 0 : index
    %181 = vector.load %arg5[%c0_106, %c0_107] : memref<128x512xf32, #tpu.memory_space<vmem>>, vector<128x512xf32>
    %cst_108 = arith.constant dense<0.000000e+00> : vector<8x512xf32>
    %182 = tpu.matmul %180, %181, %cst_108 {dimension_numbers = #tpu.dot_dimension_numbers<[1], [0], [0], [1], [0, 0, 1, 1], [], []>} : vector<8x128xf32>, vector<128x512xf32>, vector<8x512xf32> -> vector<8x512xf32>
    %183 = arith.addf %179, %182 : vector<8x512xf32>
    %184 = vector.extract_strided_slice %183 {offsets = [0, 0], sizes = [8, 128], strides = [1, 1]} : vector<8x512xf32> to vector<8x128xf32>
    %cst_109 = arith.constant 5.000000e-01 : f32
    %185 = vector.broadcast %cst_109 : f32 to vector<8x128xf32>
    %186 = arith.mulf %185, %184 : vector<8x128xf32>
    %187 = math.tanh %186 : vector<8x128xf32>
    %cst_110 = arith.constant 1.000000e+00 : f32
    %188 = vector.broadcast %cst_110 : f32 to vector<8x128xf32>
    %189 = arith.addf %187, %188 : vector<8x128xf32>
    %cst_111 = arith.constant 5.000000e-01 : f32
    %190 = vector.broadcast %cst_111 : f32 to vector<8x128xf32>
    %191 = arith.mulf %190, %189 : vector<8x128xf32>
    %192 = vector.extract_strided_slice %183 {offsets = [0, 128], sizes = [8, 128], strides = [1, 1]} : vector<8x512xf32> to vector<8x128xf32>
    %cst_112 = arith.constant 5.000000e-01 : f32
    %193 = vector.broadcast %cst_112 : f32 to vector<8x128xf32>
    %194 = arith.mulf %193, %192 : vector<8x128xf32>
    %195 = math.tanh %194 : vector<8x128xf32>
    %cst_113 = arith.constant 1.000000e+00 : f32
    %196 = vector.broadcast %cst_113 : f32 to vector<8x128xf32>
    %197 = arith.addf %195, %196 : vector<8x128xf32>
    %cst_114 = arith.constant 5.000000e-01 : f32
    %198 = vector.broadcast %cst_114 : f32 to vector<8x128xf32>
    %199 = arith.mulf %198, %197 : vector<8x128xf32>
    %200 = vector.extract_strided_slice %183 {offsets = [0, 256], sizes = [8, 128], strides = [1, 1]} : vector<8x512xf32> to vector<8x128xf32>
    %201 = math.tanh %200 : vector<8x128xf32>
    %202 = vector.extract_strided_slice %183 {offsets = [0, 384], sizes = [8, 128], strides = [1, 1]} : vector<8x512xf32> to vector<8x128xf32>
    %cst_115 = arith.constant 5.000000e-01 : f32
    %203 = vector.broadcast %cst_115 : f32 to vector<8x128xf32>
    %204 = arith.mulf %203, %202 : vector<8x128xf32>
    %205 = math.tanh %204 : vector<8x128xf32>
    %cst_116 = arith.constant 1.000000e+00 : f32
    %206 = vector.broadcast %cst_116 : f32 to vector<8x128xf32>
    %207 = arith.addf %205, %206 : vector<8x128xf32>
    %cst_117 = arith.constant 5.000000e-01 : f32
    %208 = vector.broadcast %cst_117 : f32 to vector<8x128xf32>
    %209 = arith.mulf %208, %207 : vector<8x128xf32>
    %c0_118 = arith.constant 0 : index
    %c0_119 = arith.constant 0 : index
    %210 = vector.load %arg11[%c0_118, %c0_119] : memref<8x128xf32, #tpu.memory_space<vmem>>, vector<8x128xf32>
    %211 = arith.mulf %199, %210 : vector<8x128xf32>
    %212 = arith.mulf %191, %201 : vector<8x128xf32>
    %213 = arith.addf %211, %212 : vector<8x128xf32>
    %214 = math.tanh %213 : vector<8x128xf32>
    %215 = arith.mulf %209, %214 : vector<8x128xf32>
    %c0_120 = arith.constant 0 : index
    %216 = arith.index_cast %177 : i32 to index
    %c0_121 = arith.constant 0 : index
    %217 = vector.load %arg3[%c0_120, %216, %c0_121] : memref<1x64x128xf32, #tpu.memory_space<vmem>>, vector<1x8x128xf32>
    %218 = vector.shape_cast %217 : vector<1x8x128xf32> to vector<8x128xf32>
    %cst_122 = arith.constant 5.000000e-01 : f32
    %219 = vector.broadcast %cst_122 : f32 to vector<8x128xf32>
    %220 = arith.cmpf ogt, %218, %219 : vector<8x128xf32>
    %c0_123 = arith.constant 0 : index
    %c0_124 = arith.constant 0 : index
    %221 = vector.load %arg11[%c0_123, %c0_124] : memref<8x128xf32, #tpu.memory_space<vmem>>, vector<8x128xf32>
    %222 = arith.select %220, %213, %221 : vector<8x128xi1>, vector<8x128xf32>
    %c0_125 = arith.constant 0 : index
    %c0_126 = arith.constant 0 : index
    %223 = vector.load %arg11[%c0_125, %c0_126] : memref<8x128xf32, #tpu.memory_space<vmem>>, vector<8x128xf32>
    tpu.vector_store %arg11[%c0_125, %c0_126], %222 {strides = array<i32>} : memref<8x128xf32, #tpu.memory_space<vmem>>, vector<8x128xf32>,
    %c0_127 = arith.constant 0 : index
    %c0_128 = arith.constant 0 : index
    %224 = vector.load %arg10[%c0_127, %c0_128] : memref<8x128xf32, #tpu.memory_space<vmem>>, vector<8x128xf32>
    %225 = arith.select %220, %215, %224 : vector<8x128xi1>, vector<8x128xf32>
    %c0_129 = arith.constant 0 : index
    %c0_130 = arith.constant 0 : index
    %226 = vector.load %arg10[%c0_129, %c0_130] : memref<8x128xf32, #tpu.memory_space<vmem>>, vector<8x128xf32>
    tpu.vector_store %arg10[%c0_129, %c0_130], %225 {strides = array<i32>} : memref<8x128xf32, #tpu.memory_space<vmem>>, vector<8x128xf32>,
    %cst_131 = arith.constant 0.000000e+00 : f32
    %227 = vector.broadcast %cst_131 : f32 to vector<8x128xf32>
    %228 = arith.select %220, %215, %227 : vector<8x128xi1>, vector<8x128xf32>
    %229 = arith.index_cast %177 : i32 to index
    %c0_132 = arith.constant 0 : index
    %230 = vector.load %arg13[%229, %c0_132] : memref<64x128xf32, #tpu.memory_space<vmem>>, vector<8x128xf32>
    tpu.vector_store %arg13[%229, %c0_132], %228 {strides = array<i32>} : memref<64x128xf32, #tpu.memory_space<vmem>>, vector<8x128xf32>,
    %c4_i32 = arith.constant 4 : i32
    %c8_i32_133 = arith.constant 8 : i32
    %231 = arith.muli %c4_i32, %c8_i32_133 : i32
    %232 = tpu.assume_multiple %231, 8 : i32
    %233 = arith.index_cast %232 : i32 to index
    %c0_134 = arith.constant 0 : index
    %234 = vector.load %arg12[%233, %c0_134] : memref<64x512xf32, #tpu.memory_space<vmem>>, vector<8x512xf32>
    %c0_135 = arith.constant 0 : index
    %c0_136 = arith.constant 0 : index
    %235 = vector.load %arg10[%c0_135, %c0_136] : memref<8x128xf32, #tpu.memory_space<vmem>>, vector<8x128xf32>
    %c0_137 = arith.constant 0 : index
    %c0_138 = arith.constant 0 : index
    %236 = vector.load %arg5[%c0_137, %c0_138] : memref<128x512xf32, #tpu.memory_space<vmem>>, vector<128x512xf32>
    %cst_139 = arith.constant dense<0.000000e+00> : vector<8x512xf32>
    %237 = tpu.matmul %235, %236, %cst_139 {dimension_numbers = #tpu.dot_dimension_numbers<[1], [0], [0], [1], [0, 0, 1, 1], [], []>} : vector<8x128xf32>, vector<128x512xf32>, vector<8x512xf32> -> vector<8x512xf32>
    %238 = arith.addf %234, %237 : vector<8x512xf32>
    %239 = vector.extract_strided_slice %238 {offsets = [0, 0], sizes = [8, 128], strides = [1, 1]} : vector<8x512xf32> to vector<8x128xf32>
    %cst_140 = arith.constant 5.000000e-01 : f32
    %240 = vector.broadcast %cst_140 : f32 to vector<8x128xf32>
    %241 = arith.mulf %240, %239 : vector<8x128xf32>
    %242 = math.tanh %241 : vector<8x128xf32>
    %cst_141 = arith.constant 1.000000e+00 : f32
    %243 = vector.broadcast %cst_141 : f32 to vector<8x128xf32>
    %244 = arith.addf %242, %243 : vector<8x128xf32>
    %cst_142 = arith.constant 5.000000e-01 : f32
    %245 = vector.broadcast %cst_142 : f32 to vector<8x128xf32>
    %246 = arith.mulf %245, %244 : vector<8x128xf32>
    %247 = vector.extract_strided_slice %238 {offsets = [0, 128], sizes = [8, 128], strides = [1, 1]} : vector<8x512xf32> to vector<8x128xf32>
    %cst_143 = arith.constant 5.000000e-01 : f32
    %248 = vector.broadcast %cst_143 : f32 to vector<8x128xf32>
    %249 = arith.mulf %248, %247 : vector<8x128xf32>
    %250 = math.tanh %249 : vector<8x128xf32>
    %cst_144 = arith.constant 1.000000e+00 : f32
    %251 = vector.broadcast %cst_144 : f32 to vector<8x128xf32>
    %252 = arith.addf %250, %251 : vector<8x128xf32>
    %cst_145 = arith.constant 5.000000e-01 : f32
    %253 = vector.broadcast %cst_145 : f32 to vector<8x128xf32>
    %254 = arith.mulf %253, %252 : vector<8x128xf32>
    %255 = vector.extract_strided_slice %238 {offsets = [0, 256], sizes = [8, 128], strides = [1, 1]} : vector<8x512xf32> to vector<8x128xf32>
    %256 = math.tanh %255 : vector<8x128xf32>
    %257 = vector.extract_strided_slice %238 {offsets = [0, 384], sizes = [8, 128], strides = [1, 1]} : vector<8x512xf32> to vector<8x128xf32>
    %cst_146 = arith.constant 5.000000e-01 : f32
    %258 = vector.broadcast %cst_146 : f32 to vector<8x128xf32>
    %259 = arith.mulf %258, %257 : vector<8x128xf32>
    %260 = math.tanh %259 : vector<8x128xf32>
    %cst_147 = arith.constant 1.000000e+00 : f32
    %261 = vector.broadcast %cst_147 : f32 to vector<8x128xf32>
    %262 = arith.addf %260, %261 : vector<8x128xf32>
    %cst_148 = arith.constant 5.000000e-01 : f32
    %263 = vector.broadcast %cst_148 : f32 to vector<8x128xf32>
    %264 = arith.mulf %263, %262 : vector<8x128xf32>
    %c0_149 = arith.constant 0 : index
    %c0_150 = arith.constant 0 : index
    %265 = vector.load %arg11[%c0_149, %c0_150] : memref<8x128xf32, #tpu.memory_space<vmem>>, vector<8x128xf32>
    %266 = arith.mulf %254, %265 : vector<8x128xf32>
    %267 = arith.mulf %246, %256 : vector<8x128xf32>
    %268 = arith.addf %266, %267 : vector<8x128xf32>
    %269 = math.tanh %268 : vector<8x128xf32>
    %270 = arith.mulf %264, %269 : vector<8x128xf32>
    %c0_151 = arith.constant 0 : index
    %271 = arith.index_cast %232 : i32 to index
    %c0_152 = arith.constant 0 : index
    %272 = vector.load %arg3[%c0_151, %271, %c0_152] : memref<1x64x128xf32, #tpu.memory_space<vmem>>, vector<1x8x128xf32>
    %273 = vector.shape_cast %272 : vector<1x8x128xf32> to vector<8x128xf32>
    %cst_153 = arith.constant 5.000000e-01 : f32
    %274 = vector.broadcast %cst_153 : f32 to vector<8x128xf32>
    %275 = arith.cmpf ogt, %273, %274 : vector<8x128xf32>
    %c0_154 = arith.constant 0 : index
    %c0_155 = arith.constant 0 : index
    %276 = vector.load %arg11[%c0_154, %c0_155] : memref<8x128xf32, #tpu.memory_space<vmem>>, vector<8x128xf32>
    %277 = arith.select %275, %268, %276 : vector<8x128xi1>, vector<8x128xf32>
    %c0_156 = arith.constant 0 : index
    %c0_157 = arith.constant 0 : index
    %278 = vector.load %arg11[%c0_156, %c0_157] : memref<8x128xf32, #tpu.memory_space<vmem>>, vector<8x128xf32>
    tpu.vector_store %arg11[%c0_156, %c0_157], %277 {strides = array<i32>} : memref<8x128xf32, #tpu.memory_space<vmem>>, vector<8x128xf32>,
    %c0_158 = arith.constant 0 : index
    %c0_159 = arith.constant 0 : index
    %279 = vector.load %arg10[%c0_158, %c0_159] : memref<8x128xf32, #tpu.memory_space<vmem>>, vector<8x128xf32>
    %280 = arith.select %275, %270, %279 : vector<8x128xi1>, vector<8x128xf32>
    %c0_160 = arith.constant 0 : index
    %c0_161 = arith.constant 0 : index
    %281 = vector.load %arg10[%c0_160, %c0_161] : memref<8x128xf32, #tpu.memory_space<vmem>>, vector<8x128xf32>
    tpu.vector_store %arg10[%c0_160, %c0_161], %280 {strides = array<i32>} : memref<8x128xf32, #tpu.memory_space<vmem>>, vector<8x128xf32>,
    %cst_162 = arith.constant 0.000000e+00 : f32
    %282 = vector.broadcast %cst_162 : f32 to vector<8x128xf32>
    %283 = arith.select %275, %270, %282 : vector<8x128xi1>, vector<8x128xf32>
    %284 = arith.index_cast %232 : i32 to index
    %c0_163 = arith.constant 0 : index
    %285 = vector.load %arg13[%284, %c0_163] : memref<64x128xf32, #tpu.memory_space<vmem>>, vector<8x128xf32>
    tpu.vector_store %arg13[%284, %c0_163], %283 {strides = array<i32>} : memref<64x128xf32, #tpu.memory_space<vmem>>, vector<8x128xf32>,
    %c5_i32 = arith.constant 5 : i32
    %c8_i32_164 = arith.constant 8 : i32
    %286 = arith.muli %c5_i32, %c8_i32_164 : i32
    %287 = tpu.assume_multiple %286, 8 : i32
    %288 = arith.index_cast %287 : i32 to index
    %c0_165 = arith.constant 0 : index
    %289 = vector.load %arg12[%288, %c0_165] : memref<64x512xf32, #tpu.memory_space<vmem>>, vector<8x512xf32>
    %c0_166 = arith.constant 0 : index
    %c0_167 = arith.constant 0 : index
    %290 = vector.load %arg10[%c0_166, %c0_167] : memref<8x128xf32, #tpu.memory_space<vmem>>, vector<8x128xf32>
    %c0_168 = arith.constant 0 : index
    %c0_169 = arith.constant 0 : index
    %291 = vector.load %arg5[%c0_168, %c0_169] : memref<128x512xf32, #tpu.memory_space<vmem>>, vector<128x512xf32>
    %cst_170 = arith.constant dense<0.000000e+00> : vector<8x512xf32>
    %292 = tpu.matmul %290, %291, %cst_170 {dimension_numbers = #tpu.dot_dimension_numbers<[1], [0], [0], [1], [0, 0, 1, 1], [], []>} : vector<8x128xf32>, vector<128x512xf32>, vector<8x512xf32> -> vector<8x512xf32>
    %293 = arith.addf %289, %292 : vector<8x512xf32>
    %294 = vector.extract_strided_slice %293 {offsets = [0, 0], sizes = [8, 128], strides = [1, 1]} : vector<8x512xf32> to vector<8x128xf32>
    %cst_171 = arith.constant 5.000000e-01 : f32
    %295 = vector.broadcast %cst_171 : f32 to vector<8x128xf32>
    %296 = arith.mulf %295, %294 : vector<8x128xf32>
    %297 = math.tanh %296 : vector<8x128xf32>
    %cst_172 = arith.constant 1.000000e+00 : f32
    %298 = vector.broadcast %cst_172 : f32 to vector<8x128xf32>
    %299 = arith.addf %297, %298 : vector<8x128xf32>
    %cst_173 = arith.constant 5.000000e-01 : f32
    %300 = vector.broadcast %cst_173 : f32 to vector<8x128xf32>
    %301 = arith.mulf %300, %299 : vector<8x128xf32>
    %302 = vector.extract_strided_slice %293 {offsets = [0, 128], sizes = [8, 128], strides = [1, 1]} : vector<8x512xf32> to vector<8x128xf32>
    %cst_174 = arith.constant 5.000000e-01 : f32
    %303 = vector.broadcast %cst_174 : f32 to vector<8x128xf32>
    %304 = arith.mulf %303, %302 : vector<8x128xf32>
    %305 = math.tanh %304 : vector<8x128xf32>
    %cst_175 = arith.constant 1.000000e+00 : f32
    %306 = vector.broadcast %cst_175 : f32 to vector<8x128xf32>
    %307 = arith.addf %305, %306 : vector<8x128xf32>
    %cst_176 = arith.constant 5.000000e-01 : f32
    %308 = vector.broadcast %cst_176 : f32 to vector<8x128xf32>
    %309 = arith.mulf %308, %307 : vector<8x128xf32>
    %310 = vector.extract_strided_slice %293 {offsets = [0, 256], sizes = [8, 128], strides = [1, 1]} : vector<8x512xf32> to vector<8x128xf32>
    %311 = math.tanh %310 : vector<8x128xf32>
    %312 = vector.extract_strided_slice %293 {offsets = [0, 384], sizes = [8, 128], strides = [1, 1]} : vector<8x512xf32> to vector<8x128xf32>
    %cst_177 = arith.constant 5.000000e-01 : f32
    %313 = vector.broadcast %cst_177 : f32 to vector<8x128xf32>
    %314 = arith.mulf %313, %312 : vector<8x128xf32>
    %315 = math.tanh %314 : vector<8x128xf32>
    %cst_178 = arith.constant 1.000000e+00 : f32
    %316 = vector.broadcast %cst_178 : f32 to vector<8x128xf32>
    %317 = arith.addf %315, %316 : vector<8x128xf32>
    %cst_179 = arith.constant 5.000000e-01 : f32
    %318 = vector.broadcast %cst_179 : f32 to vector<8x128xf32>
    %319 = arith.mulf %318, %317 : vector<8x128xf32>
    %c0_180 = arith.constant 0 : index
    %c0_181 = arith.constant 0 : index
    %320 = vector.load %arg11[%c0_180, %c0_181] : memref<8x128xf32, #tpu.memory_space<vmem>>, vector<8x128xf32>
    %321 = arith.mulf %309, %320 : vector<8x128xf32>
    %322 = arith.mulf %301, %311 : vector<8x128xf32>
    %323 = arith.addf %321, %322 : vector<8x128xf32>
    %324 = math.tanh %323 : vector<8x128xf32>
    %325 = arith.mulf %319, %324 : vector<8x128xf32>
    %c0_182 = arith.constant 0 : index
    %326 = arith.index_cast %287 : i32 to index
    %c0_183 = arith.constant 0 : index
    %327 = vector.load %arg3[%c0_182, %326, %c0_183] : memref<1x64x128xf32, #tpu.memory_space<vmem>>, vector<1x8x128xf32>
    %328 = vector.shape_cast %327 : vector<1x8x128xf32> to vector<8x128xf32>
    %cst_184 = arith.constant 5.000000e-01 : f32
    %329 = vector.broadcast %cst_184 : f32 to vector<8x128xf32>
    %330 = arith.cmpf ogt, %328, %329 : vector<8x128xf32>
    %c0_185 = arith.constant 0 : index
    %c0_186 = arith.constant 0 : index
    %331 = vector.load %arg11[%c0_185, %c0_186] : memref<8x128xf32, #tpu.memory_space<vmem>>, vector<8x128xf32>
    %332 = arith.select %330, %323, %331 : vector<8x128xi1>, vector<8x128xf32>
    %c0_187 = arith.constant 0 : index
    %c0_188 = arith.constant 0 : index
    %333 = vector.load %arg11[%c0_187, %c0_188] : memref<8x128xf32, #tpu.memory_space<vmem>>, vector<8x128xf32>
    tpu.vector_store %arg11[%c0_187, %c0_188], %332 {strides = array<i32>} : memref<8x128xf32, #tpu.memory_space<vmem>>, vector<8x128xf32>,
    %c0_189 = arith.constant 0 : index
    %c0_190 = arith.constant 0 : index
    %334 = vector.load %arg10[%c0_189, %c0_190] : memref<8x128xf32, #tpu.memory_space<vmem>>, vector<8x128xf32>
    %335 = arith.select %330, %325, %334 : vector<8x128xi1>, vector<8x128xf32>
    %c0_191 = arith.constant 0 : index
    %c0_192 = arith.constant 0 : index
    %336 = vector.load %arg10[%c0_191, %c0_192] : memref<8x128xf32, #tpu.memory_space<vmem>>, vector<8x128xf32>
    tpu.vector_store %arg10[%c0_191, %c0_192], %335 {strides = array<i32>} : memref<8x128xf32, #tpu.memory_space<vmem>>, vector<8x128xf32>,
    %cst_193 = arith.constant 0.000000e+00 : f32
    %337 = vector.broadcast %cst_193 : f32 to vector<8x128xf32>
    %338 = arith.select %330, %325, %337 : vector<8x128xi1>, vector<8x128xf32>
    %339 = arith.index_cast %287 : i32 to index
    %c0_194 = arith.constant 0 : index
    %340 = vector.load %arg13[%339, %c0_194] : memref<64x128xf32, #tpu.memory_space<vmem>>, vector<8x128xf32>
    tpu.vector_store %arg13[%339, %c0_194], %338 {strides = array<i32>} : memref<64x128xf32, #tpu.memory_space<vmem>>, vector<8x128xf32>,
    %c6_i32 = arith.constant 6 : i32
    %c8_i32_195 = arith.constant 8 : i32
    %341 = arith.muli %c6_i32, %c8_i32_195 : i32
    %342 = tpu.assume_multiple %341, 8 : i32
    %343 = arith.index_cast %342 : i32 to index
    %c0_196 = arith.constant 0 : index
    %344 = vector.load %arg12[%343, %c0_196] : memref<64x512xf32, #tpu.memory_space<vmem>>, vector<8x512xf32>
    %c0_197 = arith.constant 0 : index
    %c0_198 = arith.constant 0 : index
    %345 = vector.load %arg10[%c0_197, %c0_198] : memref<8x128xf32, #tpu.memory_space<vmem>>, vector<8x128xf32>
    %c0_199 = arith.constant 0 : index
    %c0_200 = arith.constant 0 : index
    %346 = vector.load %arg5[%c0_199, %c0_200] : memref<128x512xf32, #tpu.memory_space<vmem>>, vector<128x512xf32>
    %cst_201 = arith.constant dense<0.000000e+00> : vector<8x512xf32>
    %347 = tpu.matmul %345, %346, %cst_201 {dimension_numbers = #tpu.dot_dimension_numbers<[1], [0], [0], [1], [0, 0, 1, 1], [], []>} : vector<8x128xf32>, vector<128x512xf32>, vector<8x512xf32> -> vector<8x512xf32>
    %348 = arith.addf %344, %347 : vector<8x512xf32>
    %349 = vector.extract_strided_slice %348 {offsets = [0, 0], sizes = [8, 128], strides = [1, 1]} : vector<8x512xf32> to vector<8x128xf32>
    %cst_202 = arith.constant 5.000000e-01 : f32
    %350 = vector.broadcast %cst_202 : f32 to vector<8x128xf32>
    %351 = arith.mulf %350, %349 : vector<8x128xf32>
    %352 = math.tanh %351 : vector<8x128xf32>
    %cst_203 = arith.constant 1.000000e+00 : f32
    %353 = vector.broadcast %cst_203 : f32 to vector<8x128xf32>
    %354 = arith.addf %352, %353 : vector<8x128xf32>
    %cst_204 = arith.constant 5.000000e-01 : f32
    %355 = vector.broadcast %cst_204 : f32 to vector<8x128xf32>
    %356 = arith.mulf %355, %354 : vector<8x128xf32>
    %357 = vector.extract_strided_slice %348 {offsets = [0, 128], sizes = [8, 128], strides = [1, 1]} : vector<8x512xf32> to vector<8x128xf32>
    %cst_205 = arith.constant 5.000000e-01 : f32
    %358 = vector.broadcast %cst_205 : f32 to vector<8x128xf32>
    %359 = arith.mulf %358, %357 : vector<8x128xf32>
    %360 = math.tanh %359 : vector<8x128xf32>
    %cst_206 = arith.constant 1.000000e+00 : f32
    %361 = vector.broadcast %cst_206 : f32 to vector<8x128xf32>
    %362 = arith.addf %360, %361 : vector<8x128xf32>
    %cst_207 = arith.constant 5.000000e-01 : f32
    %363 = vector.broadcast %cst_207 : f32 to vector<8x128xf32>
    %364 = arith.mulf %363, %362 : vector<8x128xf32>
    %365 = vector.extract_strided_slice %348 {offsets = [0, 256], sizes = [8, 128], strides = [1, 1]} : vector<8x512xf32> to vector<8x128xf32>
    %366 = math.tanh %365 : vector<8x128xf32>
    %367 = vector.extract_strided_slice %348 {offsets = [0, 384], sizes = [8, 128], strides = [1, 1]} : vector<8x512xf32> to vector<8x128xf32>
    %cst_208 = arith.constant 5.000000e-01 : f32
    %368 = vector.broadcast %cst_208 : f32 to vector<8x128xf32>
    %369 = arith.mulf %368, %367 : vector<8x128xf32>
    %370 = math.tanh %369 : vector<8x128xf32>
    %cst_209 = arith.constant 1.000000e+00 : f32
    %371 = vector.broadcast %cst_209 : f32 to vector<8x128xf32>
    %372 = arith.addf %370, %371 : vector<8x128xf32>
    %cst_210 = arith.constant 5.000000e-01 : f32
    %373 = vector.broadcast %cst_210 : f32 to vector<8x128xf32>
    %374 = arith.mulf %373, %372 : vector<8x128xf32>
    %c0_211 = arith.constant 0 : index
    %c0_212 = arith.constant 0 : index
    %375 = vector.load %arg11[%c0_211, %c0_212] : memref<8x128xf32, #tpu.memory_space<vmem>>, vector<8x128xf32>
    %376 = arith.mulf %364, %375 : vector<8x128xf32>
    %377 = arith.mulf %356, %366 : vector<8x128xf32>
    %378 = arith.addf %376, %377 : vector<8x128xf32>
    %379 = math.tanh %378 : vector<8x128xf32>
    %380 = arith.mulf %374, %379 : vector<8x128xf32>
    %c0_213 = arith.constant 0 : index
    %381 = arith.index_cast %342 : i32 to index
    %c0_214 = arith.constant 0 : index
    %382 = vector.load %arg3[%c0_213, %381, %c0_214] : memref<1x64x128xf32, #tpu.memory_space<vmem>>, vector<1x8x128xf32>
    %383 = vector.shape_cast %382 : vector<1x8x128xf32> to vector<8x128xf32>
    %cst_215 = arith.constant 5.000000e-01 : f32
    %384 = vector.broadcast %cst_215 : f32 to vector<8x128xf32>
    %385 = arith.cmpf ogt, %383, %384 : vector<8x128xf32>
    %c0_216 = arith.constant 0 : index
    %c0_217 = arith.constant 0 : index
    %386 = vector.load %arg11[%c0_216, %c0_217] : memref<8x128xf32, #tpu.memory_space<vmem>>, vector<8x128xf32>
    %387 = arith.select %385, %378, %386 : vector<8x128xi1>, vector<8x128xf32>
    %c0_218 = arith.constant 0 : index
    %c0_219 = arith.constant 0 : index
    %388 = vector.load %arg11[%c0_218, %c0_219] : memref<8x128xf32, #tpu.memory_space<vmem>>, vector<8x128xf32>
    tpu.vector_store %arg11[%c0_218, %c0_219], %387 {strides = array<i32>} : memref<8x128xf32, #tpu.memory_space<vmem>>, vector<8x128xf32>,
    %c0_220 = arith.constant 0 : index
    %c0_221 = arith.constant 0 : index
    %389 = vector.load %arg10[%c0_220, %c0_221] : memref<8x128xf32, #tpu.memory_space<vmem>>, vector<8x128xf32>
    %390 = arith.select %385, %380, %389 : vector<8x128xi1>, vector<8x128xf32>
    %c0_222 = arith.constant 0 : index
    %c0_223 = arith.constant 0 : index
    %391 = vector.load %arg10[%c0_222, %c0_223] : memref<8x128xf32, #tpu.memory_space<vmem>>, vector<8x128xf32>
    tpu.vector_store %arg10[%c0_222, %c0_223], %390 {strides = array<i32>} : memref<8x128xf32, #tpu.memory_space<vmem>>, vector<8x128xf32>,
    %cst_224 = arith.constant 0.000000e+00 : f32
    %392 = vector.broadcast %cst_224 : f32 to vector<8x128xf32>
    %393 = arith.select %385, %380, %392 : vector<8x128xi1>, vector<8x128xf32>
    %394 = arith.index_cast %342 : i32 to index
    %c0_225 = arith.constant 0 : index
    %395 = vector.load %arg13[%394, %c0_225] : memref<64x128xf32, #tpu.memory_space<vmem>>, vector<8x128xf32>
    tpu.vector_store %arg13[%394, %c0_225], %393 {strides = array<i32>} : memref<64x128xf32, #tpu.memory_space<vmem>>, vector<8x128xf32>,
    %c7_i32 = arith.constant 7 : i32
    %c8_i32_226 = arith.constant 8 : i32
    %396 = arith.muli %c7_i32, %c8_i32_226 : i32
    %397 = tpu.assume_multiple %396, 8 : i32
    %398 = arith.index_cast %397 : i32 to index
    %c0_227 = arith.constant 0 : index
    %399 = vector.load %arg12[%398, %c0_227] : memref<64x512xf32, #tpu.memory_space<vmem>>, vector<8x512xf32>
    %c0_228 = arith.constant 0 : index
    %c0_229 = arith.constant 0 : index
    %400 = vector.load %arg10[%c0_228, %c0_229] : memref<8x128xf32, #tpu.memory_space<vmem>>, vector<8x128xf32>
    %c0_230 = arith.constant 0 : index
    %c0_231 = arith.constant 0 : index
    %401 = vector.load %arg5[%c0_230, %c0_231] : memref<128x512xf32, #tpu.memory_space<vmem>>, vector<128x512xf32>
    %cst_232 = arith.constant dense<0.000000e+00> : vector<8x512xf32>
    %402 = tpu.matmul %400, %401, %cst_232 {dimension_numbers = #tpu.dot_dimension_numbers<[1], [0], [0], [1], [0, 0, 1, 1], [], []>} : vector<8x128xf32>, vector<128x512xf32>, vector<8x512xf32> -> vector<8x512xf32>
    %403 = arith.addf %399, %402 : vector<8x512xf32>
    %404 = vector.extract_strided_slice %403 {offsets = [0, 0], sizes = [8, 128], strides = [1, 1]} : vector<8x512xf32> to vector<8x128xf32>
    %cst_233 = arith.constant 5.000000e-01 : f32
    %405 = vector.broadcast %cst_233 : f32 to vector<8x128xf32>
    %406 = arith.mulf %405, %404 : vector<8x128xf32>
    %407 = math.tanh %406 : vector<8x128xf32>
    %cst_234 = arith.constant 1.000000e+00 : f32
    %408 = vector.broadcast %cst_234 : f32 to vector<8x128xf32>
    %409 = arith.addf %407, %408 : vector<8x128xf32>
    %cst_235 = arith.constant 5.000000e-01 : f32
    %410 = vector.broadcast %cst_235 : f32 to vector<8x128xf32>
    %411 = arith.mulf %410, %409 : vector<8x128xf32>
    %412 = vector.extract_strided_slice %403 {offsets = [0, 128], sizes = [8, 128], strides = [1, 1]} : vector<8x512xf32> to vector<8x128xf32>
    %cst_236 = arith.constant 5.000000e-01 : f32
    %413 = vector.broadcast %cst_236 : f32 to vector<8x128xf32>
    %414 = arith.mulf %413, %412 : vector<8x128xf32>
    %415 = math.tanh %414 : vector<8x128xf32>
    %cst_237 = arith.constant 1.000000e+00 : f32
    %416 = vector.broadcast %cst_237 : f32 to vector<8x128xf32>
    %417 = arith.addf %415, %416 : vector<8x128xf32>
    %cst_238 = arith.constant 5.000000e-01 : f32
    %418 = vector.broadcast %cst_238 : f32 to vector<8x128xf32>
    %419 = arith.mulf %418, %417 : vector<8x128xf32>
    %420 = vector.extract_strided_slice %403 {offsets = [0, 256], sizes = [8, 128], strides = [1, 1]} : vector<8x512xf32> to vector<8x128xf32>
    %421 = math.tanh %420 : vector<8x128xf32>
    %422 = vector.extract_strided_slice %403 {offsets = [0, 384], sizes = [8, 128], strides = [1, 1]} : vector<8x512xf32> to vector<8x128xf32>
    %cst_239 = arith.constant 5.000000e-01 : f32
    %423 = vector.broadcast %cst_239 : f32 to vector<8x128xf32>
    %424 = arith.mulf %423, %422 : vector<8x128xf32>
    %425 = math.tanh %424 : vector<8x128xf32>
    %cst_240 = arith.constant 1.000000e+00 : f32
    %426 = vector.broadcast %cst_240 : f32 to vector<8x128xf32>
    %427 = arith.addf %425, %426 : vector<8x128xf32>
    %cst_241 = arith.constant 5.000000e-01 : f32
    %428 = vector.broadcast %cst_241 : f32 to vector<8x128xf32>
    %429 = arith.mulf %428, %427 : vector<8x128xf32>
    %c0_242 = arith.constant 0 : index
    %c0_243 = arith.constant 0 : index
    %430 = vector.load %arg11[%c0_242, %c0_243] : memref<8x128xf32, #tpu.memory_space<vmem>>, vector<8x128xf32>
    %431 = arith.mulf %419, %430 : vector<8x128xf32>
    %432 = arith.mulf %411, %421 : vector<8x128xf32>
    %433 = arith.addf %431, %432 : vector<8x128xf32>
    %434 = math.tanh %433 : vector<8x128xf32>
    %435 = arith.mulf %429, %434 : vector<8x128xf32>
    %c0_244 = arith.constant 0 : index
    %436 = arith.index_cast %397 : i32 to index
    %c0_245 = arith.constant 0 : index
    %437 = vector.load %arg3[%c0_244, %436, %c0_245] : memref<1x64x128xf32, #tpu.memory_space<vmem>>, vector<1x8x128xf32>
    %438 = vector.shape_cast %437 : vector<1x8x128xf32> to vector<8x128xf32>
    %cst_246 = arith.constant 5.000000e-01 : f32
    %439 = vector.broadcast %cst_246 : f32 to vector<8x128xf32>
    %440 = arith.cmpf ogt, %438, %439 : vector<8x128xf32>
    %c0_247 = arith.constant 0 : index
    %c0_248 = arith.constant 0 : index
    %441 = vector.load %arg11[%c0_247, %c0_248] : memref<8x128xf32, #tpu.memory_space<vmem>>, vector<8x128xf32>
    %442 = arith.select %440, %433, %441 : vector<8x128xi1>, vector<8x128xf32>
    %c0_249 = arith.constant 0 : index
    %c0_250 = arith.constant 0 : index
    %443 = vector.load %arg11[%c0_249, %c0_250] : memref<8x128xf32, #tpu.memory_space<vmem>>, vector<8x128xf32>
    tpu.vector_store %arg11[%c0_249, %c0_250], %442 {strides = array<i32>} : memref<8x128xf32, #tpu.memory_space<vmem>>, vector<8x128xf32>,
    %c0_251 = arith.constant 0 : index
    %c0_252 = arith.constant 0 : index
    %444 = vector.load %arg10[%c0_251, %c0_252] : memref<8x128xf32, #tpu.memory_space<vmem>>, vector<8x128xf32>
    %445 = arith.select %440, %435, %444 : vector<8x128xi1>, vector<8x128xf32>
    %c0_253 = arith.constant 0 : index
    %c0_254 = arith.constant 0 : index
    %446 = vector.load %arg10[%c0_253, %c0_254] : memref<8x128xf32, #tpu.memory_space<vmem>>, vector<8x128xf32>
    tpu.vector_store %arg10[%c0_253, %c0_254], %445 {strides = array<i32>} : memref<8x128xf32, #tpu.memory_space<vmem>>, vector<8x128xf32>,
    %cst_255 = arith.constant 0.000000e+00 : f32
    %447 = vector.broadcast %cst_255 : f32 to vector<8x128xf32>
    %448 = arith.select %440, %435, %447 : vector<8x128xi1>, vector<8x128xf32>
    %449 = arith.index_cast %397 : i32 to index
    %c0_256 = arith.constant 0 : index
    %450 = vector.load %arg13[%449, %c0_256] : memref<64x128xf32, #tpu.memory_space<vmem>>, vector<8x128xf32>
    tpu.vector_store %arg13[%449, %c0_256], %448 {strides = array<i32>} : memref<64x128xf32, #tpu.memory_space<vmem>>, vector<8x128xf32>,
    %c8_i32_257 = arith.constant 8 : i32
    %c0_258 = arith.constant 0 : index
    %c0_259 = arith.constant 0 : index
    %451 = vector.load %arg13[%c0_258, %c0_259] : memref<64x128xf32, #tpu.memory_space<vmem>>, vector<64x128xf32>
    %c0_260 = arith.constant 0 : index
    %c0_261 = arith.constant 0 : index
    %452 = vector.load %arg7[%c0_260, %c0_261] : memref<128x128xf32, #tpu.memory_space<vmem>>, vector<128x128xf32>
    %cst_262 = arith.constant dense<0.000000e+00> : vector<64x128xf32>
    %453 = tpu.matmul %451, %452, %cst_262 {dimension_numbers = #tpu.dot_dimension_numbers<[1], [0], [0], [1], [0, 0, 1, 1], [], []>} : vector<64x128xf32>, vector<128x128xf32>, vector<64x128xf32> -> vector<64x128xf32>
    %c0_263 = arith.constant 0 : index
    %c0_264 = arith.constant 0 : index
    %454 = vector.load %arg8[%c0_263, %c0_264] : memref<1x128xf32, #tpu.memory_space<vmem>>, vector<1x128xf32>
    %455 = vector.broadcast %454 : vector<1x128xf32> to vector<64x128xf32>
    %456 = arith.addf %453, %455 : vector<64x128xf32>
    %c0_265 = arith.constant 0 : index
    %c0_266 = arith.constant 0 : index
    %c0_267 = arith.constant 0 : index
    %457 = vector.load %arg9[%c0_265, %c0_266, %c0_267] : memref<1x64x128xf32, #tpu.memory_space<vmem>>, vector<1x64x128xf32>
    %458 = vector.shape_cast %457 : vector<1x64x128xf32> to vector<64x128xf32>
    %459 = vector.shape_cast %456 : vector<64x128xf32> to vector<1x64x128xf32>
    tpu.vector_store %arg9[%c0_265, %c0_266, %c0_267], %459 {strides = array<i32>} : memref<1x64x128xf32, #tpu.memory_space<vmem>>, vector<1x64x128xf32>,
    return
  }
  func.func @transform_0(%arg0: i32, %arg1: i32) -> (i32, i32, i32) {
    %c0_i32 = arith.constant 0 : i32
    %c0_i32_0 = arith.constant 0 : i32
    return %arg0, %arg1, %c0_i32 : i32, i32, i32
  }
  func.func @transform_1(%arg0: i32, %arg1: i32) -> (i32, i32, i32) {
    %c0_i32 = arith.constant 0 : i32
    %c0_i32_0 = arith.constant 0 : i32
    return %arg0, %arg1, %c0_i32 : i32, i32, i32
  }
  func.func @transform_2(%arg0: i32, %arg1: i32) -> (i32, i32) {
    %c0_i32 = arith.constant 0 : i32
    %c0_i32_0 = arith.constant 0 : i32
    %c0_i32_1 = arith.constant 0 : i32
    return %c0_i32, %c0_i32_0 : i32, i32
  }
  func.func @transform_3(%arg0: i32, %arg1: i32) -> (i32, i32) {
    %c0_i32 = arith.constant 0 : i32
    %c0_i32_0 = arith.constant 0 : i32
    %c0_i32_1 = arith.constant 0 : i32
    return %c0_i32, %c0_i32_0 : i32, i32
  }
  func.func @transform_4(%arg0: i32, %arg1: i32) -> (i32, i32) {
    %c0_i32 = arith.constant 0 : i32
    %c0_i32_0 = arith.constant 0 : i32
    %c0_i32_1 = arith.constant 0 : i32
    return %c0_i32, %c0_i32_0 : i32, i32
  }
  func.func @transform_5(%arg0: i32, %arg1: i32) -> (i32, i32) {
    %c0_i32 = arith.constant 0 : i32
    %c0_i32_0 = arith.constant 0 : i32
    %c0_i32_1 = arith.constant 0 : i32
    return %c0_i32, %c0_i32_0 : i32, i32
  }
  func.func @transform_6(%arg0: i32, %arg1: i32) -> (i32, i32) {
    %c0_i32 = arith.constant 0 : i32
    %c0_i32_0 = arith.constant 0 : i32
    %c0_i32_1 = arith.constant 0 : i32
    return %c0_i32, %c0_i32_0 : i32, i32
  }
  func.func @transform_7(%arg0: i32, %arg1: i32) -> (i32, i32, i32) {
    %c0_i32 = arith.constant 0 : i32
    %c0_i32_0 = arith.constant 0 : i32
    return %arg0, %arg1, %c0_i32 : i32, i32, i32
  }
}

</mosaic_0001>

<llo_original>
// kernel: _forward_full.1
$region0: #{_forward_full.1}
  #allocation0 [shape = 'u32[]', space=smem, size = 0x4, offset = 0x4, fixed_abs, tag = 'smem constant byte address 0x4 - core index']
  #allocation1 [shape = 'u32[72,128]{1,0:T(1,128)}', space=vmem, size = 0x9000, scoped, tag = 'internal scratch']
  #allocation2 [shape = 'f32[8,128]{1,0:T(8,128)}', space=vmem, size = 0x1000, scoped, tag = 'scratch operand']
  #allocation3 [shape = 'f32[8,128]{1,0:T(8,128)}', space=vmem, size = 0x1000, scoped, tag = 'scratch operand']
  #allocation4 [shape = 'f32[64,512]{1,0:T(8,128)}', space=vmem, size = 0x20000, scoped, tag = 'scratch operand']
  #allocation5 [shape = 'f32[64,128]{1,0:T(8,128)}', space=vmem, size = 0x8000, scoped, tag = 'scratch operand']
  %s0 = inlined_call_operand.vmem [shape: f32[1,64,128], index: 0, kind: input, shape index: {}]
  %s1 = inlined_call_operand.vmem [shape: f32[1,64,128], index: 1, kind: input, shape index: {}]
  %s2 = inlined_call_operand.vmem [shape: f32[128,512], index: 2, kind: input, shape index: {}]
  %s3 = inlined_call_operand.vmem [shape: f32[128,512], index: 3, kind: input, shape index: {}]
  %s4 = inlined_call_operand.vmem [shape: f32[1,512], index: 4, kind: input, shape index: {}]
  %s5 = inlined_call_operand.vmem [shape: f32[128,128], index: 5, kind: input, shape index: {}]
  %s6 = inlined_call_operand.vmem [shape: f32[1,128], index: 6, kind: input, shape index: {}]
  %s7 = inlined_call_operand.vmem [shape: f32[1,64,128], index: 7, kind: output, shape index: {}]
  %s8 = sld [smem:[#allocation0]]
  $region42: #{_forward_full.1} parent=0
    _
  %s10 = ssub.s32 1, %s8
  %s11 = scalar_select 0, %s10, %s8
  // Predicated region
  $region2: #{_forward_full.1} parent=0 // pred_check
    _
  $region3: #{_forward_full.1} parent=0 // pred_check_branch
    %13 = sbr.rel (0) target = $region5
  $region4: #{_forward_full.1} parent=0 // pred_region
    _
  $region5: #{_forward_full.1} parent=0 // pred_fallthru
    _
  // Predicated region
  $region6: #{_forward_full.1} parent=0 // pred_check
    _
  $region7: #{_forward_full.1} parent=0 // pred_check_branch
    %15 = sbr.rel (0) target = $region9
  $region8: #{_forward_full.1} parent=0 // pred_region
    _
  $region9: #{_forward_full.1} parent=0 // pred_fallthru
    _
  // Predicated region
  $region10: #{_forward_full.1} parent=0 // pred_check
    _
  $region11: #{_forward_full.1} parent=0 // pred_check_branch
    %17 = sbr.rel (0) target = $region13
  $region12: #{_forward_full.1} parent=0 // pred_region
    _
  $region13: #{_forward_full.1} parent=0 // pred_fallthru
    _
  // Predicated region
  $region14: #{_forward_full.1} parent=0 // pred_check
    _
  $region15: #{_forward_full.1} parent=0 // pred_check_branch
    %19 = sbr.rel (0) target = $region17
  $region16: #{_forward_full.1} parent=0 // pred_region
    _
  $region17: #{_forward_full.1} parent=0 // pred_fallthru
    _
  // Predicated region
  $region18: #{_forward_full.1} parent=0 // pred_check
    _
  $region19: #{_forward_full.1} parent=0 // pred_check_branch
    %21 = sbr.rel (0) target = $region21
  $region20: #{_forward_full.1} parent=0 // pred_region
    _
  $region21: #{_forward_full.1} parent=0 // pred_fallthru
    _
  // Predicated region
  $region22: #{_forward_full.1} parent=0 // pred_check
    _
  $region23: #{_forward_full.1} parent=0 // pred_check_branch
    %23 = sbr.rel (0) target = $region25
  $region24: #{_forward_full.1} parent=0 // pred_region
    _
  $region25: #{_forward_full.1} parent=0 // pred_fallthru
    _
  // Predicated region
  $region26: #{_forward_full.1} parent=0 // pred_check
    _
  $region27: #{_forward_full.1} parent=0 // pred_check_branch
    %25 = sbr.rel (0) target = $region29
  $region28: #{_forward_full.1} parent=0 // pred_region
    _
  $region29: #{_forward_full.1} parent=0 // pred_fallthru
    _
  %p26 = scmp.eq.s32.totalorder 0, 0
  // Predicated region
  $region30: #{_forward_full.1} parent=0 // pred_check
    %p27 = pneg %p26
  $region31: #{_forward_full.1} parent=0 // pred_check_branch
    %29 = sbr.rel (%p27) target = $region33
  $region32: #{_forward_full.1} parent=0 // pred_region
    %30 = vst [vmem:[#allocation2] sm:$0xff] 0.0
    %31 = vst [vmem:[#allocation3] sm:$0xff] 0.0
  $region33: #{_forward_full.1} parent=0 // pred_fallthru
    _
  %v32 = vld [vmem:[%s0] sm:$0xff]
  %v33 = vld [vmem:[%s0 + $0x8] sm:$0xff]
  %v34 = vld [vmem:[%s0 + $0x10] sm:$0xff]
  %v35 = vld [vmem:[%s0 + $0x18] sm:$0xff]
  %v36 = vld [vmem:[%s0 + $0x20] sm:$0xff]
  %v37 = vld [vmem:[%s0 + $0x28] sm:$0xff]
  %v38 = vld [vmem:[%s0 + $0x30] sm:$0xff]
  %v39 = vld [vmem:[%s0 + $0x38] sm:$0xff]
  %v40 = vld [vmem:[%s2] sm:$0xff]
  %v41 = vld [vmem:[%s2 + $0x8] sm:$0xff]
  %v42 = vld [vmem:[%s2 + $0x10] sm:$0xff]
  %v43 = vld [vmem:[%s2 + $0x18] sm:$0xff]
  %v44 = vld [vmem:[%s2 + $0x20] sm:$0xff]
  %v45 = vld [vmem:[%s2 + $0x28] sm:$0xff]
  %v46 = vld [vmem:[%s2 + $0x30] sm:$0xff]
  %v47 = vld [vmem:[%s2 + $0x38] sm:$0xff]
  %v48 = vld [vmem:[%s2 + $0x40] sm:$0xff]
  %v49 = vld [vmem:[%s2 + $0x48] sm:$0xff]
  %v50 = vld [vmem:[%s2 + $0x50] sm:$0xff]
  %v51 = vld [vmem:[%s2 + $0x58] sm:$0xff]
  %v52 = vld [vmem:[%s2 + $0x60] sm:$0xff]
  %v53 = vld [vmem:[%s2 + $0x68] sm:$0xff]
  %v54 = vld [vmem:[%s2 + $0x70] sm:$0xff]
  %v55 = vld [vmem:[%s2 + $0x78] sm:$0xff]
  %v56 = vld [vmem:[%s2 + $0x80] sm:$0xff]
  %v57 = vld [vmem:[%s2 + $0x88] sm:$0xff]
  %v58 = vld [vmem:[%s2 + $0x90] sm:$0xff]
  %v59 = vld [vmem:[%s2 + $0x98] sm:$0xff]
  %v60 = vld [vmem:[%s2 + $0xa0] sm:$0xff]
  %v61 = vld [vmem:[%s2 + $0xa8] sm:$0xff]
  %v62 = vld [vmem:[%s2 + $0xb0] sm:$0xff]
  %v63 = vld [vmem:[%s2 + $0xb8] sm:$0xff]
  %v64 = vld [vmem:[%s2 + $0xc0] sm:$0xff]
  %v65 = vld [vmem:[%s2 + $0xc8] sm:$0xff]
  %v66 = vld [vmem:[%s2 + $0xd0] sm:$0xff]
  %v67 = vld [vmem:[%s2 + $0xd8] sm:$0xff]
  %v68 = vld [vmem:[%s2 + $0xe0] sm:$0xff]
  %v69 = vld [vmem:[%s2 + $0xe8] sm:$0xff]
  %v70 = vld [vmem:[%s2 + $0xf0] sm:$0xff]
  %v71 = vld [vmem:[%s2 + $0xf8] sm:$0xff]
  %v72 = vld [vmem:[%s2 + $0x100] sm:$0xff]
  %v73 = vld [vmem:[%s2 + $0x108] sm:$0xff]
  %v74 = vld [vmem:[%s2 + $0x110] sm:$0xff]
  %v75 = vld [vmem:[%s2 + $0x118] sm:$0xff]
  %v76 = vld [vmem:[%s2 + $0x120] sm:$0xff]
  %v77 = vld [vmem:[%s2 + $0x128] sm:$0xff]
  %v78 = vld [vmem:[%s2 + $0x130] sm:$0xff]
  %v79 = vld [vmem:[%s2 + $0x138] sm:$0xff]
  %v80 = vld [vmem:[%s2 + $0x140] sm:$0xff]
  %v81 = vld [vmem:[%s2 + $0x148] sm:$0xff]
  %v82 = vld [vmem:[%s2 + $0x150] sm:$0xff]
  %v83 = vld [vmem:[%s2 + $0x158] sm:$0xff]
  %v84 = vld [vmem:[%s2 + $0x160] sm:$0xff]
  %v85 = vld [vmem:[%s2 + $0x168] sm:$0xff]
  %v86 = vld [vmem:[%s2 + $0x170] sm:$0xff]
  %v87 = vld [vmem:[%s2 + $0x178] sm:$0xff]
  %v88 = vld [vmem:[%s2 + $0x180] sm:$0xff]
  %v89 = vld [vmem:[%s2 + $0x188] sm:$0xff]
  %v90 = vld [vmem:[%s2 + $0x190] sm:$0xff]
  %v91 = vld [vmem:[%s2 + $0x198] sm:$0xff]
  %v92 = vld [vmem:[%s2 + $0x1a0] sm:$0xff]
  %v93 = vld [vmem:[%s2 + $0x1a8] sm:$0xff]
  %v94 = vld [vmem:[%s2 + $0x1b0] sm:$0xff]
  %v95 = vld [vmem:[%s2 + $0x1b8] sm:$0xff]
  %v96 = vld [vmem:[%s2 + $0x1c0] sm:$0xff]
  %v97 = vld [vmem:[%s2 + $0x1c8] sm:$0xff]
  %v98 = vld [vmem:[%s2 + $0x1d0] sm:$0xff]
  %v99 = vld [vmem:[%s2 + $0x1d8] sm:$0xff]
  %v100 = vld [vmem:[%s2 + $0x1e0] sm:$0xff]
  %v101 = vld [vmem:[%s2 + $0x1e8] sm:$0xff]
  %v102 = vld [vmem:[%s2 + $0x1f0] sm:$0xff]
  %v103 = vld [vmem:[%s2 + $0x1f8] sm:$0xff]
  %v104 = vld [vmem:[%s4] sm:$0xf]
  %v106 = vperm.slane %v104, 0
  %v107 = vperm.slane %v104, 1
  %v108 = vperm.slane %v104, 2
  %v109 = vperm.slane %v104, 3
  %114 = vmatpush.msra.mxu0 %v100
  %115 = vmatpush.msra.mxu0 %v96
  %116 = vmatpush.msra.mxu0 %v92
  %117 = vmatpush.msra.mxu0 %v88
  %118 = vmatpush.msra.mxu0 %v84
  %119 = vmatpush.msra.mxu0 %v80
  %120 = vmatpush.msra.mxu0 %v76
  %121 = vmatpush.msra.mxu0 %v72
  %122 = vmatpush.msra.mxu0 %v68
  %123 = vmatpush.msra.mxu0 %v64
  %124 = vmatpush.msra.mxu0 %v60
  %125 = vmatpush.msra.mxu0 %v56
  %126 = vmatpush.msra.mxu0 %v52
  %127 = vmatpush.msra.mxu0 %v48
  %128 = vmatpush.msra.mxu0 %v44
  %129 = vmatpush.msra.mxu0 %v40
  %130 = vmatmul.f32.gmra.mxu0 %v32
  %v131 = vpop.f32.mrf.mxu0
  %v132 = vadd.f32 %v106, %v131
  %133 = vmatmul.f32.gmra.mxu0 %v33
  %v134 = vpop.f32.mrf.mxu0
  %v135 = vadd.f32 %v106, %v134
  %136 = vmatmul.f32.gmra.mxu0 %v34
  %v137 = vpop.f32.mrf.mxu0
  %v138 = vadd.f32 %v106, %v137
  %139 = vmatmul.f32.gmra.mxu0 %v35
  %v140 = vpop.f32.mrf.mxu0
  %v141 = vadd.f32 %v106, %v140
  %142 = vmatmul.f32.gmra.mxu0 %v36
  %v143 = vpop.f32.mrf.mxu0
  %v144 = vadd.f32 %v106, %v143
  %145 = vmatmul.f32.gmra.mxu0 %v37
  %v146 = vpop.f32.mrf.mxu0
  %v147 = vadd.f32 %v106, %v146
  %148 = vmatmul.f32.gmra.mxu0 %v38
  %v149 = vpop.f32.mrf.mxu0
  %v150 = vadd.f32 %v106, %v149
  %151 = vmatmul.f32.gmra.mxu0 %v39
  %v152 = vpop.f32.mrf.mxu0
  %v153 = vadd.f32 %v106, %v152
  %154 = vdwg.mxu0
  %155 = vmatpush.msra.mxu0 %v101
  %156 = vmatpush.msra.mxu0 %v97
  %157 = vmatpush.msra.mxu0 %v93
  %158 = vmatpush.msra.mxu0 %v89
  %159 = vmatpush.msra.mxu0 %v85
  %160 = vmatpush.msra.mxu0 %v81
  %161 = vmatpush.msra.mxu0 %v77
  %162 = vmatpush.msra.mxu0 %v73
  %163 = vmatpush.msra.mxu0 %v69
  %164 = vmatpush.msra.mxu0 %v65
  %165 = vmatpush.msra.mxu0 %v61
  %166 = vmatpush.msra.mxu0 %v57
  %167 = vmatpush.msra.mxu0 %v53
  %168 = vmatpush.msra.mxu0 %v49
  %169 = vmatpush.msra.mxu0 %v45
  %170 = vmatpush.msra.mxu0 %v41
  %171 = vmatmul.f32.gmra.mxu0 %v32
  %v172 = vpop.f32.mrf.mxu0
  %v173 = vadd.f32 %v107, %v172
  %174 = vmatmul.f32.gmra.mxu0 %v33
  %v175 = vpop.f32.mrf.mxu0
  %v176 = vadd.f32 %v107, %v175
  %177 = vmatmul.f32.gmra.mxu0 %v34
  %v178 = vpop.f32.mrf.mxu0
  %v179 = vadd.f32 %v107, %v178
  %180 = vmatmul.f32.gmra.mxu0 %v35
  %v181 = vpop.f32.mrf.mxu0
  %v182 = vadd.f32 %v107, %v181
  %183 = vmatmul.f32.gmra.mxu0 %v36
  %v184 = vpop.f32.mrf.mxu0
  %v185 = vadd.f32 %v107, %v184
  %186 = vmatmul.f32.gmra.mxu0 %v37
  %v187 = vpop.f32.mrf.mxu0
  %v188 = vadd.f32 %v107, %v187
  %189 = vmatmul.f32.gmra.mxu0 %v38
  %v190 = vpop.f32.mrf.mxu0
  %v191 = vadd.f32 %v107, %v190
  %192 = vmatmul.f32.gmra.mxu0 %v39
  %v193 = vpop.f32.mrf.mxu0
  %v194 = vadd.f32 %v107, %v193
  %195 = vdwg.mxu0
  %196 = vmatpush.msra.mxu0 %v102
  %197 = vmatpush.msra.mxu0 %v98
  %198 = vmatpush.msra.mxu0 %v94
  %199 = vmatpush.msra.mxu0 %v90
  %200 = vmatpush.msra.mxu0 %v86
  %201 = vmatpush.msra.mxu0 %v82
  %202 = vmatpush.msra.mxu0 %v78
  %203 = vmatpush.msra.mxu0 %v74
  %204 = vmatpush.msra.mxu0 %v70
  %205 = vmatpush.msra.mxu0 %v66
  %206 = vmatpush.msra.mxu0 %v62
  %207 = vmatpush.msra.mxu0 %v58
  %208 = vmatpush.msra.mxu0 %v54
  %209 = vmatpush.msra.mxu0 %v50
  %210 = vmatpush.msra.mxu0 %v46
  %211 = vmatpush.msra.mxu0 %v42
  %212 = vmatmul.f32.gmra.mxu0 %v32
  %v213 = vpop.f32.mrf.mxu0
  %v214 = vadd.f32 %v108, %v213
  %215 = vmatmul.f32.gmra.mxu0 %v33
  %v216 = vpop.f32.mrf.mxu0
  %v217 = vadd.f32 %v108, %v216
  %218 = vmatmul.f32.gmra.mxu0 %v34
  %v219 = vpop.f32.mrf.mxu0
  %v220 = vadd.f32 %v108, %v219
  %221 = vmatmul.f32.gmra.mxu0 %v35
  %v222 = vpop.f32.mrf.mxu0
  %v223 = vadd.f32 %v108, %v222
  %224 = vmatmul.f32.gmra.mxu0 %v36
  %v225 = vpop.f32.mrf.mxu0
  %v226 = vadd.f32 %v108, %v225
  %227 = vmatmul.f32.gmra.mxu0 %v37
  %v228 = vpop.f32.mrf.mxu0
  %v229 = vadd.f32 %v108, %v228
  %230 = vmatmul.f32.gmra.mxu0 %v38
  %v231 = vpop.f32.mrf.mxu0
  %v232 = vadd.f32 %v108, %v231
  %233 = vmatmul.f32.gmra.mxu0 %v39
  %v234 = vpop.f32.mrf.mxu0
  %v235 = vadd.f32 %v108, %v234
  %236 = vdwg.mxu0
  %237 = vmatpush.msra.mxu0 %v103
  %238 = vmatpush.msra.mxu0 %v99
  %239 = vmatpush.msra.mxu0 %v95
  %240 = vmatpush.msra.mxu0 %v91
  %241 = vmatpush.msra.mxu0 %v87
  %242 = vmatpush.msra.mxu0 %v83
  %243 = vmatpush.msra.mxu0 %v79
  %244 = vmatpush.msra.mxu0 %v75
  %245 = vmatpush.msra.mxu0 %v71
  %246 = vmatpush.msra.mxu0 %v67
  %247 = vmatpush.msra.mxu0 %v63
  %248 = vmatpush.msra.mxu0 %v59
  %249 = vmatpush.msra.mxu0 %v55
  %250 = vmatpush.msra.mxu0 %v51
  %251 = vmatpush.msra.mxu0 %v47
  %252 = vmatpush.msra.mxu0 %v43
  %253 = vmatmul.f32.gmra.mxu0 %v32
  %v254 = vpop.f32.mrf.mxu0
  %v255 = vadd.f32 %v109, %v254
  %256 = vmatmul.f32.gmra.mxu0 %v33
  %v257 = vpop.f32.mrf.mxu0
  %v258 = vadd.f32 %v109, %v257
  %259 = vmatmul.f32.gmra.mxu0 %v34
  %v260 = vpop.f32.mrf.mxu0
  %v261 = vadd.f32 %v109, %v260
  %262 = vmatmul.f32.gmra.mxu0 %v35
  %v263 = vpop.f32.mrf.mxu0
  %v264 = vadd.f32 %v109, %v263
  %265 = vmatmul.f32.gmra.mxu0 %v36
  %v266 = vpop.f32.mrf.mxu0
  %v267 = vadd.f32 %v109, %v266
  %268 = vmatmul.f32.gmra.mxu0 %v37
  %v269 = vpop.f32.mrf.mxu0
  %v270 = vadd.f32 %v109, %v269
  %271 = vmatmul.f32.gmra.mxu0 %v38
  %v272 = vpop.f32.mrf.mxu0
  %v273 = vadd.f32 %v109, %v272
  %274 = vmatmul.f32.gmra.mxu0 %v39
  %v275 = vpop.f32.mrf.mxu0
  %v276 = vadd.f32 %v109, %v275
  %277 = vdwg.mxu0
  %278 = vst [vmem:[#allocation4] sm:$0xff] %v132
  %279 = vst [vmem:[#allocation4 + $0x8] sm:$0xff] %v173
  %280 = vst [vmem:[#allocation4 + $0x10] sm:$0xff] %v214
  %281 = vst [vmem:[#allocation4 + $0x18] sm:$0xff] %v255
  %282 = vst [vmem:[#allocation4 + $0x20] sm:$0xff] %v135
  %283 = vst [vmem:[#allocation4 + $0x28] sm:$0xff] %v176
  %284 = vst [vmem:[#allocation4 + $0x30] sm:$0xff] %v217
  %285 = vst [vmem:[#allocation4 + $0x38] sm:$0xff] %v258
  %286 = vst [vmem:[#allocation4 + $0x40] sm:$0xff] %v138
  %287 = vst [vmem:[#allocation4 + $0x48] sm:$0xff] %v179
  %288 = vst [vmem:[#allocation4 + $0x50] sm:$0xff] %v220
  %289 = vst [vmem:[#allocation4 + $0x58] sm:$0xff] %v261
  %290 = vst [vmem:[#allocation4 + $0x60] sm:$0xff] %v141
  %291 = vst [vmem:[#allocation4 + $0x68] sm:$0xff] %v182
  %292 = vst [vmem:[#allocation4 + $0x70] sm:$0xff] %v223
  %293 = vst [vmem:[#allocation4 + $0x78] sm:$0xff] %v264
  %294 = vst [vmem:[#allocation4 + $0x80] sm:$0xff] %v144
  %295 = vst [vmem:[#allocation4 + $0x88] sm:$0xff] %v185
  %296 = vst [vmem:[#allocation4 + $0x90] sm:$0xff] %v226
  %297 = vst [vmem:[#allocation4 + $0x98] sm:$0xff] %v267
  %298 = vst [vmem:[#allocation4 + $0xa0] sm:$0xff] %v147
  %299 = vst [vmem:[#allocation4 + $0xa8] sm:$0xff] %v188
  %300 = vst [vmem:[#allocation4 + $0xb0] sm:$0xff] %v229
  %301 = vst [vmem:[#allocation4 + $0xb8] sm:$0xff] %v270
  %302 = vst [vmem:[#allocation4 + $0xc0] sm:$0xff] %v150
  %303 = vst [vmem:[#allocation4 + $0xc8] sm:$0xff] %v191
  %304 = vst [vmem:[#allocation4 + $0xd0] sm:$0xff] %v232
  %305 = vst [vmem:[#allocation4 + $0xd8] sm:$0xff] %v273
  %306 = vst [vmem:[#allocation4 + $0xe0] sm:$0xff] %v153
  %307 = vst [vmem:[#allocation4 + $0xe8] sm:$0xff] %v194
  %308 = vst [vmem:[#allocation4 + $0xf0] sm:$0xff] %v235
  %309 = vst [vmem:[#allocation4 + $0xf8] sm:$0xff] %v276
  %s310 = smul.u32 0, 4
  %s311 = smul.addr %s310, 8
  %s312 = scalar_lea.vmem [#allocation4], %s311
  %v313 = vld [vmem:[%s312] sm:$0xff]
  %v314 = vld [vmem:[%s312 + $0x8] sm:$0xff]
  %v315 = vld [vmem:[%s312 + $0x10] sm:$0xff]
  %v316 = vld [vmem:[%s312 + $0x18] sm:$0xff]
  %v317 = vld [vmem:[#allocation2] sm:$0xff]
  %v318 = vld [vmem:[%s3] sm:$0xff]
  %v319 = vld [vmem:[%s3 + $0x8] sm:$0xff]
  %v320 = vld [vmem:[%s3 + $0x10] sm:$0xff]
  %v321 = vld [vmem:[%s3 + $0x18] sm:$0xff]
  %v322 = vld [vmem:[%s3 + $0x20] sm:$0xff]
  %v323 = vld [vmem:[%s3 + $0x28] sm:$0xff]
  %v324 = vld [vmem:[%s3 + $0x30] sm:$0xff]
  %v325 = vld [vmem:[%s3 + $0x38] sm:$0xff]
  %v326 = vld [vmem:[%s3 + $0x40] sm:$0xff]
  %v327 = vld [vmem:[%s3 + $0x48] sm:$0xff]
  %v328 = vld [vmem:[%s3 + $0x50] sm:$0xff]
  %v329 = vld [vmem:[%s3 + $0x58] sm:$0xff]
  %v330 = vld [vmem:[%s3 + $0x60] sm:$0xff]
  %v331 = vld [vmem:[%s3 + $0x68] sm:$0xff]
  %v332 = vld [vmem:[%s3 + $0x70] sm:$0xff]
  %v333 = vld [vmem:[%s3 + $0x78] sm:$0xff]
  %v334 = vld [vmem:[%s3 + $0x80] sm:$0xff]
  %v335 = vld [vmem:[%s3 + $0x88] sm:$0xff]
  %v336 = vld [vmem:[%s3 + $0x90] sm:$0xff]
  %v337 = vld [vmem:[%s3 + $0x98] sm:$0xff]
  %v338 = vld [vmem:[%s3 + $0xa0] sm:$0xff]
  %v339 = vld [vmem:[%s3 + $0xa8] sm:$0xff]
  %v340 = vld [vmem:[%s3 + $0xb0] sm:$0xff]
  %v341 = vld [vmem:[%s3 + $0xb8] sm:$0xff]
  %v342 = vld [vmem:[%s3 + $0xc0] sm:$0xff]
  %v343 = vld [vmem:[%s3 + $0xc8] sm:$0xff]
  %v344 = vld [vmem:[%s3 + $0xd0] sm:$0xff]
  %v345 = vld [vmem:[%s3 + $0xd8] sm:$0xff]
  %v346 = vld [vmem:[%s3 + $0xe0] sm:$0xff]
  %v347 = vld [vmem:[%s3 + $0xe8] sm:$0xff]
  %v348 = vld [vmem:[%s3 + $0xf0] sm:$0xff]
  %v349 = vld [vmem:[%s3 + $0xf8] sm:$0xff]
  %v350 = vld [vmem:[%s3 + $0x100] sm:$0xff]
  %v351 = vld [vmem:[%s3 + $0x108] sm:$0xff]
  %v352 = vld [vmem:[%s3 + $0x110] sm:$0xff]
  %v353 = vld [vmem:[%s3 + $0x118] sm:$0xff]
  %v354 = vld [vmem:[%s3 + $0x120] sm:$0xff]
  %v355 = vld [vmem:[%s3 + $0x128] sm:$0xff]
  %v356 = vld [vmem:[%s3 + $0x130] sm:$0xff]
  %v357 = vld [vmem:[%s3 + $0x138] sm:$0xff]
  %v358 = vld [vmem:[%s3 + $0x140] sm:$0xff]
  %v359 = vld [vmem:[%s3 + $0x148] sm:$0xff]
  %v360 = vld [vmem:[%s3 + $0x150] sm:$0xff]
  %v361 = vld [vmem:[%s3 + $0x158] sm:$0xff]
  %v362 = vld [vmem:[%s3 + $0x160] sm:$0xff]
  %v363 = vld [vmem:[%s3 + $0x168] sm:$0xff]
  %v364 = vld [vmem:[%s3 + $0x170] sm:$0xff]
  %v365 = vld [vmem:[%s3 + $0x178] sm:$0xff]
  %v366 = vld [vmem:[%s3 + $0x180] sm:$0xff]
  %v367 = vld [vmem:[%s3 + $0x188] sm:$0xff]
  %v368 = vld [vmem:[%s3 + $0x190] sm:$0xff]
  %v369 = vld [vmem:[%s3 + $0x198] sm:$0xff]
  %v370 = vld [vmem:[%s3 + $0x1a0] sm:$0xff]
  %v371 = vld [vmem:[%s3 + $0x1a8] sm:$0xff]
  %v372 = vld [vmem:[%s3 + $0x1b0] sm:$0xff]
  %v373 = vld [vmem:[%s3 + $0x1b8] sm:$0xff]
  %v374 = vld [vmem:[%s3 + $0x1c0] sm:$0xff]
  %v375 = vld [vmem:[%s3 + $0x1c8] sm:$0xff]
  %v376 = vld [vmem:[%s3 + $0x1d0] sm:$0xff]
  %v377 = vld [vmem:[%s3 + $0x1d8] sm:$0xff]
  %v378 = vld [vmem:[%s3 + $0x1e0] sm:$0xff]
  %v379 = vld [vmem:[%s3 + $0x1e8] sm:$0xff]
  %v380 = vld [vmem:[%s3 + $0x1f0] sm:$0xff]
  %v381 = vld [vmem:[%s3 + $0x1f8] sm:$0xff]
  %382 = vmatpush.msra.mxu0 %v378
  %383 = vmatpush.msra.mxu0 %v374
  %384 = vmatpush.msra.mxu0 %v370
  %385 = vmatpush.msra.mxu0 %v366
  %386 = vmatpush.msra.mxu0 %v362
  %387 = vmatpush.msra.mxu0 %v358
  %388 = vmatpush.msra.mxu0 %v354
  %389 = vmatpush.msra.mxu0 %v350
  %390 = vmatpush.msra.mxu0 %v346
  %391 = vmatpush.msra.mxu0 %v342
  %392 = vmatpush.msra.mxu0 %v338
  %393 = vmatpush.msra.mxu0 %v334
  %394 = vmatpush.msra.mxu0 %v330
  %395 = vmatpush.msra.mxu0 %v326
  %396 = vmatpush.msra.mxu0 %v322
  %397 = vmatpush.msra.mxu0 %v318
  %398 = vmatmul.f32.gmra.mxu0 %v317
  %v399 = vpop.f32.mrf.mxu0
  %v400 = vadd.f32 0.0, %v399
  %401 = vdwg.mxu0
  %402 = vmatpush.msra.mxu0 %v379
  %403 = vmatpush.msra.mxu0 %v375
  %404 = vmatpush.msra.mxu0 %v371
  %405 = vmatpush.msra.mxu0 %v367
  %406 = vmatpush.msra.mxu0 %v363
  %407 = vmatpush.msra.mxu0 %v359
  %408 = vmatpush.msra.mxu0 %v355
  %409 = vmatpush.msra.mxu0 %v351
  %410 = vmatpush.msra.mxu0 %v347
  %411 = vmatpush.msra.mxu0 %v343
  %412 = vmatpush.msra.mxu0 %v339
  %413 = vmatpush.msra.mxu0 %v335
  %414 = vmatpush.msra.mxu0 %v331
  %415 = vmatpush.msra.mxu0 %v327
  %416 = vmatpush.msra.mxu0 %v323
  %417 = vmatpush.msra.mxu0 %v319
  %418 = vmatmul.f32.gmra.mxu0 %v317
  %v419 = vpop.f32.mrf.mxu0
  %v420 = vadd.f32 0.0, %v419
  %421 = vdwg.mxu0
  %422 = vmatpush.msra.mxu0 %v380
  %423 = vmatpush.msra.mxu0 %v376
  %424 = vmatpush.msra.mxu0 %v372
  %425 = vmatpush.msra.mxu0 %v368
  %426 = vmatpush.msra.mxu0 %v364
  %427 = vmatpush.msra.mxu0 %v360
  %428 = vmatpush.msra.mxu0 %v356
  %429 = vmatpush.msra.mxu0 %v352
  %430 = vmatpush.msra.mxu0 %v348
  %431 = vmatpush.msra.mxu0 %v344
  %432 = vmatpush.msra.mxu0 %v340
  %433 = vmatpush.msra.mxu0 %v336
  %434 = vmatpush.msra.mxu0 %v332
  %435 = vmatpush.msra.mxu0 %v328
  %436 = vmatpush.msra.mxu0 %v324
  %437 = vmatpush.msra.mxu0 %v320
  %438 = vmatmul.f32.gmra.mxu0 %v317
  %v439 = vpop.f32.mrf.mxu0
  %v440 = vadd.f32 0.0, %v439
  %441 = vdwg.mxu0
  %442 = vmatpush.msra.mxu0 %v381
  %443 = vmatpush.msra.mxu0 %v377
  %444 = vmatpush.msra.mxu0 %v373
  %445 = vmatpush.msra.mxu0 %v369
  %446 = vmatpush.msra.mxu0 %v365
  %447 = vmatpush.msra.mxu0 %v361
  %448 = vmatpush.msra.mxu0 %v357
  %449 = vmatpush.msra.mxu0 %v353
  %450 = vmatpush.msra.mxu0 %v349
  %451 = vmatpush.msra.mxu0 %v345
  %452 = vmatpush.msra.mxu0 %v341
  %453 = vmatpush.msra.mxu0 %v337
  %454 = vmatpush.msra.mxu0 %v333
  %455 = vmatpush.msra.mxu0 %v329
  %456 = vmatpush.msra.mxu0 %v325
  %457 = vmatpush.msra.mxu0 %v321
  %458 = vmatmul.f32.gmra.mxu0 %v317
  %v459 = vpop.f32.mrf.mxu0
  %v460 = vadd.f32 0.0, %v459
  %461 = vdwg.mxu0
  %v462 = vadd.f32 %v313, %v400
  %v463 = vadd.f32 %v314, %v420
  %v464 = vadd.f32 %v315, %v440
  %v465 = vadd.f32 %v316, %v460
  %v466 = vmul.f32 %v462, 0.5
  %v467 = vtanh.pop %v466
  %v468 = vadd.f32 %v467, 1.0
  %v469 = vmul.f32 %v468, 0.5
  %v470 = vmul.f32 %v463, 0.5
  %v471 = vtanh.pop %v470
  %v472 = vadd.f32 %v471, 1.0
  %v473 = vmul.f32 %v472, 0.5
  %v474 = vtanh.pop %v464
  %v475 = vmul.f32 %v465, 0.5
  %v476 = vtanh.pop %v475
  %v477 = vadd.f32 %v476, 1.0
  %v478 = vmul.f32 %v477, 0.5
  %v479 = vld [vmem:[#allocation3] sm:$0xff]
  %v480 = vmul.f32 %v473, %v479
  %v481 = vmul.f32 %v469, %v474
  %v482 = vadd.f32 %v480, %v481
  %v483 = vtanh.pop %v482
  %v484 = vmul.f32 %v478, %v483
  %v485 = vld [vmem:[%s1] sm:$0xff]
  %vm486 = vcmp.gt.f32.partialorder %v485, 0.5
  %v487 = vsel %vm486, %v482, %v479
  %488 = vst [vmem:[#allocation3] sm:$0xff] %v487
  %v489 = vld [vmem:[#allocation2] sm:$0xff]
  %v490 = vsel %vm486, %v484, %v489
  %491 = vst [vmem:[#allocation2] sm:$0xff] %v490
  %v492 = vsel %vm486, %v484, 0.0
  %493 = vst [vmem:[#allocation5] sm:$0xff] %v492
  %s494 = smul.u32 1, 4
  %s495 = smul.addr %s494, 8
  %s496 = scalar_lea.vmem [#allocation4], %s495
  %v497 = vld [vmem:[%s496] sm:$0xff]
  %v498 = vld [vmem:[%s496 + $0x8] sm:$0xff]
  %v499 = vld [vmem:[%s496 + $0x10] sm:$0xff]
  %v500 = vld [vmem:[%s496 + $0x18] sm:$0xff]
  %v501 = vld [vmem:[#allocation2] sm:$0xff]
  %v502 = vld [vmem:[%s3] sm:$0xff]
  %v503 = vld [vmem:[%s3 + $0x8] sm:$0xff]
  %v504 = vld [vmem:[%s3 + $0x10] sm:$0xff]
  %v505 = vld [vmem:[%s3 + $0x18] sm:$0xff]
  %v506 = vld [vmem:[%s3 + $0x20] sm:$0xff]
  %v507 = vld [vmem:[%s3 + $0x28] sm:$0xff]
  %v508 = vld [vmem:[%s3 + $0x30] sm:$0xff]
  %v509 = vld [vmem:[%s3 + $0x38] sm:$0xff]
  %v510 = vld [vmem:[%s3 + $0x40] sm:$0xff]
  %v511 = vld [vmem:[%s3 + $0x48] sm:$0xff]
  %v512 = vld [vmem:[%s3 + $0x50] sm:$0xff]
  %v513 = vld [vmem:[%s3 + $0x58] sm:$0xff]
  %v514 = vld [vmem:[%s3 + $0x60] sm:$0xff]
  %v515 = vld [vmem:[%s3 + $0x68] sm:$0xff]
  %v516 = vld [vmem:[%s3 + $0x70] sm:$0xff]
  %v517 = vld [vmem:[%s3 + $0x78] sm:$0xff]
  %v518 = vld [vmem:[%s3 + $0x80] sm:$0xff]
  %v519 = vld [vmem:[%s3 + $0x88] sm:$0xff]
  %v520 = vld [vmem:[%s3 + $0x90] sm:$0xff]
  %v521 = vld [vmem:[%s3 + $0x98] sm:$0xff]
  %v522 = vld [vmem:[%s3 + $0xa0] sm:$0xff]
  %v523 = vld [vmem:[%s3 + $0xa8] sm:$0xff]
  %v524 = vld [vmem:[%s3 + $0xb0] sm:$0xff]
  %v525 = vld [vmem:[%s3 + $0xb8] sm:$0xff]
  %v526 = vld [vmem:[%s3 + $0xc0] sm:$0xff]
  %v527 = vld [vmem:[%s3 + $0xc8] sm:$0xff]
  %v528 = vld [vmem:[%s3 + $0xd0] sm:$0xff]
  %v529 = vld [vmem:[%s3 + $0xd8] sm:$0xff]
  %v530 = vld [vmem:[%s3 + $0xe0] sm:$0xff]
  %v531 = vld [vmem:[%s3 + $0xe8] sm:$0xff]
  %v532 = vld [vmem:[%s3 + $0xf0] sm:$0xff]
  %v533 = vld [vmem:[%s3 + $0xf8] sm:$0xff]
  %v534 = vld [vmem:[%s3 + $0x100] sm:$0xff]
  %v535 = vld [vmem:[%s3 + $0x108] sm:$0xff]
  %v536 = vld [vmem:[%s3 + $0x110] sm:$0xff]
  %v537 = vld [vmem:[%s3 + $0x118] sm:$0xff]
  %v538 = vld [vmem:[%s3 + $0x120] sm:$0xff]
  %v539 = vld [vmem:[%s3 + $0x128] sm:$0xff]
  %v540 = vld [vmem:[%s3 + $0x130] sm:$0xff]
  %v541 = vld [vmem:[%s3 + $0x138] sm:$0xff]
  %v542 = vld [vmem:[%s3 + $0x140] sm:$0xff]
  %v543 = vld [vmem:[%s3 + $0x148] sm:$0xff]
  %v544 = vld [vmem:[%s3 + $0x150] sm:$0xff]
  %v545 = vld [vmem:[%s3 + $0x158] sm:$0xff]
  %v546 = vld [vmem:[%s3 + $0x160] sm:$0xff]
  %v547 = vld [vmem:[%s3 + $0x168] sm:$0xff]
  %v548 = vld [vmem:[%s3 + $0x170] sm:$0xff]
  %v549 = vld [vmem:[%s3 + $0x178] sm:$0xff]
  %v550 = vld [vmem:[%s3 + $0x180] sm:$0xff]
  %v551 = vld [vmem:[%s3 + $0x188] sm:$0xff]
  %v552 = vld [vmem:[%s3 + $0x190] sm:$0xff]
  %v553 = vld [vmem:[%s3 + $0x198] sm:$0xff]
  %v554 = vld [vmem:[%s3 + $0x1a0] sm:$0xff]
  %v555 = vld [vmem:[%s3 + $0x1a8] sm:$0xff]
  %v556 = vld [vmem:[%s3 + $0x1b0] sm:$0xff]
  %v557 = vld [vmem:[%s3 + $0x1b8] sm:$0xff]
  %v558 = vld [vmem:[%s3 + $0x1c0] sm:$0xff]
  %v559 = vld [vmem:[%s3 + $0x1c8] sm:$0xff]
  %v560 = vld [vmem:[%s3 + $0x1d0] sm:$0xff]
  %v561 = vld [vmem:[%s3 + $0x1d8] sm:$0xff]
  %v562 = vld [vmem:[%s3 + $0x1e0] sm:$0xff]
  %v563 = vld [vmem:[%s3 + $0x1e8] sm:$0xff]
  %v564 = vld [vmem:[%s3 + $0x1f0] sm:$0xff]
  %v565 = vld [vmem:[%s3 + $0x1f8] sm:$0xff]
  %566 = vmatpush.msra.mxu0 %v562
  %567 = vmatpush.msra.mxu0 %v558
  %568 = vmatpush.msra.mxu0 %v554
  %569 = vmatpush.msra.mxu0 %v550
  %570 = vmatpush.msra.mxu0 %v546
  %571 = vmatpush.msra.mxu0 %v542
  %572 = vmatpush.msra.mxu0 %v538
  %573 = vmatpush.msra.mxu0 %v534
  %574 = vmatpush.msra.mxu0 %v530
  %575 = vmatpush.msra.mxu0 %v526
  %576 = vmatpush.msra.mxu0 %v522
  %577 = vmatpush.msra.mxu0 %v518
  %578 = vmatpush.msra.mxu0 %v514
  %579 = vmatpush.msra.mxu0 %v510
  %580 = vmatpush.msra.mxu0 %v506
  %581 = vmatpush.msra.mxu0 %v502
  %582 = vmatmul.f32.gmra.mxu0 %v501
  %v583 = vpop.f32.mrf.mxu0
  %v584 = vadd.f32 0.0, %v583
  %585 = vdwg.mxu0
  %586 = vmatpush.msra.mxu0 %v563
  %587 = vmatpush.msra.mxu0 %v559
  %588 = vmatpush.msra.mxu0 %v555
  %589 = vmatpush.msra.mxu0 %v551
  %590 = vmatpush.msra.mxu0 %v547
  %591 = vmatpush.msra.mxu0 %v543
  %592 = vmatpush.msra.mxu0 %v539
  %593 = vmatpush.msra.mxu0 %v535
  %594 = vmatpush.msra.mxu0 %v531
  %595 = vmatpush.msra.mxu0 %v527
  %596 = vmatpush.msra.mxu0 %v523
  %597 = vmatpush.msra.mxu0 %v519
  %598 = vmatpush.msra.mxu0 %v515
  %599 = vmatpush.msra.mxu0 %v511
  %600 = vmatpush.msra.mxu0 %v507
  %601 = vmatpush.msra.mxu0 %v503
  %602 = vmatmul.f32.gmra.mxu0 %v501
  %v603 = vpop.f32.mrf.mxu0
  %v604 = vadd.f32 0.0, %v603
  %605 = vdwg.mxu0
  %606 = vmatpush.msra.mxu0 %v564
  %607 = vmatpush.msra.mxu0 %v560
  %608 = vmatpush.msra.mxu0 %v556
  %609 = vmatpush.msra.mxu0 %v552
  %610 = vmatpush.msra.mxu0 %v548
  %611 = vmatpush.msra.mxu0 %v544
  %612 = vmatpush.msra.mxu0 %v540
  %613 = vmatpush.msra.mxu0 %v536
  %614 = vmatpush.msra.mxu0 %v532
  %615 = vmatpush.msra.mxu0 %v528
  %616 = vmatpush.msra.mxu0 %v524
  %617 = vmatpush.msra.mxu0 %v520
  %618 = vmatpush.msra.mxu0 %v516
  %619 = vmatpush.msra.mxu0 %v512
  %620 = vmatpush.msra.mxu0 %v508
  %621 = vmatpush.msra.mxu0 %v504
  %622 = vmatmul.f32.gmra.mxu0 %v501
  %v623 = vpop.f32.mrf.mxu0
  %v624 = vadd.f32 0.0, %v623
  %625 = vdwg.mxu0
  %626 = vmatpush.msra.mxu0 %v565
  %627 = vmatpush.msra.mxu0 %v561
  %628 = vmatpush.msra.mxu0 %v557
  %629 = vmatpush.msra.mxu0 %v553
  %630 = vmatpush.msra.mxu0 %v549
  %631 = vmatpush.msra.mxu0 %v545
  %632 = vmatpush.msra.mxu0 %v541
  %633 = vmatpush.msra.mxu0 %v537
  %634 = vmatpush.msra.mxu0 %v533
  %635 = vmatpush.msra.mxu0 %v529
  %636 = vmatpush.msra.mxu0 %v525
  %637 = vmatpush.msra.mxu0 %v521
  %638 = vmatpush.msra.mxu0 %v517
  %639 = vmatpush.msra.mxu0 %v513
  %640 = vmatpush.msra.mxu0 %v509
  %641 = vmatpush.msra.mxu0 %v505
  %642 = vmatmul.f32.gmra.mxu0 %v501
  %v643 = vpop.f32.mrf.mxu0
  %v644 = vadd.f32 0.0, %v643
  %645 = vdwg.mxu0
  %v646 = vadd.f32 %v497, %v584
  %v647 = vadd.f32 %v498, %v604
  %v648 = vadd.f32 %v499, %v624
  %v649 = vadd.f32 %v500, %v644
  %v650 = vmul.f32 %v646, 0.5
  %v651 = vtanh.pop %v650
  %v652 = vadd.f32 %v651, 1.0
  %v653 = vmul.f32 %v652, 0.5
  %v654 = vmul.f32 %v647, 0.5
  %v655 = vtanh.pop %v654
  %v656 = vadd.f32 %v655, 1.0
  %v657 = vmul.f32 %v656, 0.5
  %v658 = vtanh.pop %v648
  %v659 = vmul.f32 %v649, 0.5
  %v660 = vtanh.pop %v659
  %v661 = vadd.f32 %v660, 1.0
  %v662 = vmul.f32 %v661, 0.5
  %v663 = vld [vmem:[#allocation3] sm:$0xff]
  %v664 = vmul.f32 %v657, %v663
  %v665 = vmul.f32 %v653, %v658
  %v666 = vadd.f32 %v664, %v665
  %v667 = vtanh.pop %v666
  %v668 = vmul.f32 %v662, %v667
  %s669 = scalar_lea.vmem %s1, 8
  %v670 = vld [vmem:[%s669] sm:$0xff]
  %vm671 = vcmp.gt.f32.partialorder %v670, 0.5
  %v672 = vsel %vm671, %v666, %v663
  %673 = vst [vmem:[#allocation3] sm:$0xff] %v672
  %v674 = vld [vmem:[#allocation2] sm:$0xff]
  %v675 = vsel %vm671, %v668, %v674
  %676 = vst [vmem:[#allocation2] sm:$0xff] %v675
  %v677 = vsel %vm671, %v668, 0.0
  %s678 = scalar_lea.vmem [#allocation5], 8
  %679 = vst [vmem:[%s678] sm:$0xff] %v677
  %s680 = smul.u32 2, 4
  %s681 = smul.addr %s680, 8
  %s682 = scalar_lea.vmem [#allocation4], %s681
  %v683 = vld [vmem:[%s682] sm:$0xff]
  %v684 = vld [vmem:[%s682 + $0x8] sm:$0xff]
  %v685 = vld [vmem:[%s682 + $0x10] sm:$0xff]
  %v686 = vld [vmem:[%s682 + $0x18] sm:$0xff]
  %v687 = vld [vmem:[#allocation2] sm:$0xff]
  %v688 = vld [vmem:[%s3] sm:$0xff]
  %v689 = vld [vmem:[%s3 + $0x8] sm:$0xff]
  %v690 = vld [vmem:[%s3 + $0x10] sm:$0xff]
  %v691 = vld [vmem:[%s3 + $0x18] sm:$0xff]
  %v692 = vld [vmem:[%s3 + $0x20] sm:$0xff]
  %v693 = vld [vmem:[%s3 + $0x28] sm:$0xff]
  %v694 = vld [vmem:[%s3 + $0x30] sm:$0xff]
  %v695 = vld [vmem:[%s3 + $0x38] sm:$0xff]
  %v696 = vld [vmem:[%s3 + $0x40] sm:$0xff]
  %v697 = vld [vmem:[%s3 + $0x48] sm:$0xff]
  %v698 = vld [vmem:[%s3 + $0x50] sm:$0xff]
  %v699 = vld [vmem:[%s3 + $0x58] sm:$0xff]
  %v700 = vld [vmem:[%s3 + $0x60] sm:$0xff]
  %v701 = vld [vmem:[%s3 + $0x68] sm:$0xff]
  %v702 = vld [vmem:[%s3 + $0x70] sm:$0xff]
  %v703 = vld [vmem:[%s3 + $0x78] sm:$0xff]
  %v704 = vld [vmem:[%s3 + $0x80] sm:$0xff]
  %v705 = vld [vmem:[%s3 + $0x88] sm:$0xff]
  %v706 = vld [vmem:[%s3 + $0x90] sm:$0xff]
  %v707 = vld [vmem:[%s3 + $0x98] sm:$0xff]
  %v708 = vld [vmem:[%s3 + $0xa0] sm:$0xff]
  %v709 = vld [vmem:[%s3 + $0xa8] sm:$0xff]
  %v710 = vld [vmem:[%s3 + $0xb0] sm:$0xff]
  %v711 = vld [vmem:[%s3 + $0xb8] sm:$0xff]
  %v712 = vld [vmem:[%s3 + $0xc0] sm:$0xff]
  %v713 = vld [vmem:[%s3 + $0xc8] sm:$0xff]
  %v714 = vld [vmem:[%s3 + $0xd0] sm:$0xff]
  %v715 = vld [vmem:[%s3 + $0xd8] sm:$0xff]
  %v716 = vld [vmem:[%s3 + $0xe0] sm:$0xff]
  %v717 = vld [vmem:[%s3 + $0xe8] sm:$0xff]
  %v718 = vld [vmem:[%s3 + $0xf0] sm:$0xff]
  %v719 = vld [vmem:[%s3 + $0xf8] sm:$0xff]
  %v720 = vld [vmem:[%s3 + $0x100] sm:$0xff]
  %v721 = vld [vmem:[%s3 + $0x108] sm:$0xff]
  %v722 = vld [vmem:[%s3 + $0x110] sm:$0xff]
  %v723 = vld [vmem:[%s3 + $0x118] sm:$0xff]
  %v724 = vld [vmem:[%s3 + $0x120] sm:$0xff]
  %v725 = vld [vmem:[%s3 + $0x128] sm:$0xff]
  %v726 = vld [vmem:[%s3 + $0x130] sm:$0xff]
  %v727 = vld [vmem:[%s3 + $0x138] sm:$0xff]
  %v728 = vld [vmem:[%s3 + $0x140] sm:$0xff]
  %v729 = vld [vmem:[%s3 + $0x148] sm:$0xff]
  %v730 = vld [vmem:[%s3 + $0x150] sm:$0xff]
  %v731 = vld [vmem:[%s3 + $0x158] sm:$0xff]
  %v732 = vld [vmem:[%s3 + $0x160] sm:$0xff]
  %v733 = vld [vmem:[%s3 + $0x168] sm:$0xff]
  %v734 = vld [vmem:[%s3 + $0x170] sm:$0xff]
  %v735 = vld [vmem:[%s3 + $0x178] sm:$0xff]
  %v736 = vld [vmem:[%s3 + $0x180] sm:$0xff]
  %v737 = vld [vmem:[%s3 + $0x188] sm:$0xff]
  %v738 = vld [vmem:[%s3 + $0x190] sm:$0xff]
  %v739 = vld [vmem:[%s3 + $0x198] sm:$0xff]
  %v740 = vld [vmem:[%s3 + $0x1a0] sm:$0xff]
  %v741 = vld [vmem:[%s3 + $0x1a8] sm:$0xff]
  %v742 = vld [vmem:[%s3 + $0x1b0] sm:$0xff]
  %v743 = vld [vmem:[%s3 + $0x1b8] sm:$0xff]
  %v744 = vld [vmem:[%s3 + $0x1c0] sm:$0xff]
  %v745 = vld [vmem:[%s3 + $0x1c8] sm:$0xff]
  %v746 = vld [vmem:[%s3 + $0x1d0] sm:$0xff]
  %v747 = vld [vmem:[%s3 + $0x1d8] sm:$0xff]
  %v748 = vld [vmem:[%s3 + $0x1e0] sm:$0xff]
  %v749 = vld [vmem:[%s3 + $0x1e8] sm:$0xff]
  %v750 = vld [vmem:[%s3 + $0x1f0] sm:$0xff]
  %v751 = vld [vmem:[%s3 + $0x1f8] sm:$0xff]
  %752 = vmatpush.msra.mxu0 %v748
  %753 = vmatpush.msra.mxu0 %v744
  %754 = vmatpush.msra.mxu0 %v740
  %755 = vmatpush.msra.mxu0 %v736
  %756 = vmatpush.msra.mxu0 %v732
  %757 = vmatpush.msra.mxu0 %v728
  %758 = vmatpush.msra.mxu0 %v724
  %759 = vmatpush.msra.mxu0 %v720
  %760 = vmatpush.msra.mxu0 %v716
  %761 = vmatpush.msra.mxu0 %v712
  %762 = vmatpush.msra.mxu0 %v708
  %763 = vmatpush.msra.mxu0 %v704
  %764 = vmatpush.msra.mxu0 %v700
  %765 = vmatpush.msra.mxu0 %v696
  %766 = vmatpush.msra.mxu0 %v692
  %767 = vmatpush.msra.mxu0 %v688
  %768 = vmatmul.f32.gmra.mxu0 %v687
  %v769 = vpop.f32.mrf.mxu0
  %v770 = vadd.f32 0.0, %v769
  %771 = vdwg.mxu0
  %772 = vmatpush.msra.mxu0 %v749
  %773 = vmatpush.msra.mxu0 %v745
  %774 = vmatpush.msra.mxu0 %v741
  %775 = vmatpush.msra.mxu0 %v737
  %776 = vmatpush.msra.mxu0 %v733
  %777 = vmatpush.msra.mxu0 %v729
  %778 = vmatpush.msra.mxu0 %v725
  %779 = vmatpush.msra.mxu0 %v721
  %780 = vmatpush.msra.mxu0 %v717
  %781 = vmatpush.msra.mxu0 %v713
  %782 = vmatpush.msra.mxu0 %v709
  %783 = vmatpush.msra.mxu0 %v705
  %784 = vmatpush.msra.mxu0 %v701
  %785 = vmatpush.msra.mxu0 %v697
  %786 = vmatpush.msra.mxu0 %v693
  %787 = vmatpush.msra.mxu0 %v689
  %788 = vmatmul.f32.gmra.mxu0 %v687
  %v789 = vpop.f32.mrf.mxu0
  %v790 = vadd.f32 0.0, %v789
  %791 = vdwg.mxu0
  %792 = vmatpush.msra.mxu0 %v750
  %793 = vmatpush.msra.mxu0 %v746
  %794 = vmatpush.msra.mxu0 %v742
  %795 = vmatpush.msra.mxu0 %v738
  %796 = vmatpush.msra.mxu0 %v734
  %797 = vmatpush.msra.mxu0 %v730
  %798 = vmatpush.msra.mxu0 %v726
  %799 = vmatpush.msra.mxu0 %v722
  %800 = vmatpush.msra.mxu0 %v718
  %801 = vmatpush.msra.mxu0 %v714
  %802 = vmatpush.msra.mxu0 %v710
  %803 = vmatpush.msra.mxu0 %v706
  %804 = vmatpush.msra.mxu0 %v702
  %805 = vmatpush.msra.mxu0 %v698
  %806 = vmatpush.msra.mxu0 %v694
  %807 = vmatpush.msra.mxu0 %v690
  %808 = vmatmul.f32.gmra.mxu0 %v687
  %v809 = vpop.f32.mrf.mxu0
  %v810 = vadd.f32 0.0, %v809
  %811 = vdwg.mxu0
  %812 = vmatpush.msra.mxu0 %v751
  %813 = vmatpush.msra.mxu0 %v747
  %814 = vmatpush.msra.mxu0 %v743
  %815 = vmatpush.msra.mxu0 %v739
  %816 = vmatpush.msra.mxu0 %v735
  %817 = vmatpush.msra.mxu0 %v731
  %818 = vmatpush.msra.mxu0 %v727
  %819 = vmatpush.msra.mxu0 %v723
  %820 = vmatpush.msra.mxu0 %v719
  %821 = vmatpush.msra.mxu0 %v715
  %822 = vmatpush.msra.mxu0 %v711
  %823 = vmatpush.msra.mxu0 %v707
  %824 = vmatpush.msra.mxu0 %v703
  %825 = vmatpush.msra.mxu0 %v699
  %826 = vmatpush.msra.mxu0 %v695
  %827 = vmatpush.msra.mxu0 %v691
  %828 = vmatmul.f32.gmra.mxu0 %v687
  %v829 = vpop.f32.mrf.mxu0
  %v830 = vadd.f32 0.0, %v829
  %831 = vdwg.mxu0
  %v832 = vadd.f32 %v683, %v770
  %v833 = vadd.f32 %v684, %v790
  %v834 = vadd.f32 %v685, %v810
  %v835 = vadd.f32 %v686, %v830
  %v836 = vmul.f32 %v832, 0.5
  %v837 = vtanh.pop %v836
  %v838 = vadd.f32 %v837, 1.0
  %v839 = vmul.f32 %v838, 0.5
  %v840 = vmul.f32 %v833, 0.5
  %v841 = vtanh.pop %v840
  %v842 = vadd.f32 %v841, 1.0
  %v843 = vmul.f32 %v842, 0.5
  %v844 = vtanh.pop %v834
  %v845 = vmul.f32 %v835, 0.5
  %v846 = vtanh.pop %v845
  %v847 = vadd.f32 %v846, 1.0
  %v848 = vmul.f32 %v847, 0.5
  %v849 = vld [vmem:[#allocation3] sm:$0xff]
  %v850 = vmul.f32 %v843, %v849
  %v851 = vmul.f32 %v839, %v844
  %v852 = vadd.f32 %v850, %v851
  %v853 = vtanh.pop %v852
  %v854 = vmul.f32 %v848, %v853
  %s855 = scalar_lea.vmem %s1, 16
  %v856 = vld [vmem:[%s855] sm:$0xff]
  %vm857 = vcmp.gt.f32.partialorder %v856, 0.5
  %v858 = vsel %vm857, %v852, %v849
  %859 = vst [vmem:[#allocation3] sm:$0xff] %v858
  %v860 = vld [vmem:[#allocation2] sm:$0xff]
  %v861 = vsel %vm857, %v854, %v860
  %862 = vst [vmem:[#allocation2] sm:$0xff] %v861
  %v863 = vsel %vm857, %v854, 0.0
  %s864 = scalar_lea.vmem [#allocation5], 16
  %865 = vst [vmem:[%s864] sm:$0xff] %v863
  %s866 = smul.u32 3, 4
  %s867 = smul.addr %s866, 8
  %s868 = scalar_lea.vmem [#allocation4], %s867
  %v869 = vld [vmem:[%s868] sm:$0xff]
  %v870 = vld [vmem:[%s868 + $0x8] sm:$0xff]
  %v871 = vld [vmem:[%s868 + $0x10] sm:$0xff]
  %v872 = vld [vmem:[%s868 + $0x18] sm:$0xff]
  %v873 = vld [vmem:[#allocation2] sm:$0xff]
  %v874 = vld [vmem:[%s3] sm:$0xff]
  %v875 = vld [vmem:[%s3 + $0x8] sm:$0xff]
  %v876 = vld [vmem:[%s3 + $0x10] sm:$0xff]
  %v877 = vld [vmem:[%s3 + $0x18] sm:$0xff]
  %v878 = vld [vmem:[%s3 + $0x20] sm:$0xff]
  %v879 = vld [vmem:[%s3 + $0x28] sm:$0xff]
  %v880 = vld [vmem:[%s3 + $0x30] sm:$0xff]
  %v881 = vld [vmem:[%s3 + $0x38] sm:$0xff]
  %v882 = vld [vmem:[%s3 + $0x40] sm:$0xff]
  %v883 = vld [vmem:[%s3 + $0x48] sm:$0xff]
  %v884 = vld [vmem:[%s3 + $0x50] sm:$0xff]
  %v885 = vld [vmem:[%s3 + $0x58] sm:$0xff]
  %v886 = vld [vmem:[%s3 + $0x60] sm:$0xff]
  %v887 = vld [vmem:[%s3 + $0x68] sm:$0xff]
  %v888 = vld [vmem:[%s3 + $0x70] sm:$0xff]
  %v889 = vld [vmem:[%s3 + $0x78] sm:$0xff]
  %v890 = vld [vmem:[%s3 + $0x80] sm:$0xff]
  %v891 = vld [vmem:[%s3 + $0x88] sm:$0xff]
  %v892 = vld [vmem:[%s3 + $0x90] sm:$0xff]
  %v893 = vld [vmem:[%s3 + $0x98] sm:$0xff]
  %v894 = vld [vmem:[%s3 + $0xa0] sm:$0xff]
  %v895 = vld [vmem:[%s3 + $0xa8] sm:$0xff]
  %v896 = vld [vmem:[%s3 + $0xb0] sm:$0xff]
  %v897 = vld [vmem:[%s3 + $0xb8] sm:$0xff]
  %v898 = vld [vmem:[%s3 + $0xc0] sm:$0xff]
  %v899 = vld [vmem:[%s3 + $0xc8] sm:$0xff]
  %v900 = vld [vmem:[%s3 + $0xd0] sm:$0xff]
  %v901 = vld [vmem:[%s3 + $0xd8] sm:$0xff]
  %v902 = vld [vmem:[%s3 + $0xe0] sm:$0xff]
  %v903 = vld [vmem:[%s3 + $0xe8] sm:$0xff]
  %v904 = vld [vmem:[%s3 + $0xf0] sm:$0xff]
  %v905 = vld [vmem:[%s3 + $0xf8] sm:$0xff]
  %v906 = vld [vmem:[%s3 + $0x100] sm:$0xff]
  %v907 = vld [vmem:[%s3 + $0x108] sm:$0xff]
  %v908 = vld [vmem:[%s3 + $0x110] sm:$0xff]
  %v909 = vld [vmem:[%s3 + $0x118] sm:$0xff]
  %v910 = vld [vmem:[%s3 + $0x120] sm:$0xff]
  %v911 = vld [vmem:[%s3 + $0x128] sm:$0xff]
  %v912 = vld [vmem:[%s3 + $0x130] sm:$0xff]
  %v913 = vld [vmem:[%s3 + $0x138] sm:$0xff]
  %v914 = vld [vmem:[%s3 + $0x140] sm:$0xff]
  %v915 = vld [vmem:[%s3 + $0x148] sm:$0xff]
  %v916 = vld [vmem:[%s3 + $0x150] sm:$0xff]
  %v917 = vld [vmem:[%s3 + $0x158] sm:$0xff]
  %v918 = vld [vmem:[%s3 + $0x160] sm:$0xff]
  %v919 = vld [vmem:[%s3 + $0x168] sm:$0xff]
  %v920 = vld [vmem:[%s3 + $0x170] sm:$0xff]
  %v921 = vld [vmem:[%s3 + $0x178] sm:$0xff]
  %v922 = vld [vmem:[%s3 + $0x180] sm:$0xff]
  %v923 = vld [vmem:[%s3 + $0x188] sm:$0xff]
  %v924 = vld [vmem:[%s3 + $0x190] sm:$0xff]
  %v925 = vld [vmem:[%s3 + $0x198] sm:$0xff]
  %v926 = vld [vmem:[%s3 + $0x1a0] sm:$0xff]
  %v927 = vld [vmem:[%s3 + $0x1a8] sm:$0xff]
  %v928 = vld [vmem:[%s3 + $0x1b0] sm:$0xff]
  %v929 = vld [vmem:[%s3 + $0x1b8] sm:$0xff]
  %v930 = vld [vmem:[%s3 + $0x1c0] sm:$0xff]
  %v931 = vld [vmem:[%s3 + $0x1c8] sm:$0xff]
  %v932 = vld [vmem:[%s3 + $0x1d0] sm:$0xff]
  %v933 = vld [vmem:[%s3 + $0x1d8] sm:$0xff]
  %v934 = vld [vmem:[%s3 + $0x1e0] sm:$0xff]
  %v935 = vld [vmem:[%s3 + $0x1e8] sm:$0xff]
  %v936 = vld [vmem:[%s3 + $0x1f0] sm:$0xff]
  %v937 = vld [vmem:[%s3 + $0x1f8] sm:$0xff]
  %938 = vmatpush.msra.mxu0 %v934
  %939 = vmatpush.msra.mxu0 %v930
  %940 = vmatpush.msra.mxu0 %v926
  %941 = vmatpush.msra.mxu0 %v922
  %942 = vmatpush.msra.mxu0 %v918
  %943 = vmatpush.msra.mxu0 %v914
  %944 = vmatpush.msra.mxu0 %v910
  %945 = vmatpush.msra.mxu0 %v906
  %946 = vmatpush.msra.mxu0 %v902
  %947 = vmatpush.msra.mxu0 %v898
  %948 = vmatpush.msra.mxu0 %v894
  %949 = vmatpush.msra.mxu0 %v890
  %950 = vmatpush.msra.mxu0 %v886
  %951 = vmatpush.msra.mxu0 %v882
  %952 = vmatpush.msra.mxu0 %v878
  %953 = vmatpush.msra.mxu0 %v874
  %954 = vmatmul.f32.gmra.mxu0 %v873
  %v955 = vpop.f32.mrf.mxu0
  %v956 = vadd.f32 0.0, %v955
  %957 = vdwg.mxu0
  %958 = vmatpush.msra.mxu0 %v935
  %959 = vmatpush.msra.mxu0 %v931
  %960 = vmatpush.msra.mxu0 %v927
  %961 = vmatpush.msra.mxu0 %v923
  %962 = vmatpush.msra.mxu0 %v919
  %963 = vmatpush.msra.mxu0 %v915
  %964 = vmatpush.msra.mxu0 %v911
  %965 = vmatpush.msra.mxu0 %v907
  %966 = vmatpush.msra.mxu0 %v903
  %967 = vmatpush.msra.mxu0 %v899
  %968 = vmatpush.msra.mxu0 %v895
  %969 = vmatpush.msra.mxu0 %v891
  %970 = vmatpush.msra.mxu0 %v887
  %971 = vmatpush.msra.mxu0 %v883
  %972 = vmatpush.msra.mxu0 %v879
  %973 = vmatpush.msra.mxu0 %v875
  %974 = vmatmul.f32.gmra.mxu0 %v873
  %v975 = vpop.f32.mrf.mxu0
  %v976 = vadd.f32 0.0, %v975
  %977 = vdwg.mxu0
  %978 = vmatpush.msra.mxu0 %v936
  %979 = vmatpush.msra.mxu0 %v932
  %980 = vmatpush.msra.mxu0 %v928
  %981 = vmatpush.msra.mxu0 %v924
  %982 = vmatpush.msra.mxu0 %v920
  %983 = vmatpush.msra.mxu0 %v916
  %984 = vmatpush.msra.mxu0 %v912
  %985 = vmatpush.msra.mxu0 %v908
  %986 = vmatpush.msra.mxu0 %v904
  %987 = vmatpush.msra.mxu0 %v900
  %988 = vmatpush.msra.mxu0 %v896
  %989 = vmatpush.msra.mxu0 %v892
  %990 = vmatpush.msra.mxu0 %v888
  %991 = vmatpush.msra.mxu0 %v884
  %992 = vmatpush.msra.mxu0 %v880
  %993 = vmatpush.msra.mxu0 %v876
  %994 = vmatmul.f32.gmra.mxu0 %v873
  %v995 = vpop.f32.mrf.mxu0
  %v996 = vadd.f32 0.0, %v995
  %997 = vdwg.mxu0
  %998 = vmatpush.msra.mxu0 %v937
  %999 = vmatpush.msra.mxu0 %v933
  %1000 = vmatpush.msra.mxu0 %v929
  %1001 = vmatpush.msra.mxu0 %v925
  %1002 = vmatpush.msra.mxu0 %v921
  %1003 = vmatpush.msra.mxu0 %v917
  %1004 = vmatpush.msra.mxu0 %v913
  %1005 = vmatpush.msra.mxu0 %v909
  %1006 = vmatpush.msra.mxu0 %v905
  %1007 = vmatpush.msra.mxu0 %v901
  %1008 = vmatpush.msra.mxu0 %v897
  %1009 = vmatpush.msra.mxu0 %v893
  %1010 = vmatpush.msra.mxu0 %v889
  %1011 = vmatpush.msra.mxu0 %v885
  %1012 = vmatpush.msra.mxu0 %v881
  %1013 = vmatpush.msra.mxu0 %v877
  %1014 = vmatmul.f32.gmra.mxu0 %v873
  %v1015 = vpop.f32.mrf.mxu0
  %v1016 = vadd.f32 0.0, %v1015
  %1017 = vdwg.mxu0
  %v1018 = vadd.f32 %v869, %v956
  %v1019 = vadd.f32 %v870, %v976
  %v1020 = vadd.f32 %v871, %v996
  %v1021 = vadd.f32 %v872, %v1016
  %v1022 = vmul.f32 %v1018, 0.5
  %v1023 = vtanh.pop %v1022
  %v1024 = vadd.f32 %v1023, 1.0
  %v1025 = vmul.f32 %v1024, 0.5
  %v1026 = vmul.f32 %v1019, 0.5
  %v1027 = vtanh.pop %v1026
  %v1028 = vadd.f32 %v1027, 1.0
  %v1029 = vmul.f32 %v1028, 0.5
  %v1030 = vtanh.pop %v1020
  %v1031 = vmul.f32 %v1021, 0.5
  %v1032 = vtanh.pop %v1031
  %v1033 = vadd.f32 %v1032, 1.0
  %v1034 = vmul.f32 %v1033, 0.5
  %v1035 = vld [vmem:[#allocation3] sm:$0xff]
  %v1036 = vmul.f32 %v1029, %v1035
  %v1037 = vmul.f32 %v1025, %v1030
  %v1038 = vadd.f32 %v1036, %v1037
  %v1039 = vtanh.pop %v1038
  %v1040 = vmul.f32 %v1034, %v1039
  %s1041 = scalar_lea.vmem %s1, 24
  %v1042 = vld [vmem:[%s1041] sm:$0xff]
  %vm1043 = vcmp.gt.f32.partialorder %v1042, 0.5
  %v1044 = vsel %vm1043, %v1038, %v1035
  %1045 = vst [vmem:[#allocation3] sm:$0xff] %v1044
  %v1046 = vld [vmem:[#allocation2] sm:$0xff]
  %v1047 = vsel %vm1043, %v1040, %v1046
  %1048 = vst [vmem:[#allocation2] sm:$0xff] %v1047
  %v1049 = vsel %vm1043, %v1040, 0.0
  %s1050 = scalar_lea.vmem [#allocation5], 24
  %1051 = vst [vmem:[%s1050] sm:$0xff] %v1049
  %s1052 = smul.u32 4, 4
  %s1053 = smul.addr %s1052, 8
  %s1054 = scalar_lea.vmem [#allocation4], %s1053
  %v1055 = vld [vmem:[%s1054] sm:$0xff]
  %v1056 = vld [vmem:[%s1054 + $0x8] sm:$0xff]
  %v1057 = vld [vmem:[%s1054 + $0x10] sm:$0xff]
  %v1058 = vld [vmem:[%s1054 + $0x18] sm:$0xff]
  %v1059 = vld [vmem:[#allocation2] sm:$0xff]
  %v1060 = vld [vmem:[%s3] sm:$0xff]
  %v1061 = vld [vmem:[%s3 + $0x8] sm:$0xff]
  %v1062 = vld [vmem:[%s3 + $0x10] sm:$0xff]
  %v1063 = vld [vmem:[%s3 + $0x18] sm:$0xff]
  %v1064 = vld [vmem:[%s3 + $0x20] sm:$0xff]
  %v1065 = vld [vmem:[%s3 + $0x28] sm:$0xff]
  %v1066 = vld [vmem:[%s3 + $0x30] sm:$0xff]
  %v1067 = vld [vmem:[%s3 + $0x38] sm:$0xff]
  %v1068 = vld [vmem:[%s3 + $0x40] sm:$0xff]
  %v1069 = vld [vmem:[%s3 + $0x48] sm:$0xff]
  %v1070 = vld [vmem:[%s3 + $0x50] sm:$0xff]
  %v1071 = vld [vmem:[%s3 + $0x58] sm:$0xff]
  %v1072 = vld [vmem:[%s3 + $0x60] sm:$0xff]
  %v1073 = vld [vmem:[%s3 + $0x68] sm:$0xff]
  %v1074 = vld [vmem:[%s3 + $0x70] sm:$0xff]
  %v1075 = vld [vmem:[%s3 + $0x78] sm:$0xff]
  %v1076 = vld [vmem:[%s3 + $0x80] sm:$0xff]
  %v1077 = vld [vmem:[%s3 + $0x88] sm:$0xff]
  %v1078 = vld [vmem:[%s3 + $0x90] sm:$0xff]
  %v1079 = vld [vmem:[%s3 + $0x98] sm:$0xff]
  %v1080 = vld [vmem:[%s3 + $0xa0] sm:$0xff]
  %v1081 = vld [vmem:[%s3 + $0xa8] sm:$0xff]
  %v1082 = vld [vmem:[%s3 + $0xb0] sm:$0xff]
  %v1083 = vld [vmem:[%s3 + $0xb8] sm:$0xff]
  %v1084 = vld [vmem:[%s3 + $0xc0] sm:$0xff]
  %v1085 = vld [vmem:[%s3 + $0xc8] sm:$0xff]
  %v1086 = vld [vmem:[%s3 + $0xd0] sm:$0xff]
  %v1087 = vld [vmem:[%s3 + $0xd8] sm:$0xff]
  %v1088 = vld [vmem:[%s3 + $0xe0] sm:$0xff]
  %v1089 = vld [vmem:[%s3 + $0xe8] sm:$0xff]
  %v1090 = vld [vmem:[%s3 + $0xf0] sm:$0xff]
  %v1091 = vld [vmem:[%s3 + $0xf8] sm:$0xff]
  %v1092 = vld [vmem:[%s3 + $0x100] sm:$0xff]
  %v1093 = vld [vmem:[%s3 + $0x108] sm:$0xff]
  %v1094 = vld [vmem:[%s3 + $0x110] sm:$0xff]
  %v1095 = vld [vmem:[%s3 + $0x118] sm:$0xff]
  %v1096 = vld [vmem:[%s3 + $0x120] sm:$0xff]
  %v1097 = vld [vmem:[%s3 + $0x128] sm:$0xff]
  %v1098 = vld [vmem:[%s3 + $0x130] sm:$0xff]
  %v1099 = vld [vmem:[%s3 + $0x138] sm:$0xff]
  %v1100 = vld [vmem:[%s3 + $0x140] sm:$0xff]
  %v1101 = vld [vmem:[%s3 + $0x148] sm:$0xff]
  %v1102 = vld [vmem:[%s3 + $0x150] sm:$0xff]
  %v1103 = vld [vmem:[%s3 + $0x158] sm:$0xff]
  %v1104 = vld [vmem:[%s3 + $0x160] sm:$0xff]
  %v1105 = vld [vmem:[%s3 + $0x168] sm:$0xff]
  %v1106 = vld [vmem:[%s3 + $0x170] sm:$0xff]
  %v1107 = vld [vmem:[%s3 + $0x178] sm:$0xff]
  %v1108 = vld [vmem:[%s3 + $0x180] sm:$0xff]
  %v1109 = vld [vmem:[%s3 + $0x188] sm:$0xff]
  %v1110 = vld [vmem:[%s3 + $0x190] sm:$0xff]
  %v1111 = vld [vmem:[%s3 + $0x198] sm:$0xff]
  %v1112 = vld [vmem:[%s3 + $0x1a0] sm:$0xff]
  %v1113 = vld [vmem:[%s3 + $0x1a8] sm:$0xff]
  %v1114 = vld [vmem:[%s3 + $0x1b0] sm:$0xff]
  %v1115 = vld [vmem:[%s3 + $0x1b8] sm:$0xff]
  %v1116 = vld [vmem:[%s3 + $0x1c0] sm:$0xff]
  %v1117 = vld [vmem:[%s3 + $0x1c8] sm:$0xff]
  %v1118 = vld [vmem:[%s3 + $0x1d0] sm:$0xff]
  %v1119 = vld [vmem:[%s3 + $0x1d8] sm:$0xff]
  %v1120 = vld [vmem:[%s3 + $0x1e0] sm:$0xff]
  %v1121 = vld [vmem:[%s3 + $0x1e8] sm:$0xff]
  %v1122 = vld [vmem:[%s3 + $0x1f0] sm:$0xff]
  %v1123 = vld [vmem:[%s3 + $0x1f8] sm:$0xff]
  %1124 = vmatpush.msra.mxu0 %v1120
  %1125 = vmatpush.msra.mxu0 %v1116
  %1126 = vmatpush.msra.mxu0 %v1112
  %1127 = vmatpush.msra.mxu0 %v1108
  %1128 = vmatpush.msra.mxu0 %v1104
  %1129 = vmatpush.msra.mxu0 %v1100
  %1130 = vmatpush.msra.mxu0 %v1096
  %1131 = vmatpush.msra.mxu0 %v1092
  %1132 = vmatpush.msra.mxu0 %v1088
  %1133 = vmatpush.msra.mxu0 %v1084
  %1134 = vmatpush.msra.mxu0 %v1080
  %1135 = vmatpush.msra.mxu0 %v1076
  %1136 = vmatpush.msra.mxu0 %v1072
  %1137 = vmatpush.msra.mxu0 %v1068
  %1138 = vmatpush.msra.mxu0 %v1064
  %1139 = vmatpush.msra.mxu0 %v1060
  %1140 = vmatmul.f32.gmra.mxu0 %v1059
  %v1141 = vpop.f32.mrf.mxu0
  %v1142 = vadd.f32 0.0, %v1141
  %1143 = vdwg.mxu0
  %1144 = vmatpush.msra.mxu0 %v1121
  %1145 = vmatpush.msra.mxu0 %v1117
  %1146 = vmatpush.msra.mxu0 %v1113
  %1147 = vmatpush.msra.mxu0 %v1109
  %1148 = vmatpush.msra.mxu0 %v1105
  %1149 = vmatpush.msra.mxu0 %v1101
  %1150 = vmatpush.msra.mxu0 %v1097
  %1151 = vmatpush.msra.mxu0 %v1093
  %1152 = vmatpush.msra.mxu0 %v1089
  %1153 = vmatpush.msra.mxu0 %v1085
  %1154 = vmatpush.msra.mxu0 %v1081
  %1155 = vmatpush.msra.mxu0 %v1077
  %1156 = vmatpush.msra.mxu0 %v1073
  %1157 = vmatpush.msra.mxu0 %v1069
  %1158 = vmatpush.msra.mxu0 %v1065
  %1159 = vmatpush.msra.mxu0 %v1061
  %1160 = vmatmul.f32.gmra.mxu0 %v1059
  %v1161 = vpop.f32.mrf.mxu0
  %v1162 = vadd.f32 0.0, %v1161
  %1163 = vdwg.mxu0
  %1164 = vmatpush.msra.mxu0 %v1122
  %1165 = vmatpush.msra.mxu0 %v1118
  %1166 = vmatpush.msra.mxu0 %v1114
  %1167 = vmatpush.msra.mxu0 %v1110
  %1168 = vmatpush.msra.mxu0 %v1106
  %1169 = vmatpush.msra.mxu0 %v1102
  %1170 = vmatpush.msra.mxu0 %v1098
  %1171 = vmatpush.msra.mxu0 %v1094
  %1172 = vmatpush.msra.mxu0 %v1090
  %1173 = vmatpush.msra.mxu0 %v1086
  %1174 = vmatpush.msra.mxu0 %v1082
  %1175 = vmatpush.msra.mxu0 %v1078
  %1176 = vmatpush.msra.mxu0 %v1074
  %1177 = vmatpush.msra.mxu0 %v1070
  %1178 = vmatpush.msra.mxu0 %v1066
  %1179 = vmatpush.msra.mxu0 %v1062
  %1180 = vmatmul.f32.gmra.mxu0 %v1059
  %v1181 = vpop.f32.mrf.mxu0
  %v1182 = vadd.f32 0.0, %v1181
  %1183 = vdwg.mxu0
  %1184 = vmatpush.msra.mxu0 %v1123
  %1185 = vmatpush.msra.mxu0 %v1119
  %1186 = vmatpush.msra.mxu0 %v1115
  %1187 = vmatpush.msra.mxu0 %v1111
  %1188 = vmatpush.msra.mxu0 %v1107
  %1189 = vmatpush.msra.mxu0 %v1103
  %1190 = vmatpush.msra.mxu0 %v1099
  %1191 = vmatpush.msra.mxu0 %v1095
  %1192 = vmatpush.msra.mxu0 %v1091
  %1193 = vmatpush.msra.mxu0 %v1087
  %1194 = vmatpush.msra.mxu0 %v1083
  %1195 = vmatpush.msra.mxu0 %v1079
  %1196 = vmatpush.msra.mxu0 %v1075
  %1197 = vmatpush.msra.mxu0 %v1071
  %1198 = vmatpush.msra.mxu0 %v1067
  %1199 = vmatpush.msra.mxu0 %v1063
  %1200 = vmatmul.f32.gmra.mxu0 %v1059
  %v1201 = vpop.f32.mrf.mxu0
  %v1202 = vadd.f32 0.0, %v1201
  %1203 = vdwg.mxu0
  %v1204 = vadd.f32 %v1055, %v1142
  %v1205 = vadd.f32 %v1056, %v1162
  %v1206 = vadd.f32 %v1057, %v1182
  %v1207 = vadd.f32 %v1058, %v1202
  %v1208 = vmul.f32 %v1204, 0.5
  %v1209 = vtanh.pop %v1208
  %v1210 = vadd.f32 %v1209, 1.0
  %v1211 = vmul.f32 %v1210, 0.5
  %v1212 = vmul.f32 %v1205, 0.5
  %v1213 = vtanh.pop %v1212
  %v1214 = vadd.f32 %v1213, 1.0
  %v1215 = vmul.f32 %v1214, 0.5
  %v1216 = vtanh.pop %v1206
  %v1217 = vmul.f32 %v1207, 0.5
  %v1218 = vtanh.pop %v1217
  %v1219 = vadd.f32 %v1218, 1.0
  %v1220 = vmul.f32 %v1219, 0.5
  %v1221 = vld [vmem:[#allocation3] sm:$0xff]
  %v1222 = vmul.f32 %v1215, %v1221
  %v1223 = vmul.f32 %v1211, %v1216
  %v1224 = vadd.f32 %v1222, %v1223
  %v1225 = vtanh.pop %v1224
  %v1226 = vmul.f32 %v1220, %v1225
  %s1227 = scalar_lea.vmem %s1, 32
  %v1228 = vld [vmem:[%s1227] sm:$0xff]
  %vm1229 = vcmp.gt.f32.partialorder %v1228, 0.5
  %v1230 = vsel %vm1229, %v1224, %v1221
  %1231 = vst [vmem:[#allocation3] sm:$0xff] %v1230
  %v1232 = vld [vmem:[#allocation2] sm:$0xff]
  %v1233 = vsel %vm1229, %v1226, %v1232
  %1234 = vst [vmem:[#allocation2] sm:$0xff] %v1233
  %v1235 = vsel %vm1229, %v1226, 0.0
  %s1236 = scalar_lea.vmem [#allocation5], 32
  %1237 = vst [vmem:[%s1236] sm:$0xff] %v1235
  %s1238 = smul.u32 5, 4
  %s1239 = smul.addr %s1238, 8
  %s1240 = scalar_lea.vmem [#allocation4], %s1239
  %v1241 = vld [vmem:[%s1240] sm:$0xff]
  %v1242 = vld [vmem:[%s1240 + $0x8] sm:$0xff]
  %v1243 = vld [vmem:[%s1240 + $0x10] sm:$0xff]
  %v1244 = vld [vmem:[%s1240 + $0x18] sm:$0xff]
  %v1245 = vld [vmem:[#allocation2] sm:$0xff]
  %v1246 = vld [vmem:[%s3] sm:$0xff]
  %v1247 = vld [vmem:[%s3 + $0x8] sm:$0xff]
  %v1248 = vld [vmem:[%s3 + $0x10] sm:$0xff]
  %v1249 = vld [vmem:[%s3 + $0x18] sm:$0xff]
  %v1250 = vld [vmem:[%s3 + $0x20] sm:$0xff]
  %v1251 = vld [vmem:[%s3 + $0x28] sm:$0xff]
  %v1252 = vld [vmem:[%s3 + $0x30] sm:$0xff]
  %v1253 = vld [vmem:[%s3 + $0x38] sm:$0xff]
  %v1254 = vld [vmem:[%s3 + $0x40] sm:$0xff]
  %v1255 = vld [vmem:[%s3 + $0x48] sm:$0xff]
  %v1256 = vld [vmem:[%s3 + $0x50] sm:$0xff]
  %v1257 = vld [vmem:[%s3 + $0x58] sm:$0xff]
  %v1258 = vld [vmem:[%s3 + $0x60] sm:$0xff]
  %v1259 = vld [vmem:[%s3 + $0x68] sm:$0xff]
  %v1260 = vld [vmem:[%s3 + $0x70] sm:$0xff]
  %v1261 = vld [vmem:[%s3 + $0x78] sm:$0xff]
  %v1262 = vld [vmem:[%s3 + $0x80] sm:$0xff]
  %v1263 = vld [vmem:[%s3 + $0x88] sm:$0xff]
  %v1264 = vld [vmem:[%s3 + $0x90] sm:$0xff]
  %v1265 = vld [vmem:[%s3 + $0x98] sm:$0xff]
  %v1266 = vld [vmem:[%s3 + $0xa0] sm:$0xff]
  %v1267 = vld [vmem:[%s3 + $0xa8] sm:$0xff]
  %v1268 = vld [vmem:[%s3 + $0xb0] sm:$0xff]
  %v1269 = vld [vmem:[%s3 + $0xb8] sm:$0xff]
  %v1270 = vld [vmem:[%s3 + $0xc0] sm:$0xff]
  %v1271 = vld [vmem:[%s3 + $0xc8] sm:$0xff]
  %v1272 = vld [vmem:[%s3 + $0xd0] sm:$0xff]
  %v1273 = vld [vmem:[%s3 + $0xd8] sm:$0xff]
  %v1274 = vld [vmem:[%s3 + $0xe0] sm:$0xff]
  %v1275 = vld [vmem:[%s3 + $0xe8] sm:$0xff]
  %v1276 = vld [vmem:[%s3 + $0xf0] sm:$0xff]
  %v1277 = vld [vmem:[%s3 + $0xf8] sm:$0xff]
  %v1278 = vld [vmem:[%s3 + $0x100] sm:$0xff]
  %v1279 = vld [vmem:[%s3 + $0x108] sm:$0xff]
  %v1280 = vld [vmem:[%s3 + $0x110] sm:$0xff]
  %v1281 = vld [vmem:[%s3 + $0x118] sm:$0xff]
  %v1282 = vld [vmem:[%s3 + $0x120] sm:$0xff]
  %v1283 = vld [vmem:[%s3 + $0x128] sm:$0xff]
  %v1284 = vld [vmem:[%s3 + $0x130] sm:$0xff]
  %v1285 = vld [vmem:[%s3 + $0x138] sm:$0xff]
  %v1286 = vld [vmem:[%s3 + $0x140] sm:$0xff]
  %v1287 = vld [vmem:[%s3 + $0x148] sm:$0xff]
  %v1288 = vld [vmem:[%s3 + $0x150] sm:$0xff]
  %v1289 = vld [vmem:[%s3 + $0x158] sm:$0xff]
  %v1290 = vld [vmem:[%s3 + $0x160] sm:$0xff]
  %v1291 = vld [vmem:[%s3 + $0x168] sm:$0xff]
  %v1292 = vld [vmem:[%s3 + $0x170] sm:$0xff]
  %v1293 = vld [vmem:[%s3 + $0x178] sm:$0xff]
  %v1294 = vld [vmem:[%s3 + $0x180] sm:$0xff]
  %v1295 = vld [vmem:[%s3 + $0x188] sm:$0xff]
  %v1296 = vld [vmem:[%s3 + $0x190] sm:$0xff]
  %v1297 = vld [vmem:[%s3 + $0x198] sm:$0xff]
  %v1298 = vld [vmem:[%s3 + $0x1a0] sm:$0xff]
  %v1299 = vld [vmem:[%s3 + $0x1a8] sm:$0xff]
  %v1300 = vld [vmem:[%s3 + $0x1b0] sm:$0xff]
  %v1301 = vld [vmem:[%s3 + $0x1b8] sm:$0xff]
  %v1302 = vld [vmem:[%s3 + $0x1c0] sm:$0xff]
  %v1303 = vld [vmem:[%s3 + $0x1c8] sm:$0xff]
  %v1304 = vld [vmem:[%s3 + $0x1d0] sm:$0xff]
  %v1305 = vld [vmem:[%s3 + $0x1d8] sm:$0xff]
  %v1306 = vld [vmem:[%s3 + $0x1e0] sm:$0xff]
  %v1307 = vld [vmem:[%s3 + $0x1e8] sm:$0xff]
  %v1308 = vld [vmem:[%s3 + $0x1f0] sm:$0xff]
  %v1309 = vld [vmem:[%s3 + $0x1f8] sm:$0xff]
  %1310 = vmatpush.msra.mxu0 %v1306
  %1311 = vmatpush.msra.mxu0 %v1302
  %1312 = vmatpush.msra.mxu0 %v1298
  %1313 = vmatpush.msra.mxu0 %v1294
  %1314 = vmatpush.msra.mxu0 %v1290
  %1315 = vmatpush.msra.mxu0 %v1286
  %1316 = vmatpush.msra.mxu0 %v1282
  %1317 = vmatpush.msra.mxu0 %v1278
  %1318 = vmatpush.msra.mxu0 %v1274
  %1319 = vmatpush.msra.mxu0 %v1270
  %1320 = vmatpush.msra.mxu0 %v1266
  %1321 = vmatpush.msra.mxu0 %v1262
  %1322 = vmatpush.msra.mxu0 %v1258
  %1323 = vmatpush.msra.mxu0 %v1254
  %1324 = vmatpush.msra.mxu0 %v1250
  %1325 = vmatpush.msra.mxu0 %v1246
  %1326 = vmatmul.f32.gmra.mxu0 %v1245
  %v1327 = vpop.f32.mrf.mxu0
  %v1328 = vadd.f32 0.0, %v1327
  %1329 = vdwg.mxu0
  %1330 = vmatpush.msra.mxu0 %v1307
  %1331 = vmatpush.msra.mxu0 %v1303
  %1332 = vmatpush.msra.mxu0 %v1299
  %1333 = vmatpush.msra.mxu0 %v1295
  %1334 = vmatpush.msra.mxu0 %v1291
  %1335 = vmatpush.msra.mxu0 %v1287
  %1336 = vmatpush.msra.mxu0 %v1283
  %1337 = vmatpush.msra.mxu0 %v1279
  %1338 = vmatpush.msra.mxu0 %v1275
  %1339 = vmatpush.msra.mxu0 %v1271
  %1340 = vmatpush.msra.mxu0 %v1267
  %1341 = vmatpush.msra.mxu0 %v1263
  %1342 = vmatpush.msra.mxu0 %v1259
  %1343 = vmatpush.msra.mxu0 %v1255
  %1344 = vmatpush.msra.mxu0 %v1251
  %1345 = vmatpush.msra.mxu0 %v1247
  %1346 = vmatmul.f32.gmra.mxu0 %v1245
  %v1347 = vpop.f32.mrf.mxu0
  %v1348 = vadd.f32 0.0, %v1347
  %1349 = vdwg.mxu0
  %1350 = vmatpush.msra.mxu0 %v1308
  %1351 = vmatpush.msra.mxu0 %v1304
  %1352 = vmatpush.msra.mxu0 %v1300
  %1353 = vmatpush.msra.mxu0 %v1296
  %1354 = vmatpush.msra.mxu0 %v1292
  %1355 = vmatpush.msra.mxu0 %v1288
  %1356 = vmatpush.msra.mxu0 %v1284
  %1357 = vmatpush.msra.mxu0 %v1280
  %1358 = vmatpush.msra.mxu0 %v1276
  %1359 = vmatpush.msra.mxu0 %v1272
  %1360 = vmatpush.msra.mxu0 %v1268
  %1361 = vmatpush.msra.mxu0 %v1264
  %1362 = vmatpush.msra.mxu0 %v1260
  %1363 = vmatpush.msra.mxu0 %v1256
  %1364 = vmatpush.msra.mxu0 %v1252
  %1365 = vmatpush.msra.mxu0 %v1248
  %1366 = vmatmul.f32.gmra.mxu0 %v1245
  %v1367 = vpop.f32.mrf.mxu0
  %v1368 = vadd.f32 0.0, %v1367
  %1369 = vdwg.mxu0
  %1370 = vmatpush.msra.mxu0 %v1309
  %1371 = vmatpush.msra.mxu0 %v1305
  %1372 = vmatpush.msra.mxu0 %v1301
  %1373 = vmatpush.msra.mxu0 %v1297
  %1374 = vmatpush.msra.mxu0 %v1293
  %1375 = vmatpush.msra.mxu0 %v1289
  %1376 = vmatpush.msra.mxu0 %v1285
  %1377 = vmatpush.msra.mxu0 %v1281
  %1378 = vmatpush.msra.mxu0 %v1277
  %1379 = vmatpush.msra.mxu0 %v1273
  %1380 = vmatpush.msra.mxu0 %v1269
  %1381 = vmatpush.msra.mxu0 %v1265
  %1382 = vmatpush.msra.mxu0 %v1261
  %1383 = vmatpush.msra.mxu0 %v1257
  %1384 = vmatpush.msra.mxu0 %v1253
  %1385 = vmatpush.msra.mxu0 %v1249
  %1386 = vmatmul.f32.gmra.mxu0 %v1245
  %v1387 = vpop.f32.mrf.mxu0
  %v1388 = vadd.f32 0.0, %v1387
  %1389 = vdwg.mxu0
  %v1390 = vadd.f32 %v1241, %v1328
  %v1391 = vadd.f32 %v1242, %v1348
  %v1392 = vadd.f32 %v1243, %v1368
  %v1393 = vadd.f32 %v1244, %v1388
  %v1394 = vmul.f32 %v1390, 0.5
  %v1395 = vtanh.pop %v1394
  %v1396 = vadd.f32 %v1395, 1.0
  %v1397 = vmul.f32 %v1396, 0.5
  %v1398 = vmul.f32 %v1391, 0.5
  %v1399 = vtanh.pop %v1398
  %v1400 = vadd.f32 %v1399, 1.0
  %v1401 = vmul.f32 %v1400, 0.5
  %v1402 = vtanh.pop %v1392
  %v1403 = vmul.f32 %v1393, 0.5
  %v1404 = vtanh.pop %v1403
  %v1405 = vadd.f32 %v1404, 1.0
  %v1406 = vmul.f32 %v1405, 0.5
  %v1407 = vld [vmem:[#allocation3] sm:$0xff]
  %v1408 = vmul.f32 %v1401, %v1407
  %v1409 = vmul.f32 %v1397, %v1402
  %v1410 = vadd.f32 %v1408, %v1409
  %v1411 = vtanh.pop %v1410
  %v1412 = vmul.f32 %v1406, %v1411
  %s1413 = scalar_lea.vmem %s1, 40
  %v1414 = vld [vmem:[%s1413] sm:$0xff]
  %vm1415 = vcmp.gt.f32.partialorder %v1414, 0.5
  %v1416 = vsel %vm1415, %v1410, %v1407
  %1417 = vst [vmem:[#allocation3] sm:$0xff] %v1416
  %v1418 = vld [vmem:[#allocation2] sm:$0xff]
  %v1419 = vsel %vm1415, %v1412, %v1418
  %1420 = vst [vmem:[#allocation2] sm:$0xff] %v1419
  %v1421 = vsel %vm1415, %v1412, 0.0
  %s1422 = scalar_lea.vmem [#allocation5], 40
  %1423 = vst [vmem:[%s1422] sm:$0xff] %v1421
  %s1424 = smul.u32 6, 4
  %s1425 = smul.addr %s1424, 8
  %s1426 = scalar_lea.vmem [#allocation4], %s1425
  %v1427 = vld [vmem:[%s1426] sm:$0xff]
  %v1428 = vld [vmem:[%s1426 + $0x8] sm:$0xff]
  %v1429 = vld [vmem:[%s1426 + $0x10] sm:$0xff]
  %v1430 = vld [vmem:[%s1426 + $0x18] sm:$0xff]
  %v1431 = vld [vmem:[#allocation2] sm:$0xff]
  %v1432 = vld [vmem:[%s3] sm:$0xff]
  %v1433 = vld [vmem:[%s3 + $0x8] sm:$0xff]
  %v1434 = vld [vmem:[%s3 + $0x10] sm:$0xff]
  %v1435 = vld [vmem:[%s3 + $0x18] sm:$0xff]
  %v1436 = vld [vmem:[%s3 + $0x20] sm:$0xff]
  %v1437 = vld [vmem:[%s3 + $0x28] sm:$0xff]
  %v1438 = vld [vmem:[%s3 + $0x30] sm:$0xff]
  %v1439 = vld [vmem:[%s3 + $0x38] sm:$0xff]
  %v1440 = vld [vmem:[%s3 + $0x40] sm:$0xff]
  %v1441 = vld [vmem:[%s3 + $0x48] sm:$0xff]
  %v1442 = vld [vmem:[%s3 + $0x50] sm:$0xff]
  %v1443 = vld [vmem:[%s3 + $0x58] sm:$0xff]
  %v1444 = vld [vmem:[%s3 + $0x60] sm:$0xff]
  %v1445 = vld [vmem:[%s3 + $0x68] sm:$0xff]
  %v1446 = vld [vmem:[%s3 + $0x70] sm:$0xff]
  %v1447 = vld [vmem:[%s3 + $0x78] sm:$0xff]
  %v1448 = vld [vmem:[%s3 + $0x80] sm:$0xff]
  %v1449 = vld [vmem:[%s3 + $0x88] sm:$0xff]
  %v1450 = vld [vmem:[%s3 + $0x90] sm:$0xff]
  %v1451 = vld [vmem:[%s3 + $0x98] sm:$0xff]
  %v1452 = vld [vmem:[%s3 + $0xa0] sm:$0xff]
  %v1453 = vld [vmem:[%s3 + $0xa8] sm:$0xff]
  %v1454 = vld [vmem:[%s3 + $0xb0] sm:$0xff]
  %v1455 = vld [vmem:[%s3 + $0xb8] sm:$0xff]
  %v1456 = vld [vmem:[%s3 + $0xc0] sm:$0xff]
  %v1457 = vld [vmem:[%s3 + $0xc8] sm:$0xff]
  %v1458 = vld [vmem:[%s3 + $0xd0] sm:$0xff]
  %v1459 = vld [vmem:[%s3 + $0xd8] sm:$0xff]
  %v1460 = vld [vmem:[%s3 + $0xe0] sm:$0xff]
  %v1461 = vld [vmem:[%s3 + $0xe8] sm:$0xff]
  %v1462 = vld [vmem:[%s3 + $0xf0] sm:$0xff]
  %v1463 = vld [vmem:[%s3 + $0xf8] sm:$0xff]
  %v1464 = vld [vmem:[%s3 + $0x100] sm:$0xff]
  %v1465 = vld [vmem:[%s3 + $0x108] sm:$0xff]
  %v1466 = vld [vmem:[%s3 + $0x110] sm:$0xff]
  %v1467 = vld [vmem:[%s3 + $0x118] sm:$0xff]
  %v1468 = vld [vmem:[%s3 + $0x120] sm:$0xff]
  %v1469 = vld [vmem:[%s3 + $0x128] sm:$0xff]
  %v1470 = vld [vmem:[%s3 + $0x130] sm:$0xff]
  %v1471 = vld [vmem:[%s3 + $0x138] sm:$0xff]
  %v1472 = vld [vmem:[%s3 + $0x140] sm:$0xff]
  %v1473 = vld [vmem:[%s3 + $0x148] sm:$0xff]
  %v1474 = vld [vmem:[%s3 + $0x150] sm:$0xff]
  %v1475 = vld [vmem:[%s3 + $0x158] sm:$0xff]
  %v1476 = vld [vmem:[%s3 + $0x160] sm:$0xff]
  %v1477 = vld [vmem:[%s3 + $0x168] sm:$0xff]
  %v1478 = vld [vmem:[%s3 + $0x170] sm:$0xff]
  %v1479 = vld [vmem:[%s3 + $0x178] sm:$0xff]
  %v1480 = vld [vmem:[%s3 + $0x180] sm:$0xff]
  %v1481 = vld [vmem:[%s3 + $0x188] sm:$0xff]
  %v1482 = vld [vmem:[%s3 + $0x190] sm:$0xff]
  %v1483 = vld [vmem:[%s3 + $0x198] sm:$0xff]
  %v1484 = vld [vmem:[%s3 + $0x1a0] sm:$0xff]
  %v1485 = vld [vmem:[%s3 + $0x1a8] sm:$0xff]
  %v1486 = vld [vmem:[%s3 + $0x1b0] sm:$0xff]
  %v1487 = vld [vmem:[%s3 + $0x1b8] sm:$0xff]
  %v1488 = vld [vmem:[%s3 + $0x1c0] sm:$0xff]
  %v1489 = vld [vmem:[%s3 + $0x1c8] sm:$0xff]
  %v1490 = vld [vmem:[%s3 + $0x1d0] sm:$0xff]
  %v1491 = vld [vmem:[%s3 + $0x1d8] sm:$0xff]
  %v1492 = vld [vmem:[%s3 + $0x1e0] sm:$0xff]
  %v1493 = vld [vmem:[%s3 + $0x1e8] sm:$0xff]
  %v1494 = vld [vmem:[%s3 + $0x1f0] sm:$0xff]
  %v1495 = vld [vmem:[%s3 + $0x1f8] sm:$0xff]
  %1496 = vmatpush.msra.mxu0 %v1492
  %1497 = vmatpush.msra.mxu0 %v1488
  %1498 = vmatpush.msra.mxu0 %v1484
  %1499 = vmatpush.msra.mxu0 %v1480
  %1500 = vmatpush.msra.mxu0 %v1476
  %1501 = vmatpush.msra.mxu0 %v1472
  %1502 = vmatpush.msra.mxu0 %v1468
  %1503 = vmatpush.msra.mxu0 %v1464
  %1504 = vmatpush.msra.mxu0 %v1460
  %1505 = vmatpush.msra.mxu0 %v1456
  %1506 = vmatpush.msra.mxu0 %v1452
  %1507 = vmatpush.msra.mxu0 %v1448
  %1508 = vmatpush.msra.mxu0 %v1444
  %1509 = vmatpush.msra.mxu0 %v1440
  %1510 = vmatpush.msra.mxu0 %v1436
  %1511 = vmatpush.msra.mxu0 %v1432
  %1512 = vmatmul.f32.gmra.mxu0 %v1431
  %v1513 = vpop.f32.mrf.mxu0
  %v1514 = vadd.f32 0.0, %v1513
  %1515 = vdwg.mxu0
  %1516 = vmatpush.msra.mxu0 %v1493
  %1517 = vmatpush.msra.mxu0 %v1489
  %1518 = vmatpush.msra.mxu0 %v1485
  %1519 = vmatpush.msra.mxu0 %v1481
  %1520 = vmatpush.msra.mxu0 %v1477
  %1521 = vmatpush.msra.mxu0 %v1473
  %1522 = vmatpush.msra.mxu0 %v1469
  %1523 = vmatpush.msra.mxu0 %v1465
  %1524 = vmatpush.msra.mxu0 %v1461
  %1525 = vmatpush.msra.mxu0 %v1457
  %1526 = vmatpush.msra.mxu0 %v1453
  %1527 = vmatpush.msra.mxu0 %v1449
  %1528 = vmatpush.msra.mxu0 %v1445
  %1529 = vmatpush.msra.mxu0 %v1441
  %1530 = vmatpush.msra.mxu0 %v1437
  %1531 = vmatpush.msra.mxu0 %v1433
  %1532 = vmatmul.f32.gmra.mxu0 %v1431
  %v1533 = vpop.f32.mrf.mxu0
  %v1534 = vadd.f32 0.0, %v1533
  %1535 = vdwg.mxu0
  %1536 = vmatpush.msra.mxu0 %v1494
  %1537 = vmatpush.msra.mxu0 %v1490
  %1538 = vmatpush.msra.mxu0 %v1486
  %1539 = vmatpush.msra.mxu0 %v1482
  %1540 = vmatpush.msra.mxu0 %v1478
  %1541 = vmatpush.msra.mxu0 %v1474
  %1542 = vmatpush.msra.mxu0 %v1470
  %1543 = vmatpush.msra.mxu0 %v1466
  %1544 = vmatpush.msra.mxu0 %v1462
  %1545 = vmatpush.msra.mxu0 %v1458
  %1546 = vmatpush.msra.mxu0 %v1454
  %1547 = vmatpush.msra.mxu0 %v1450
  %1548 = vmatpush.msra.mxu0 %v1446
  %1549 = vmatpush.msra.mxu0 %v1442
  %1550 = vmatpush.msra.mxu0 %v1438
  %1551 = vmatpush.msra.mxu0 %v1434
  %1552 = vmatmul.f32.gmra.mxu0 %v1431
  %v1553 = vpop.f32.mrf.mxu0
  %v1554 = vadd.f32 0.0, %v1553
  %1555 = vdwg.mxu0
  %1556 = vmatpush.msra.mxu0 %v1495
  %1557 = vmatpush.msra.mxu0 %v1491
  %1558 = vmatpush.msra.mxu0 %v1487
  %1559 = vmatpush.msra.mxu0 %v1483
  %1560 = vmatpush.msra.mxu0 %v1479
  %1561 = vmatpush.msra.mxu0 %v1475
  %1562 = vmatpush.msra.mxu0 %v1471
  %1563 = vmatpush.msra.mxu0 %v1467
  %1564 = vmatpush.msra.mxu0 %v1463
  %1565 = vmatpush.msra.mxu0 %v1459
  %1566 = vmatpush.msra.mxu0 %v1455
  %1567 = vmatpush.msra.mxu0 %v1451
  %1568 = vmatpush.msra.mxu0 %v1447
  %1569 = vmatpush.msra.mxu0 %v1443
  %1570 = vmatpush.msra.mxu0 %v1439
  %1571 = vmatpush.msra.mxu0 %v1435
  %1572 = vmatmul.f32.gmra.mxu0 %v1431
  %v1573 = vpop.f32.mrf.mxu0
  %v1574 = vadd.f32 0.0, %v1573
  %1575 = vdwg.mxu0
  %v1576 = vadd.f32 %v1427, %v1514
  %v1577 = vadd.f32 %v1428, %v1534
  %v1578 = vadd.f32 %v1429, %v1554
  %v1579 = vadd.f32 %v1430, %v1574
  %v1580 = vmul.f32 %v1576, 0.5
  %v1581 = vtanh.pop %v1580
  %v1582 = vadd.f32 %v1581, 1.0
  %v1583 = vmul.f32 %v1582, 0.5
  %v1584 = vmul.f32 %v1577, 0.5
  %v1585 = vtanh.pop %v1584
  %v1586 = vadd.f32 %v1585, 1.0
  %v1587 = vmul.f32 %v1586, 0.5
  %v1588 = vtanh.pop %v1578
  %v1589 = vmul.f32 %v1579, 0.5
  %v1590 = vtanh.pop %v1589
  %v1591 = vadd.f32 %v1590, 1.0
  %v1592 = vmul.f32 %v1591, 0.5
  %v1593 = vld [vmem:[#allocation3] sm:$0xff]
  %v1594 = vmul.f32 %v1587, %v1593
  %v1595 = vmul.f32 %v1583, %v1588
  %v1596 = vadd.f32 %v1594, %v1595
  %v1597 = vtanh.pop %v1596
  %v1598 = vmul.f32 %v1592, %v1597
  %s1599 = scalar_lea.vmem %s1, 48
  %v1600 = vld [vmem:[%s1599] sm:$0xff]
  %vm1601 = vcmp.gt.f32.partialorder %v1600, 0.5
  %v1602 = vsel %vm1601, %v1596, %v1593
  %1603 = vst [vmem:[#allocation3] sm:$0xff] %v1602
  %v1604 = vld [vmem:[#allocation2] sm:$0xff]
  %v1605 = vsel %vm1601, %v1598, %v1604
  %1606 = vst [vmem:[#allocation2] sm:$0xff] %v1605
  %v1607 = vsel %vm1601, %v1598, 0.0
  %s1608 = scalar_lea.vmem [#allocation5], 48
  %1609 = vst [vmem:[%s1608] sm:$0xff] %v1607
  %s1610 = smul.u32 7, 4
  %s1611 = smul.addr %s1610, 8
  %s1612 = scalar_lea.vmem [#allocation4], %s1611
  %v1613 = vld [vmem:[%s1612] sm:$0xff]
  %v1614 = vld [vmem:[%s1612 + $0x8] sm:$0xff]
  %v1615 = vld [vmem:[%s1612 + $0x10] sm:$0xff]
  %v1616 = vld [vmem:[%s1612 + $0x18] sm:$0xff]
  %v1617 = vld [vmem:[#allocation2] sm:$0xff]
  %v1618 = vld [vmem:[%s3] sm:$0xff]
  %v1619 = vld [vmem:[%s3 + $0x8] sm:$0xff]
  %v1620 = vld [vmem:[%s3 + $0x10] sm:$0xff]
  %v1621 = vld [vmem:[%s3 + $0x18] sm:$0xff]
  %v1622 = vld [vmem:[%s3 + $0x20] sm:$0xff]
  %v1623 = vld [vmem:[%s3 + $0x28] sm:$0xff]
  %v1624 = vld [vmem:[%s3 + $0x30] sm:$0xff]
  %v1625 = vld [vmem:[%s3 + $0x38] sm:$0xff]
  %v1626 = vld [vmem:[%s3 + $0x40] sm:$0xff]
  %v1627 = vld [vmem:[%s3 + $0x48] sm:$0xff]
  %v1628 = vld [vmem:[%s3 + $0x50] sm:$0xff]
  %v1629 = vld [vmem:[%s3 + $0x58] sm:$0xff]
  %v1630 = vld [vmem:[%s3 + $0x60] sm:$0xff]
  %v1631 = vld [vmem:[%s3 + $0x68] sm:$0xff]
  %v1632 = vld [vmem:[%s3 + $0x70] sm:$0xff]
  %v1633 = vld [vmem:[%s3 + $0x78] sm:$0xff]
  %v1634 = vld [vmem:[%s3 + $0x80] sm:$0xff]
  %v1635 = vld [vmem:[%s3 + $0x88] sm:$0xff]
  %v1636 = vld [vmem:[%s3 + $0x90] sm:$0xff]
  %v1637 = vld [vmem:[%s3 + $0x98] sm:$0xff]
  %v1638 = vld [vmem:[%s3 + $0xa0] sm:$0xff]
  %v1639 = vld [vmem:[%s3 + $0xa8] sm:$0xff]
  %v1640 = vld [vmem:[%s3 + $0xb0] sm:$0xff]
  %v1641 = vld [vmem:[%s3 + $0xb8] sm:$0xff]
  %v1642 = vld [vmem:[%s3 + $0xc0] sm:$0xff]
  %v1643 = vld [vmem:[%s3 + $0xc8] sm:$0xff]
  %v1644 = vld [vmem:[%s3 + $0xd0] sm:$0xff]
  %v1645 = vld [vmem:[%s3 + $0xd8] sm:$0xff]
  %v1646 = vld [vmem:[%s3 + $0xe0] sm:$0xff]
  %v1647 = vld [vmem:[%s3 + $0xe8] sm:$0xff]
  %v1648 = vld [vmem:[%s3 + $0xf0] sm:$0xff]
  %v1649 = vld [vmem:[%s3 + $0xf8] sm:$0xff]
  %v1650 = vld [vmem:[%s3 + $0x100] sm:$0xff]
  %v1651 = vld [vmem:[%s3 + $0x108] sm:$0xff]
  %v1652 = vld [vmem:[%s3 + $0x110] sm:$0xff]
  %v1653 = vld [vmem:[%s3 + $0x118] sm:$0xff]
  %v1654 = vld [vmem:[%s3 + $0x120] sm:$0xff]
  %v1655 = vld [vmem:[%s3 + $0x128] sm:$0xff]
  %v1656 = vld [vmem:[%s3 + $0x130] sm:$0xff]
  %v1657 = vld [vmem:[%s3 + $0x138] sm:$0xff]
  %v1658 = vld [vmem:[%s3 + $0x140] sm:$0xff]
  %v1659 = vld [vmem:[%s3 + $0x148] sm:$0xff]
  %v1660 = vld [vmem:[%s3 + $0x150] sm:$0xff]
  %v1661 = vld [vmem:[%s3 + $0x158] sm:$0xff]
  %v1662 = vld [vmem:[%s3 + $0x160] sm:$0xff]
  %v1663 = vld [vmem:[%s3 + $0x168] sm:$0xff]
  %v1664 = vld [vmem:[%s3 + $0x170] sm:$0xff]
  %v1665 = vld [vmem:[%s3 + $0x178] sm:$0xff]
  %v1666 = vld [vmem:[%s3 + $0x180] sm:$0xff]
  %v1667 = vld [vmem:[%s3 + $0x188] sm:$0xff]
  %v1668 = vld [vmem:[%s3 + $0x190] sm:$0xff]
  %v1669 = vld [vmem:[%s3 + $0x198] sm:$0xff]
  %v1670 = vld [vmem:[%s3 + $0x1a0] sm:$0xff]
  %v1671 = vld [vmem:[%s3 + $0x1a8] sm:$0xff]
  %v1672 = vld [vmem:[%s3 + $0x1b0] sm:$0xff]
  %v1673 = vld [vmem:[%s3 + $0x1b8] sm:$0xff]
  %v1674 = vld [vmem:[%s3 + $0x1c0] sm:$0xff]
  %v1675 = vld [vmem:[%s3 + $0x1c8] sm:$0xff]
  %v1676 = vld [vmem:[%s3 + $0x1d0] sm:$0xff]
  %v1677 = vld [vmem:[%s3 + $0x1d8] sm:$0xff]
  %v1678 = vld [vmem:[%s3 + $0x1e0] sm:$0xff]
  %v1679 = vld [vmem:[%s3 + $0x1e8] sm:$0xff]
  %v1680 = vld [vmem:[%s3 + $0x1f0] sm:$0xff]
  %v1681 = vld [vmem:[%s3 + $0x1f8] sm:$0xff]
  %1682 = vmatpush.msra.mxu0 %v1678
  %1683 = vmatpush.msra.mxu0 %v1674
  %1684 = vmatpush.msra.mxu0 %v1670
  %1685 = vmatpush.msra.mxu0 %v1666
  %1686 = vmatpush.msra.mxu0 %v1662
  %1687 = vmatpush.msra.mxu0 %v1658
  %1688 = vmatpush.msra.mxu0 %v1654
  %1689 = vmatpush.msra.mxu0 %v1650
  %1690 = vmatpush.msra.mxu0 %v1646
  %1691 = vmatpush.msra.mxu0 %v1642
  %1692 = vmatpush.msra.mxu0 %v1638
  %1693 = vmatpush.msra.mxu0 %v1634
  %1694 = vmatpush.msra.mxu0 %v1630
  %1695 = vmatpush.msra.mxu0 %v1626
  %1696 = vmatpush.msra.mxu0 %v1622
  %1697 = vmatpush.msra.mxu0 %v1618
  %1698 = vmatmul.f32.gmra.mxu0 %v1617
  %v1699 = vpop.f32.mrf.mxu0
  %v1700 = vadd.f32 0.0, %v1699
  %1701 = vdwg.mxu0
  %1702 = vmatpush.msra.mxu0 %v1679
  %1703 = vmatpush.msra.mxu0 %v1675
  %1704 = vmatpush.msra.mxu0 %v1671
  %1705 = vmatpush.msra.mxu0 %v1667
  %1706 = vmatpush.msra.mxu0 %v1663
  %1707 = vmatpush.msra.mxu0 %v1659
  %1708 = vmatpush.msra.mxu0 %v1655
  %1709 = vmatpush.msra.mxu0 %v1651
  %1710 = vmatpush.msra.mxu0 %v1647
  %1711 = vmatpush.msra.mxu0 %v1643
  %1712 = vmatpush.msra.mxu0 %v1639
  %1713 = vmatpush.msra.mxu0 %v1635
  %1714 = vmatpush.msra.mxu0 %v1631
  %1715 = vmatpush.msra.mxu0 %v1627
  %1716 = vmatpush.msra.mxu0 %v1623
  %1717 = vmatpush.msra.mxu0 %v1619
  %1718 = vmatmul.f32.gmra.mxu0 %v1617
  %v1719 = vpop.f32.mrf.mxu0
  %v1720 = vadd.f32 0.0, %v1719
  %1721 = vdwg.mxu0
  %1722 = vmatpush.msra.mxu0 %v1680
  %1723 = vmatpush.msra.mxu0 %v1676
  %1724 = vmatpush.msra.mxu0 %v1672
  %1725 = vmatpush.msra.mxu0 %v1668
  %1726 = vmatpush.msra.mxu0 %v1664
  %1727 = vmatpush.msra.mxu0 %v1660
  %1728 = vmatpush.msra.mxu0 %v1656
  %1729 = vmatpush.msra.mxu0 %v1652
  %1730 = vmatpush.msra.mxu0 %v1648
  %1731 = vmatpush.msra.mxu0 %v1644
  %1732 = vmatpush.msra.mxu0 %v1640
  %1733 = vmatpush.msra.mxu0 %v1636
  %1734 = vmatpush.msra.mxu0 %v1632
  %1735 = vmatpush.msra.mxu0 %v1628
  %1736 = vmatpush.msra.mxu0 %v1624
  %1737 = vmatpush.msra.mxu0 %v1620
  %1738 = vmatmul.f32.gmra.mxu0 %v1617
  %v1739 = vpop.f32.mrf.mxu0
  %v1740 = vadd.f32 0.0, %v1739
  %1741 = vdwg.mxu0
  %1742 = vmatpush.msra.mxu0 %v1681
  %1743 = vmatpush.msra.mxu0 %v1677
  %1744 = vmatpush.msra.mxu0 %v1673
  %1745 = vmatpush.msra.mxu0 %v1669
  %1746 = vmatpush.msra.mxu0 %v1665
  %1747 = vmatpush.msra.mxu0 %v1661
  %1748 = vmatpush.msra.mxu0 %v1657
  %1749 = vmatpush.msra.mxu0 %v1653
  %1750 = vmatpush.msra.mxu0 %v1649
  %1751 = vmatpush.msra.mxu0 %v1645
  %1752 = vmatpush.msra.mxu0 %v1641
  %1753 = vmatpush.msra.mxu0 %v1637
  %1754 = vmatpush.msra.mxu0 %v1633
  %1755 = vmatpush.msra.mxu0 %v1629
  %1756 = vmatpush.msra.mxu0 %v1625
  %1757 = vmatpush.msra.mxu0 %v1621
  %1758 = vmatmul.f32.gmra.mxu0 %v1617
  %v1759 = vpop.f32.mrf.mxu0
  %v1760 = vadd.f32 0.0, %v1759
  %1761 = vdwg.mxu0
  %v1762 = vadd.f32 %v1613, %v1700
  %v1763 = vadd.f32 %v1614, %v1720
  %v1764 = vadd.f32 %v1615, %v1740
  %v1765 = vadd.f32 %v1616, %v1760
  %v1766 = vmul.f32 %v1762, 0.5
  %v1767 = vtanh.pop %v1766
  %v1768 = vadd.f32 %v1767, 1.0
  %v1769 = vmul.f32 %v1768, 0.5
  %v1770 = vmul.f32 %v1763, 0.5
  %v1771 = vtanh.pop %v1770
  %v1772 = vadd.f32 %v1771, 1.0
  %v1773 = vmul.f32 %v1772, 0.5
  %v1774 = vtanh.pop %v1764
  %v1775 = vmul.f32 %v1765, 0.5
  %v1776 = vtanh.pop %v1775
  %v1777 = vadd.f32 %v1776, 1.0
  %v1778 = vmul.f32 %v1777, 0.5
  %v1779 = vld [vmem:[#allocation3] sm:$0xff]
  %v1780 = vmul.f32 %v1773, %v1779
  %v1781 = vmul.f32 %v1769, %v1774
  %v1782 = vadd.f32 %v1780, %v1781
  %v1783 = vtanh.pop %v1782
  %v1784 = vmul.f32 %v1778, %v1783
  %s1785 = scalar_lea.vmem %s1, 56
  %v1786 = vld [vmem:[%s1785] sm:$0xff]
  %vm1787 = vcmp.gt.f32.partialorder %v1786, 0.5
  %v1788 = vsel %vm1787, %v1782, %v1779
  %1789 = vst [vmem:[#allocation3] sm:$0xff] %v1788
  %v1790 = vld [vmem:[#allocation2] sm:$0xff]
  %v1791 = vsel %vm1787, %v1784, %v1790
  %1792 = vst [vmem:[#allocation2] sm:$0xff] %v1791
  %v1793 = vsel %vm1787, %v1784, 0.0
  %s1794 = scalar_lea.vmem [#allocation5], 56
  %1795 = vst [vmem:[%s1794] sm:$0xff] %v1793
  %v1796 = vld [vmem:[#allocation5] sm:$0xff]
  %v1797 = vld [vmem:[#allocation5 + $0x8] sm:$0xff]
  %v1798 = vld [vmem:[#allocation5 + $0x10] sm:$0xff]
  %v1799 = vld [vmem:[#allocation5 + $0x18] sm:$0xff]
  %v1800 = vld [vmem:[#allocation5 + $0x20] sm:$0xff]
  %v1801 = vld [vmem:[#allocation5 + $0x28] sm:$0xff]
  %v1802 = vld [vmem:[#allocation5 + $0x30] sm:$0xff]
  %v1803 = vld [vmem:[#allocation5 + $0x38] sm:$0xff]
  %v1804 = vld [vmem:[%s5] sm:$0xff]
  %v1805 = vld [vmem:[%s5 + $0x8] sm:$0xff]
  %v1806 = vld [vmem:[%s5 + $0x10] sm:$0xff]
  %v1807 = vld [vmem:[%s5 + $0x18] sm:$0xff]
  %v1808 = vld [vmem:[%s5 + $0x20] sm:$0xff]
  %v1809 = vld [vmem:[%s5 + $0x28] sm:$0xff]
  %v1810 = vld [vmem:[%s5 + $0x30] sm:$0xff]
  %v1811 = vld [vmem:[%s5 + $0x38] sm:$0xff]
  %v1812 = vld [vmem:[%s5 + $0x40] sm:$0xff]
  %v1813 = vld [vmem:[%s5 + $0x48] sm:$0xff]
  %v1814 = vld [vmem:[%s5 + $0x50] sm:$0xff]
  %v1815 = vld [vmem:[%s5 + $0x58] sm:$0xff]
  %v1816 = vld [vmem:[%s5 + $0x60] sm:$0xff]
  %v1817 = vld [vmem:[%s5 + $0x68] sm:$0xff]
  %v1818 = vld [vmem:[%s5 + $0x70] sm:$0xff]
  %v1819 = vld [vmem:[%s5 + $0x78] sm:$0xff]
  %v1820 = vld [vmem:[%s6] sm:$0x1]
  %v1822 = vperm.slane %v1820, 0
  %1824 = vmatpush.msra.mxu0 %v1819
  %1825 = vmatpush.msra.mxu0 %v1818
  %1826 = vmatpush.msra.mxu0 %v1817
  %1827 = vmatpush.msra.mxu0 %v1816
  %1828 = vmatpush.msra.mxu0 %v1815
  %1829 = vmatpush.msra.mxu0 %v1814
  %1830 = vmatpush.msra.mxu0 %v1813
  %1831 = vmatpush.msra.mxu0 %v1812
  %1832 = vmatpush.msra.mxu0 %v1811
  %1833 = vmatpush.msra.mxu0 %v1810
  %1834 = vmatpush.msra.mxu0 %v1809
  %1835 = vmatpush.msra.mxu0 %v1808
  %1836 = vmatpush.msra.mxu0 %v1807
  %1837 = vmatpush.msra.mxu0 %v1806
  %1838 = vmatpush.msra.mxu0 %v1805
  %1839 = vmatpush.msra.mxu0 %v1804
  %1840 = vmatmul.f32.gmra.mxu0 %v1796
  %v1841 = vpop.f32.mrf.mxu0
  %v1842 = vadd.f32 %v1822, %v1841
  %1843 = vmatmul.f32.gmra.mxu0 %v1797
  %v1844 = vpop.f32.mrf.mxu0
  %v1845 = vadd.f32 %v1822, %v1844
  %1846 = vmatmul.f32.gmra.mxu0 %v1798
  %v1847 = vpop.f32.mrf.mxu0
  %v1848 = vadd.f32 %v1822, %v1847
  %1849 = vmatmul.f32.gmra.mxu0 %v1799
  %v1850 = vpop.f32.mrf.mxu0
  %v1851 = vadd.f32 %v1822, %v1850
  %1852 = vmatmul.f32.gmra.mxu0 %v1800
  %v1853 = vpop.f32.mrf.mxu0
  %v1854 = vadd.f32 %v1822, %v1853
  %1855 = vmatmul.f32.gmra.mxu0 %v1801
  %v1856 = vpop.f32.mrf.mxu0
  %v1857 = vadd.f32 %v1822, %v1856
  %1858 = vmatmul.f32.gmra.mxu0 %v1802
  %v1859 = vpop.f32.mrf.mxu0
  %v1860 = vadd.f32 %v1822, %v1859
  %1861 = vmatmul.f32.gmra.mxu0 %v1803
  %v1862 = vpop.f32.mrf.mxu0
  %v1863 = vadd.f32 %v1822, %v1862
  %1864 = vdwg.mxu0
  %1865 = vst [vmem:[%s7] sm:$0xff] %v1842
  %1866 = vst [vmem:[%s7 + $0x8] sm:$0xff] %v1845
  %1867 = vst [vmem:[%s7 + $0x10] sm:$0xff] %v1848
  %1868 = vst [vmem:[%s7 + $0x18] sm:$0xff] %v1851
  %1869 = vst [vmem:[%s7 + $0x20] sm:$0xff] %v1854
  %1870 = vst [vmem:[%s7 + $0x28] sm:$0xff] %v1857
  %1871 = vst [vmem:[%s7 + $0x30] sm:$0xff] %v1860
  %1872 = vst [vmem:[%s7 + $0x38] sm:$0xff] %v1863
  // Predicated region
  $region34: #{_forward_full.1} parent=0 // pred_check
    _
  $region35: #{_forward_full.1} parent=0 // pred_check_branch
    %1874 = sbr.rel (0) target = $region37
  $region36: #{_forward_full.1} parent=0 // pred_region
    _
  $region37: #{_forward_full.1} parent=0 // pred_fallthru
    _
  // Predicated region
  $region38: #{_forward_full.1} parent=0 // pred_check
    _
  $region39: #{_forward_full.1} parent=0 // pred_check_branch
    %1876 = sbr.rel (0) target = $region41
  $region40: #{_forward_full.1} parent=0 // pred_region
    _
  $region41: #{_forward_full.1} parent=0 // pred_fallthru
    _

</llo_original>
